<compile_context>
chip_gen: v5e
topology: v5e:2x2
jax: 0.10.0
libtpu: 0.0.40
codegen_flags: <defaults>
</compile_context>

<pallas_src>
import math

import jax
import jax.numpy as jnp
from jax.experimental import pallas as pl
from jax.experimental.pallas import tpu as pltpu

# ---------------- small synthetic config ----------------
VOCAB = 64
HIDDEN = 32
N_HEADS = 4
HEAD_DIM = HIDDEN // N_HEADS
INTERMEDIATE = 64
N_LAYERS = 2
SEQ = 8
BATCH = 2
PAD_ID = 0
EPS = 1e-5


# ---------------- fused Pallas kernel (one sequence per grid step) ----------------
def _reward_kernel(ids_ref, embed_ref, pos_ref,
                   ln1_ref, wq_ref, wk_ref, wv_ref, wo_ref,
                   ln2_ref, wgu_ref, wd_ref,
                   lnf_ref, vhead_ref, out_ref):
    S, H = pos_ref.shape
    D = HEAD_DIM

    def mm(a_f32, w_bf16):
        # bf16 MXU operands (weights already bf16), f32 accumulation.
        return jnp.dot(a_f32.astype(jnp.bfloat16), w_bf16,
                       preferred_element_type=jnp.float32)

    def rms(x, g):
        # f32 RMSNorm; rsqrt lands in the EUP slot.
        var = jnp.mean(x * x, axis=-1, keepdims=True)
        return x * jax.lax.rsqrt(var + EPS) * g

    # ---- embedding: bf16 one-hot @ bf16 table + position (this step's sequence only) ----
    ids = ids_ref[0]                                               # [S, 1] int32
    vocab_iota = jax.lax.broadcasted_iota(jnp.int32, (S, VOCAB), 1)
    onehot = (vocab_iota == ids).astype(jnp.bfloat16)              # [S, VOCAB] bf16
    x = jnp.dot(onehot, embed_ref[...],
                preferred_element_type=jnp.float32)                # [S, H] f32
    x = x + pos_ref[...]                                           # direct add, no concat

    # causal mask, built once and reused by every (layer, head)
    row = jax.lax.broadcasted_iota(jnp.int32, (S, S), 0)
    col = jax.lax.broadcasted_iota(jnp.int32, (S, S), 1)
    causal = col <= row

    for l in range(N_LAYERS):
        # ---- attention block (per-head weights pre-split; no concats, no act slicing) ----
        h = rms(x, ln1_ref[l])                                     # [S, H]
        attn = None
        for hd in range(N_HEADS):
            i = l * N_HEADS + hd
            q = mm(h, wq_ref[i])                                   # [S, D] (1/sqrt(D) folded)
            k = mm(h, wk_ref[i])                                   # [S, D]
            v = mm(h, wv_ref[i])                                   # [S, D]
            s = jnp.dot(q.astype(jnp.bfloat16), k.astype(jnp.bfloat16).T,
                        preferred_element_type=jnp.float32)        # [S, S]
            s = jnp.where(causal, s, -1e30)
            m = jnp.max(s, axis=-1, keepdims=True)
            p = jnp.exp(s - m)
            denom = jnp.sum(p, axis=-1, keepdims=True)
            p = p * pl.reciprocal(denom, approx=True)              # EUP divide
            o = jnp.dot(p.astype(jnp.bfloat16), v.astype(jnp.bfloat16),
                        preferred_element_type=jnp.float32)        # [S, D]
            contrib = mm(o, wo_ref[i])                             # [S, H] == o @ Wo[head rows]
            attn = contrib if attn is None else attn + contrib
        x = x + attn

        # ---- SiLU-gated MLP (gate/up fused: 128 output lanes = one vreg row) ----
        h2 = rms(x, ln2_ref[l])
        gu = mm(h2, wgu_ref[l])                                    # [S, 2*I]
        g = gu[:, :INTERMEDIATE]
        u = gu[:, INTERMEDIATE:]
        act = g * jax.nn.sigmoid(g) * u                            # f32 SiLU-gate
        x = x + mm(act, wd_ref[l])

    # ---- final norm + reward head + torch-style score selection ----
    hidden = rms(x, lnf_ref[...])                                  # [S, H]
    rewards = mm(hidden, vhead_ref[...])                           # [S, 1]

    pos_idx = jax.lax.broadcasted_iota(jnp.int32, (S, 1), 0)       # [S, 1]
    is_pad = ids == PAD_ID                                         # [S, 1]
    # first PAD index; S if no PAD (matches the torch loop)
    c_ind = jnp.min(jnp.where(is_pad, pos_idx, S), axis=0, keepdims=True)   # [1, 1]
    sel = c_ind - 1
    sel = jnp.where(sel < 0, sel + S, sel)     # torch rewards[i, -1] when first token is PAD
    pick = pos_idx == sel                                          # [S, 1]
    score = jnp.sum(jnp.where(pick, rewards, 0.0), axis=0, keepdims=True)   # [1, 1]
    out_ref[...] = score.reshape(1, 1, 1)


def _full_spec(arr):
    nd = arr.ndim
    return pl.BlockSpec(arr.shape, lambda b, _nd=nd: (0,) * _nd)


def _cost_estimate(B, bytes_accessed):
    mm_flops = 2 * SEQ * VOCAB * HIDDEN                             # embedding
    per_layer = (3 * N_HEADS * 2 * SEQ * HIDDEN * HEAD_DIM          # per-head q/k/v
                 + N_HEADS * 2 * SEQ * HEAD_DIM * SEQ               # q k^T
                 + N_HEADS * 2 * SEQ * SEQ * HEAD_DIM               # p v
                 + N_HEADS * 2 * SEQ * HEAD_DIM * HIDDEN            # o Wo
                 + 2 * SEQ * HIDDEN * 2 * INTERMEDIATE              # gate/up
                 + 2 * SEQ * INTERMEDIATE * HIDDEN)                 # down
    mm_flops += N_LAYERS * per_layer + 2 * SEQ * HIDDEN             # v_head
    trans = (N_LAYERS * (N_HEADS * SEQ * SEQ                        # exp
                         + SEQ * INTERMEDIATE                       # sigmoid
                         + N_HEADS * SEQ)                           # reciprocal
             + (2 * N_LAYERS + 1) * SEQ)                            # rsqrt
    return pl.CostEstimate(flops=int(B * mm_flops),
                           transcendentals=int(B * trans),
                           bytes_accessed=int(bytes_accessed))


def gpt_reward_forward(params, input_ids):
    B, S = input_ids.shape
    ids3 = input_ids.astype(jnp.int32).reshape(B, S, 1)

    weight_keys = ("embed", "pos_embed", "ln1", "wq", "wk", "wv", "wo",
                   "ln2", "wgu", "wd", "ln_f", "v_head")
    weights = [params[k] for k in weight_keys]

    nbytes = ids3.size * ids3.dtype.itemsize + B * 4
    for w in weights:
        nbytes += w.size * w.dtype.itemsize

    out = pl.pallas_call(
        _reward_kernel,
        grid=(B,),
        in_specs=[pl.BlockSpec((1, S, 1), lambda b: (b, 0, 0))] + [_full_spec(w) for w in weights],
        out_specs=pl.BlockSpec((1, 1, 1), lambda b: (b, 0, 0)),
        out_shape=jax.ShapeDtypeStruct((B, 1, 1), jnp.float32),
        compiler_params=pltpu.CompilerParams(dimension_semantics=("parallel",)),
        cost_estimate=_cost_estimate(B, nbytes),
    )(ids3, *weights)
    return out[:, 0, 0]


# ---------------- parameters (deterministic synthetic init, bf16 weights) ----------------
def init_params(key):
    def nrm(k, shape, scale=0.02):
        return scale * jax.random.normal(k, shape, dtype=jnp.float32)

    keys = jax.random.split(key, 3)
    embed = nrm(keys[0], (VOCAB, HIDDEN))
    pos_embed = nrm(keys[1], (SEQ, HIDDEN))
    v_head = nrm(keys[2], (HIDDEN, 1))

    qk_scale = 1.0 / math.sqrt(HEAD_DIM)
    wq_h, wk_h, wv_h, wo_h = [], [], [], []
    ln1s, ln2s, wgus, wds = [], [], [], []
    for l in range(N_LAYERS):
        lk = jax.random.split(jax.random.fold_in(key, 100 + l), 8)
        wq = nrm(lk[0], (HIDDEN, HIDDEN)) * qk_scale   # fold 1/sqrt(D) into Q at init
        wk = nrm(lk[1], (HIDDEN, HIDDEN))
        wv = nrm(lk[2], (HIDDEN, HIDDEN))
        wo = nrm(lk[3], (HIDDEN, HIDDEN))
        for hd in range(N_HEADS):
            c0, c1 = hd * HEAD_DIM, (hd + 1) * HEAD_DIM
            wq_h.append(wq[:, c0:c1])                  # [H, D]
            wk_h.append(wk[:, c0:c1])
            wv_h.append(wv[:, c0:c1])
            wo_h.append(wo[c0:c1, :])                  # [D, H]
        wg = nrm(lk[4], (HIDDEN, INTERMEDIATE))
        wu = nrm(lk[5], (HIDDEN, INTERMEDIATE))
        wgus.append(jnp.concatenate([wg, wu], axis=1))  # [H, 2I] fused gate/up
        wds.append(nrm(lk[6], (INTERMEDIATE, HIDDEN)))
        ln1s.append(jnp.ones((1, HIDDEN), jnp.float32))
        ln2s.append(jnp.ones((1, HIDDEN), jnp.float32))

    bf16 = jnp.bfloat16
    return dict(
        embed=embed.astype(bf16),                      # [VOCAB, H] bf16
        pos_embed=pos_embed,                           # [S, H] f32
        v_head=v_head.astype(bf16),                    # [H, 1] bf16
        ln1=jnp.stack(ln1s), ln2=jnp.stack(ln2s),      # [L, 1, H] f32
        wq=jnp.stack(wq_h).astype(bf16),               # [L*NH, H, D] bf16 (scale folded)
        wk=jnp.stack(wk_h).astype(bf16),               # [L*NH, H, D] bf16
        wv=jnp.stack(wv_h).astype(bf16),               # [L*NH, H, D] bf16
        wo=jnp.stack(wo_h).astype(bf16),               # [L*NH, D, H] bf16
        wgu=jnp.stack(wgus).astype(bf16),              # [L, H, 2I] bf16
        wd=jnp.stack(wds).astype(bf16),                # [L, I, H] bf16
        ln_f=jnp.ones((1, HIDDEN), jnp.float32),       # [1, H] f32
    )


# ---------------- demo ----------------
if __name__ == "__main__":
    root = jax.random.PRNGKey(0)
    pkey, dkey = jax.random.split(root)
    params = init_params(pkey)

    input_ids = jax.random.randint(dkey, (BATCH, SEQ), 1, VOCAB, dtype=jnp.int32)
    input_ids = input_ids.at[1, 5].set(PAD_ID)  # seq 1 has padding, seq 0 does not

    scores = jax.jit(gpt_reward_forward)(params, input_ids)
    scores = jax.block_until_ready(scores)

    assert scores.shape == (BATCH,)
    assert bool(jnp.all(jnp.isfinite(scores)))
    print("KERNEL_OK")
</pallas_src>

<mosaic_0001>
module attributes {stable_mosaic.version = 11 : i64} {
  func.func @_reward_kernel(%arg0: i32, %arg1: memref<1x8x1xi32, #tpu.memory_space<vmem>>, %arg2: memref<64x32xbf16, #tpu.memory_space<vmem>>, %arg3: memref<8x32xf32, #tpu.memory_space<vmem>>, %arg4: memref<2x1x32xf32, #tpu.memory_space<vmem>>, %arg5: memref<8x32x8xbf16, #tpu.memory_space<vmem>>, %arg6: memref<8x32x8xbf16, #tpu.memory_space<vmem>>, %arg7: memref<8x32x8xbf16, #tpu.memory_space<vmem>>, %arg8: memref<8x8x32xbf16, #tpu.memory_space<vmem>>, %arg9: memref<2x1x32xf32, #tpu.memory_space<vmem>>, %arg10: memref<2x32x128xbf16, #tpu.memory_space<vmem>>, %arg11: memref<2x64x32xbf16, #tpu.memory_space<vmem>>, %arg12: memref<1x32xf32, #tpu.memory_space<vmem>>, %arg13: memref<32x1xbf16, #tpu.memory_space<vmem>>, %arg14: memref<1x1x1xf32, #tpu.memory_space<vmem>>) attributes {dimension_semantics = [#tpu.dimension_semantics<parallel>], iteration_bounds = array<i64: 2>, scalar_prefetch = 0 : i64, scratch_operands = 0 : i64, tpu.core_type = #tpu.core_type<tc>, window_params = [{transform_indices = @transform_0, window_bounds = array<i64: 1, 8, 1>}, {pipeline_mode = #tpu.pipeline_mode<synchronous>, transform_indices = @transform_1, window_bounds = array<i64: 64, 32>}, {pipeline_mode = #tpu.pipeline_mode<synchronous>, transform_indices = @transform_2, window_bounds = array<i64: 8, 32>}, {pipeline_mode = #tpu.pipeline_mode<synchronous>, transform_indices = @transform_3, window_bounds = array<i64: 2, 1, 32>}, {pipeline_mode = #tpu.pipeline_mode<synchronous>, transform_indices = @transform_4, window_bounds = array<i64: 8, 32, 8>}, {pipeline_mode = #tpu.pipeline_mode<synchronous>, transform_indices = @transform_5, window_bounds = array<i64: 8, 32, 8>}, {pipeline_mode = #tpu.pipeline_mode<synchronous>, transform_indices = @transform_6, window_bounds = array<i64: 8, 32, 8>}, {pipeline_mode = #tpu.pipeline_mode<synchronous>, transform_indices = @transform_7, window_bounds = array<i64: 8, 8, 32>}, {pipeline_mode = #tpu.pipeline_mode<synchronous>, transform_indices = @transform_8, window_bounds = array<i64: 2, 1, 32>}, {pipeline_mode = #tpu.pipeline_mode<synchronous>, transform_indices = @transform_9, window_bounds = array<i64: 2, 32, 128>}, {pipeline_mode = #tpu.pipeline_mode<synchronous>, transform_indices = @transform_10, window_bounds = array<i64: 2, 64, 32>}, {pipeline_mode = #tpu.pipeline_mode<synchronous>, transform_indices = @transform_11, window_bounds = array<i64: 1, 32>}, {pipeline_mode = #tpu.pipeline_mode<synchronous>, transform_indices = @transform_12, window_bounds = array<i64: 32, 1>}, {transform_indices = @transform_13, window_bounds = array<i64: 1, 1, 1>}]} {
    %c0 = arith.constant 0 : index
    %c0_0 = arith.constant 0 : index
    %c0_1 = arith.constant 0 : index
    %0 = vector.load %arg1[%c0, %c0_0, %c0_1] : memref<1x8x1xi32, #tpu.memory_space<vmem>>, vector<1x8x1xi32>
    %1 = vector.shape_cast %0 : vector<1x8x1xi32> to vector<8x1xi32>
    %2 = tpu.iota {dimensions = array<i32: 1>} : vector<8x64xi32>
    %3 = vector.broadcast %1 : vector<8x1xi32> to vector<8x64xi32>
    %4 = arith.cmpi eq, %2, %3 : vector<8x64xi32>
    %5 = arith.extui %4 : vector<8x64xi1> to vector<8x64xi32>
    %6 = arith.sitofp %5 : vector<8x64xi32> to vector<8x64xf32>
    %7 = arith.truncf %6 : vector<8x64xf32> to vector<8x64xbf16>
    %c0_2 = arith.constant 0 : index
    %c0_3 = arith.constant 0 : index
    %8 = vector.load %arg2[%c0_2, %c0_3] : memref<64x32xbf16, #tpu.memory_space<vmem>>, vector<64x32xbf16>
    %cst = arith.constant dense<0.000000e+00> : vector<8x32xf32>
    %9 = tpu.matmul %7, %8, %cst {dimension_numbers = #tpu.dot_dimension_numbers<[1], [0], [0], [1], [0, 0, 1, 1], [], []>} : vector<8x64xbf16>, vector<64x32xbf16>, vector<8x32xf32> -> vector<8x32xf32>
    %c0_4 = arith.constant 0 : index
    %c0_5 = arith.constant 0 : index
    %10 = vector.load %arg3[%c0_4, %c0_5] : memref<8x32xf32, #tpu.memory_space<vmem>>, vector<8x32xf32>
    %11 = arith.addf %9, %10 : vector<8x32xf32>
    %12 = tpu.iota {dimensions = array<i32: 0>} : vector<8x8xi32>
    %13 = tpu.iota {dimensions = array<i32: 1>} : vector<8x8xi32>
    %14 = arith.cmpi sle, %13, %12 : vector<8x8xi32>
    %c0_6 = arith.constant 0 : index
    %c0_7 = arith.constant 0 : index
    %c0_8 = arith.constant 0 : index
    %15 = vector.load %arg4[%c0_6, %c0_7, %c0_8] : memref<2x1x32xf32, #tpu.memory_space<vmem>>, vector<1x1x32xf32>
    %16 = vector.shape_cast %15 : vector<1x1x32xf32> to vector<1x32xf32>
    %17 = arith.mulf %11, %11 : vector<8x32xf32>
    %cst_9 = arith.constant dense<0.000000e+00> : vector<8xf32>
    %18 = vector.multi_reduction <add>, %17, %cst_9 [1] : vector<8x32xf32> to vector<8xf32>
    %19 = vector.shape_cast %18 : vector<8xf32> to vector<8x1xf32>
    %cst_10 = arith.constant 3.200000e+01 : f32
    %20 = vector.broadcast %cst_10 : f32 to vector<8x1xf32>
    %21 = arith.divf %19, %20 : vector<8x1xf32>
    %cst_11 = arith.constant 9.99999974E-6 : f32
    %22 = vector.broadcast %cst_11 : f32 to vector<8x1xf32>
    %23 = arith.addf %21, %22 : vector<8x1xf32>
    %24 = math.rsqrt %23 : vector<8x1xf32>
    %25 = vector.broadcast %24 : vector<8x1xf32> to vector<8x32xf32>
    %26 = arith.mulf %11, %25 : vector<8x32xf32>
    %27 = vector.broadcast %16 : vector<1x32xf32> to vector<8x32xf32>
    %28 = arith.mulf %26, %27 : vector<8x32xf32>
    %c0_12 = arith.constant 0 : index
    %c0_13 = arith.constant 0 : index
    %c0_14 = arith.constant 0 : index
    %29 = vector.load %arg5[%c0_12, %c0_13, %c0_14] : memref<8x32x8xbf16, #tpu.memory_space<vmem>>, vector<1x32x8xbf16>
    %30 = vector.shape_cast %29 : vector<1x32x8xbf16> to vector<32x8xbf16>
    %31 = arith.truncf %28 : vector<8x32xf32> to vector<8x32xbf16>
    %cst_15 = arith.constant dense<0.000000e+00> : vector<8x8xf32>
    %32 = tpu.matmul %31, %30, %cst_15 {dimension_numbers = #tpu.dot_dimension_numbers<[1], [0], [0], [1], [0, 0, 1, 1], [], []>} : vector<8x32xbf16>, vector<32x8xbf16>, vector<8x8xf32> -> vector<8x8xf32>
    %c0_16 = arith.constant 0 : index
    %c0_17 = arith.constant 0 : index
    %c0_18 = arith.constant 0 : index
    %33 = vector.load %arg6[%c0_16, %c0_17, %c0_18] : memref<8x32x8xbf16, #tpu.memory_space<vmem>>, vector<1x32x8xbf16>
    %34 = vector.shape_cast %33 : vector<1x32x8xbf16> to vector<32x8xbf16>
    %35 = arith.truncf %28 : vector<8x32xf32> to vector<8x32xbf16>
    %cst_19 = arith.constant dense<0.000000e+00> : vector<8x8xf32>
    %36 = tpu.matmul %35, %34, %cst_19 {dimension_numbers = #tpu.dot_dimension_numbers<[1], [0], [0], [1], [0, 0, 1, 1], [], []>} : vector<8x32xbf16>, vector<32x8xbf16>, vector<8x8xf32> -> vector<8x8xf32>
    %c0_20 = arith.constant 0 : index
    %c0_21 = arith.constant 0 : index
    %c0_22 = arith.constant 0 : index
    %37 = vector.load %arg7[%c0_20, %c0_21, %c0_22] : memref<8x32x8xbf16, #tpu.memory_space<vmem>>, vector<1x32x8xbf16>
    %38 = vector.shape_cast %37 : vector<1x32x8xbf16> to vector<32x8xbf16>
    %39 = arith.truncf %28 : vector<8x32xf32> to vector<8x32xbf16>
    %cst_23 = arith.constant dense<0.000000e+00> : vector<8x8xf32>
    %40 = tpu.matmul %39, %38, %cst_23 {dimension_numbers = #tpu.dot_dimension_numbers<[1], [0], [0], [1], [0, 0, 1, 1], [], []>} : vector<8x32xbf16>, vector<32x8xbf16>, vector<8x8xf32> -> vector<8x8xf32>
    %41 = arith.truncf %32 : vector<8x8xf32> to vector<8x8xbf16>
    %42 = arith.truncf %36 : vector<8x8xf32> to vector<8x8xbf16>
    %43 = tpu.transpose %42, [1, 0] : vector<8x8xbf16> -> vector<8x8xbf16>
    %cst_24 = arith.constant dense<0.000000e+00> : vector<8x8xf32>
    %44 = tpu.matmul %41, %43, %cst_24 {dimension_numbers = #tpu.dot_dimension_numbers<[1], [0], [0], [1], [0, 0, 1, 1], [], []>} : vector<8x8xbf16>, vector<8x8xbf16>, vector<8x8xf32> -> vector<8x8xf32>
    %cst_25 = arith.constant -1.000000e+30 : f32
    %45 = vector.broadcast %cst_25 : f32 to vector<8x8xf32>
    %46 = arith.select %14, %44, %45 : vector<8x8xi1>, vector<8x8xf32>
    %cst_26 = arith.constant dense<0xFF800000> : vector<8xf32>
    %47 = vector.multi_reduction <maximumf>, %46, %cst_26 [1] : vector<8x8xf32> to vector<8xf32>
    %48 = vector.shape_cast %47 : vector<8xf32> to vector<8x1xf32>
    %49 = vector.broadcast %48 : vector<8x1xf32> to vector<8x8xf32>
    %50 = arith.subf %46, %49 : vector<8x8xf32>
    %51 = math.exp %50 : vector<8x8xf32>
    %cst_27 = arith.constant dense<0.000000e+00> : vector<8xf32>
    %52 = vector.multi_reduction <add>, %51, %cst_27 [1] : vector<8x8xf32> to vector<8xf32>
    %53 = vector.shape_cast %52 : vector<8xf32> to vector<8x1xf32>
    %54 = tpu.reciprocal %53 {approx = true} : vector<8x1xf32> -> vector<8x1xf32>
    %55 = vector.broadcast %54 : vector<8x1xf32> to vector<8x8xf32>
    %56 = arith.mulf %51, %55 : vector<8x8xf32>
    %57 = arith.truncf %56 : vector<8x8xf32> to vector<8x8xbf16>
    %58 = arith.truncf %40 : vector<8x8xf32> to vector<8x8xbf16>
    %cst_28 = arith.constant dense<0.000000e+00> : vector<8x8xf32>
    %59 = tpu.matmul %57, %58, %cst_28 {dimension_numbers = #tpu.dot_dimension_numbers<[1], [0], [0], [1], [0, 0, 1, 1], [], []>} : vector<8x8xbf16>, vector<8x8xbf16>, vector<8x8xf32> -> vector<8x8xf32>
    %c0_29 = arith.constant 0 : index
    %c0_30 = arith.constant 0 : index
    %c0_31 = arith.constant 0 : index
    %60 = vector.load %arg8[%c0_29, %c0_30, %c0_31] : memref<8x8x32xbf16, #tpu.memory_space<vmem>>, vector<1x8x32xbf16>
    %61 = vector.shape_cast %60 : vector<1x8x32xbf16> to vector<8x32xbf16>
    %62 = arith.truncf %59 : vector<8x8xf32> to vector<8x8xbf16>
    %cst_32 = arith.constant dense<0.000000e+00> : vector<8x32xf32>
    %63 = tpu.matmul %62, %61, %cst_32 {dimension_numbers = #tpu.dot_dimension_numbers<[1], [0], [0], [1], [0, 0, 1, 1], [], []>} : vector<8x8xbf16>, vector<8x32xbf16>, vector<8x32xf32> -> vector<8x32xf32>
    %c1 = arith.constant 1 : index
    %c0_33 = arith.constant 0 : index
    %c0_34 = arith.constant 0 : index
    %64 = vector.load %arg5[%c1, %c0_33, %c0_34] : memref<8x32x8xbf16, #tpu.memory_space<vmem>>, vector<1x32x8xbf16>
    %65 = vector.shape_cast %64 : vector<1x32x8xbf16> to vector<32x8xbf16>
    %66 = arith.truncf %28 : vector<8x32xf32> to vector<8x32xbf16>
    %cst_35 = arith.constant dense<0.000000e+00> : vector<8x8xf32>
    %67 = tpu.matmul %66, %65, %cst_35 {dimension_numbers = #tpu.dot_dimension_numbers<[1], [0], [0], [1], [0, 0, 1, 1], [], []>} : vector<8x32xbf16>, vector<32x8xbf16>, vector<8x8xf32> -> vector<8x8xf32>
    %c1_36 = arith.constant 1 : index
    %c0_37 = arith.constant 0 : index
    %c0_38 = arith.constant 0 : index
    %68 = vector.load %arg6[%c1_36, %c0_37, %c0_38] : memref<8x32x8xbf16, #tpu.memory_space<vmem>>, vector<1x32x8xbf16>
    %69 = vector.shape_cast %68 : vector<1x32x8xbf16> to vector<32x8xbf16>
    %70 = arith.truncf %28 : vector<8x32xf32> to vector<8x32xbf16>
    %cst_39 = arith.constant dense<0.000000e+00> : vector<8x8xf32>
    %71 = tpu.matmul %70, %69, %cst_39 {dimension_numbers = #tpu.dot_dimension_numbers<[1], [0], [0], [1], [0, 0, 1, 1], [], []>} : vector<8x32xbf16>, vector<32x8xbf16>, vector<8x8xf32> -> vector<8x8xf32>
    %c1_40 = arith.constant 1 : index
    %c0_41 = arith.constant 0 : index
    %c0_42 = arith.constant 0 : index
    %72 = vector.load %arg7[%c1_40, %c0_41, %c0_42] : memref<8x32x8xbf16, #tpu.memory_space<vmem>>, vector<1x32x8xbf16>
    %73 = vector.shape_cast %72 : vector<1x32x8xbf16> to vector<32x8xbf16>
    %74 = arith.truncf %28 : vector<8x32xf32> to vector<8x32xbf16>
    %cst_43 = arith.constant dense<0.000000e+00> : vector<8x8xf32>
    %75 = tpu.matmul %74, %73, %cst_43 {dimension_numbers = #tpu.dot_dimension_numbers<[1], [0], [0], [1], [0, 0, 1, 1], [], []>} : vector<8x32xbf16>, vector<32x8xbf16>, vector<8x8xf32> -> vector<8x8xf32>
    %76 = arith.truncf %67 : vector<8x8xf32> to vector<8x8xbf16>
    %77 = arith.truncf %71 : vector<8x8xf32> to vector<8x8xbf16>
    %78 = tpu.transpose %77, [1, 0] : vector<8x8xbf16> -> vector<8x8xbf16>
    %cst_44 = arith.constant dense<0.000000e+00> : vector<8x8xf32>
    %79 = tpu.matmul %76, %78, %cst_44 {dimension_numbers = #tpu.dot_dimension_numbers<[1], [0], [0], [1], [0, 0, 1, 1], [], []>} : vector<8x8xbf16>, vector<8x8xbf16>, vector<8x8xf32> -> vector<8x8xf32>
    %cst_45 = arith.constant -1.000000e+30 : f32
    %80 = vector.broadcast %cst_45 : f32 to vector<8x8xf32>
    %81 = arith.select %14, %79, %80 : vector<8x8xi1>, vector<8x8xf32>
    %cst_46 = arith.constant dense<0xFF800000> : vector<8xf32>
    %82 = vector.multi_reduction <maximumf>, %81, %cst_46 [1] : vector<8x8xf32> to vector<8xf32>
    %83 = vector.shape_cast %82 : vector<8xf32> to vector<8x1xf32>
    %84 = vector.broadcast %83 : vector<8x1xf32> to vector<8x8xf32>
    %85 = arith.subf %81, %84 : vector<8x8xf32>
    %86 = math.exp %85 : vector<8x8xf32>
    %cst_47 = arith.constant dense<0.000000e+00> : vector<8xf32>
    %87 = vector.multi_reduction <add>, %86, %cst_47 [1] : vector<8x8xf32> to vector<8xf32>
    %88 = vector.shape_cast %87 : vector<8xf32> to vector<8x1xf32>
    %89 = tpu.reciprocal %88 {approx = true} : vector<8x1xf32> -> vector<8x1xf32>
    %90 = vector.broadcast %89 : vector<8x1xf32> to vector<8x8xf32>
    %91 = arith.mulf %86, %90 : vector<8x8xf32>
    %92 = arith.truncf %91 : vector<8x8xf32> to vector<8x8xbf16>
    %93 = arith.truncf %75 : vector<8x8xf32> to vector<8x8xbf16>
    %cst_48 = arith.constant dense<0.000000e+00> : vector<8x8xf32>
    %94 = tpu.matmul %92, %93, %cst_48 {dimension_numbers = #tpu.dot_dimension_numbers<[1], [0], [0], [1], [0, 0, 1, 1], [], []>} : vector<8x8xbf16>, vector<8x8xbf16>, vector<8x8xf32> -> vector<8x8xf32>
    %c1_49 = arith.constant 1 : index
    %c0_50 = arith.constant 0 : index
    %c0_51 = arith.constant 0 : index
    %95 = vector.load %arg8[%c1_49, %c0_50, %c0_51] : memref<8x8x32xbf16, #tpu.memory_space<vmem>>, vector<1x8x32xbf16>
    %96 = vector.shape_cast %95 : vector<1x8x32xbf16> to vector<8x32xbf16>
    %97 = arith.truncf %94 : vector<8x8xf32> to vector<8x8xbf16>
    %cst_52 = arith.constant dense<0.000000e+00> : vector<8x32xf32>
    %98 = tpu.matmul %97, %96, %cst_52 {dimension_numbers = #tpu.dot_dimension_numbers<[1], [0], [0], [1], [0, 0, 1, 1], [], []>} : vector<8x8xbf16>, vector<8x32xbf16>, vector<8x32xf32> -> vector<8x32xf32>
    %99 = arith.addf %63, %98 : vector<8x32xf32>
    %c2 = arith.constant 2 : index
    %c0_53 = arith.constant 0 : index
    %c0_54 = arith.constant 0 : index
    %100 = vector.load %arg5[%c2, %c0_53, %c0_54] : memref<8x32x8xbf16, #tpu.memory_space<vmem>>, vector<1x32x8xbf16>
    %101 = vector.shape_cast %100 : vector<1x32x8xbf16> to vector<32x8xbf16>
    %102 = arith.truncf %28 : vector<8x32xf32> to vector<8x32xbf16>
    %cst_55 = arith.constant dense<0.000000e+00> : vector<8x8xf32>
    %103 = tpu.matmul %102, %101, %cst_55 {dimension_numbers = #tpu.dot_dimension_numbers<[1], [0], [0], [1], [0, 0, 1, 1], [], []>} : vector<8x32xbf16>, vector<32x8xbf16>, vector<8x8xf32> -> vector<8x8xf32>
    %c2_56 = arith.constant 2 : index
    %c0_57 = arith.constant 0 : index
    %c0_58 = arith.constant 0 : index
    %104 = vector.load %arg6[%c2_56, %c0_57, %c0_58] : memref<8x32x8xbf16, #tpu.memory_space<vmem>>, vector<1x32x8xbf16>
    %105 = vector.shape_cast %104 : vector<1x32x8xbf16> to vector<32x8xbf16>
    %106 = arith.truncf %28 : vector<8x32xf32> to vector<8x32xbf16>
    %cst_59 = arith.constant dense<0.000000e+00> : vector<8x8xf32>
    %107 = tpu.matmul %106, %105, %cst_59 {dimension_numbers = #tpu.dot_dimension_numbers<[1], [0], [0], [1], [0, 0, 1, 1], [], []>} : vector<8x32xbf16>, vector<32x8xbf16>, vector<8x8xf32> -> vector<8x8xf32>
    %c2_60 = arith.constant 2 : index
    %c0_61 = arith.constant 0 : index
    %c0_62 = arith.constant 0 : index
    %108 = vector.load %arg7[%c2_60, %c0_61, %c0_62] : memref<8x32x8xbf16, #tpu.memory_space<vmem>>, vector<1x32x8xbf16>
    %109 = vector.shape_cast %108 : vector<1x32x8xbf16> to vector<32x8xbf16>
    %110 = arith.truncf %28 : vector<8x32xf32> to vector<8x32xbf16>
    %cst_63 = arith.constant dense<0.000000e+00> : vector<8x8xf32>
    %111 = tpu.matmul %110, %109, %cst_63 {dimension_numbers = #tpu.dot_dimension_numbers<[1], [0], [0], [1], [0, 0, 1, 1], [], []>} : vector<8x32xbf16>, vector<32x8xbf16>, vector<8x8xf32> -> vector<8x8xf32>
    %112 = arith.truncf %103 : vector<8x8xf32> to vector<8x8xbf16>
    %113 = arith.truncf %107 : vector<8x8xf32> to vector<8x8xbf16>
    %114 = tpu.transpose %113, [1, 0] : vector<8x8xbf16> -> vector<8x8xbf16>
    %cst_64 = arith.constant dense<0.000000e+00> : vector<8x8xf32>
    %115 = tpu.matmul %112, %114, %cst_64 {dimension_numbers = #tpu.dot_dimension_numbers<[1], [0], [0], [1], [0, 0, 1, 1], [], []>} : vector<8x8xbf16>, vector<8x8xbf16>, vector<8x8xf32> -> vector<8x8xf32>
    %cst_65 = arith.constant -1.000000e+30 : f32
    %116 = vector.broadcast %cst_65 : f32 to vector<8x8xf32>
    %117 = arith.select %14, %115, %116 : vector<8x8xi1>, vector<8x8xf32>
    %cst_66 = arith.constant dense<0xFF800000> : vector<8xf32>
    %118 = vector.multi_reduction <maximumf>, %117, %cst_66 [1] : vector<8x8xf32> to vector<8xf32>
    %119 = vector.shape_cast %118 : vector<8xf32> to vector<8x1xf32>
    %120 = vector.broadcast %119 : vector<8x1xf32> to vector<8x8xf32>
    %121 = arith.subf %117, %120 : vector<8x8xf32>
    %122 = math.exp %121 : vector<8x8xf32>
    %cst_67 = arith.constant dense<0.000000e+00> : vector<8xf32>
    %123 = vector.multi_reduction <add>, %122, %cst_67 [1] : vector<8x8xf32> to vector<8xf32>
    %124 = vector.shape_cast %123 : vector<8xf32> to vector<8x1xf32>
    %125 = tpu.reciprocal %124 {approx = true} : vector<8x1xf32> -> vector<8x1xf32>
    %126 = vector.broadcast %125 : vector<8x1xf32> to vector<8x8xf32>
    %127 = arith.mulf %122, %126 : vector<8x8xf32>
    %128 = arith.truncf %127 : vector<8x8xf32> to vector<8x8xbf16>
    %129 = arith.truncf %111 : vector<8x8xf32> to vector<8x8xbf16>
    %cst_68 = arith.constant dense<0.000000e+00> : vector<8x8xf32>
    %130 = tpu.matmul %128, %129, %cst_68 {dimension_numbers = #tpu.dot_dimension_numbers<[1], [0], [0], [1], [0, 0, 1, 1], [], []>} : vector<8x8xbf16>, vector<8x8xbf16>, vector<8x8xf32> -> vector<8x8xf32>
    %c2_69 = arith.constant 2 : index
    %c0_70 = arith.constant 0 : index
    %c0_71 = arith.constant 0 : index
    %131 = vector.load %arg8[%c2_69, %c0_70, %c0_71] : memref<8x8x32xbf16, #tpu.memory_space<vmem>>, vector<1x8x32xbf16>
    %132 = vector.shape_cast %131 : vector<1x8x32xbf16> to vector<8x32xbf16>
    %133 = arith.truncf %130 : vector<8x8xf32> to vector<8x8xbf16>
    %cst_72 = arith.constant dense<0.000000e+00> : vector<8x32xf32>
    %134 = tpu.matmul %133, %132, %cst_72 {dimension_numbers = #tpu.dot_dimension_numbers<[1], [0], [0], [1], [0, 0, 1, 1], [], []>} : vector<8x8xbf16>, vector<8x32xbf16>, vector<8x32xf32> -> vector<8x32xf32>
    %135 = arith.addf %99, %134 : vector<8x32xf32>
    %c3 = arith.constant 3 : index
    %c0_73 = arith.constant 0 : index
    %c0_74 = arith.constant 0 : index
    %136 = vector.load %arg5[%c3, %c0_73, %c0_74] : memref<8x32x8xbf16, #tpu.memory_space<vmem>>, vector<1x32x8xbf16>
    %137 = vector.shape_cast %136 : vector<1x32x8xbf16> to vector<32x8xbf16>
    %138 = arith.truncf %28 : vector<8x32xf32> to vector<8x32xbf16>
    %cst_75 = arith.constant dense<0.000000e+00> : vector<8x8xf32>
    %139 = tpu.matmul %138, %137, %cst_75 {dimension_numbers = #tpu.dot_dimension_numbers<[1], [0], [0], [1], [0, 0, 1, 1], [], []>} : vector<8x32xbf16>, vector<32x8xbf16>, vector<8x8xf32> -> vector<8x8xf32>
    %c3_76 = arith.constant 3 : index
    %c0_77 = arith.constant 0 : index
    %c0_78 = arith.constant 0 : index
    %140 = vector.load %arg6[%c3_76, %c0_77, %c0_78] : memref<8x32x8xbf16, #tpu.memory_space<vmem>>, vector<1x32x8xbf16>
    %141 = vector.shape_cast %140 : vector<1x32x8xbf16> to vector<32x8xbf16>
    %142 = arith.truncf %28 : vector<8x32xf32> to vector<8x32xbf16>
    %cst_79 = arith.constant dense<0.000000e+00> : vector<8x8xf32>
    %143 = tpu.matmul %142, %141, %cst_79 {dimension_numbers = #tpu.dot_dimension_numbers<[1], [0], [0], [1], [0, 0, 1, 1], [], []>} : vector<8x32xbf16>, vector<32x8xbf16>, vector<8x8xf32> -> vector<8x8xf32>
    %c3_80 = arith.constant 3 : index
    %c0_81 = arith.constant 0 : index
    %c0_82 = arith.constant 0 : index
    %144 = vector.load %arg7[%c3_80, %c0_81, %c0_82] : memref<8x32x8xbf16, #tpu.memory_space<vmem>>, vector<1x32x8xbf16>
    %145 = vector.shape_cast %144 : vector<1x32x8xbf16> to vector<32x8xbf16>
    %146 = arith.truncf %28 : vector<8x32xf32> to vector<8x32xbf16>
    %cst_83 = arith.constant dense<0.000000e+00> : vector<8x8xf32>
    %147 = tpu.matmul %146, %145, %cst_83 {dimension_numbers = #tpu.dot_dimension_numbers<[1], [0], [0], [1], [0, 0, 1, 1], [], []>} : vector<8x32xbf16>, vector<32x8xbf16>, vector<8x8xf32> -> vector<8x8xf32>
    %148 = arith.truncf %139 : vector<8x8xf32> to vector<8x8xbf16>
    %149 = arith.truncf %143 : vector<8x8xf32> to vector<8x8xbf16>
    %150 = tpu.transpose %149, [1, 0] : vector<8x8xbf16> -> vector<8x8xbf16>
    %cst_84 = arith.constant dense<0.000000e+00> : vector<8x8xf32>
    %151 = tpu.matmul %148, %150, %cst_84 {dimension_numbers = #tpu.dot_dimension_numbers<[1], [0], [0], [1], [0, 0, 1, 1], [], []>} : vector<8x8xbf16>, vector<8x8xbf16>, vector<8x8xf32> -> vector<8x8xf32>
    %cst_85 = arith.constant -1.000000e+30 : f32
    %152 = vector.broadcast %cst_85 : f32 to vector<8x8xf32>
    %153 = arith.select %14, %151, %152 : vector<8x8xi1>, vector<8x8xf32>
    %cst_86 = arith.constant dense<0xFF800000> : vector<8xf32>
    %154 = vector.multi_reduction <maximumf>, %153, %cst_86 [1] : vector<8x8xf32> to vector<8xf32>
    %155 = vector.shape_cast %154 : vector<8xf32> to vector<8x1xf32>
    %156 = vector.broadcast %155 : vector<8x1xf32> to vector<8x8xf32>
    %157 = arith.subf %153, %156 : vector<8x8xf32>
    %158 = math.exp %157 : vector<8x8xf32>
    %cst_87 = arith.constant dense<0.000000e+00> : vector<8xf32>
    %159 = vector.multi_reduction <add>, %158, %cst_87 [1] : vector<8x8xf32> to vector<8xf32>
    %160 = vector.shape_cast %159 : vector<8xf32> to vector<8x1xf32>
    %161 = tpu.reciprocal %160 {approx = true} : vector<8x1xf32> -> vector<8x1xf32>
    %162 = vector.broadcast %161 : vector<8x1xf32> to vector<8x8xf32>
    %163 = arith.mulf %158, %162 : vector<8x8xf32>
    %164 = arith.truncf %163 : vector<8x8xf32> to vector<8x8xbf16>
    %165 = arith.truncf %147 : vector<8x8xf32> to vector<8x8xbf16>
    %cst_88 = arith.constant dense<0.000000e+00> : vector<8x8xf32>
    %166 = tpu.matmul %164, %165, %cst_88 {dimension_numbers = #tpu.dot_dimension_numbers<[1], [0], [0], [1], [0, 0, 1, 1], [], []>} : vector<8x8xbf16>, vector<8x8xbf16>, vector<8x8xf32> -> vector<8x8xf32>
    %c3_89 = arith.constant 3 : index
    %c0_90 = arith.constant 0 : index
    %c0_91 = arith.constant 0 : index
    %167 = vector.load %arg8[%c3_89, %c0_90, %c0_91] : memref<8x8x32xbf16, #tpu.memory_space<vmem>>, vector<1x8x32xbf16>
    %168 = vector.shape_cast %167 : vector<1x8x32xbf16> to vector<8x32xbf16>
    %169 = arith.truncf %166 : vector<8x8xf32> to vector<8x8xbf16>
    %cst_92 = arith.constant dense<0.000000e+00> : vector<8x32xf32>
    %170 = tpu.matmul %169, %168, %cst_92 {dimension_numbers = #tpu.dot_dimension_numbers<[1], [0], [0], [1], [0, 0, 1, 1], [], []>} : vector<8x8xbf16>, vector<8x32xbf16>, vector<8x32xf32> -> vector<8x32xf32>
    %171 = arith.addf %135, %170 : vector<8x32xf32>
    %172 = arith.addf %11, %171 : vector<8x32xf32>
    %c0_93 = arith.constant 0 : index
    %c0_94 = arith.constant 0 : index
    %c0_95 = arith.constant 0 : index
    %173 = vector.load %arg9[%c0_93, %c0_94, %c0_95] : memref<2x1x32xf32, #tpu.memory_space<vmem>>, vector<1x1x32xf32>
    %174 = vector.shape_cast %173 : vector<1x1x32xf32> to vector<1x32xf32>
    %175 = arith.mulf %172, %172 : vector<8x32xf32>
    %cst_96 = arith.constant dense<0.000000e+00> : vector<8xf32>
    %176 = vector.multi_reduction <add>, %175, %cst_96 [1] : vector<8x32xf32> to vector<8xf32>
    %177 = vector.shape_cast %176 : vector<8xf32> to vector<8x1xf32>
    %cst_97 = arith.constant 3.200000e+01 : f32
    %178 = vector.broadcast %cst_97 : f32 to vector<8x1xf32>
    %179 = arith.divf %177, %178 : vector<8x1xf32>
    %cst_98 = arith.constant 9.99999974E-6 : f32
    %180 = vector.broadcast %cst_98 : f32 to vector<8x1xf32>
    %181 = arith.addf %179, %180 : vector<8x1xf32>
    %182 = math.rsqrt %181 : vector<8x1xf32>
    %183 = vector.broadcast %182 : vector<8x1xf32> to vector<8x32xf32>
    %184 = arith.mulf %172, %183 : vector<8x32xf32>
    %185 = vector.broadcast %174 : vector<1x32xf32> to vector<8x32xf32>
    %186 = arith.mulf %184, %185 : vector<8x32xf32>
    %c0_99 = arith.constant 0 : index
    %c0_100 = arith.constant 0 : index
    %c0_101 = arith.constant 0 : index
    %187 = vector.load %arg10[%c0_99, %c0_100, %c0_101] : memref<2x32x128xbf16, #tpu.memory_space<vmem>>, vector<1x32x128xbf16>
    %188 = vector.shape_cast %187 : vector<1x32x128xbf16> to vector<32x128xbf16>
    %189 = arith.truncf %186 : vector<8x32xf32> to vector<8x32xbf16>
    %cst_102 = arith.constant dense<0.000000e+00> : vector<8x128xf32>
    %190 = tpu.matmul %189, %188, %cst_102 {dimension_numbers = #tpu.dot_dimension_numbers<[1], [0], [0], [1], [0, 0, 1, 1], [], []>} : vector<8x32xbf16>, vector<32x128xbf16>, vector<8x128xf32> -> vector<8x128xf32>
    %191 = vector.extract_strided_slice %190 {offsets = [0, 0], sizes = [8, 64], strides = [1, 1]} : vector<8x128xf32> to vector<8x64xf32>
    %192 = vector.extract_strided_slice %190 {offsets = [0, 64], sizes = [8, 64], strides = [1, 1]} : vector<8x128xf32> to vector<8x64xf32>
    %193 = arith.negf %191 : vector<8x64xf32>
    %194 = math.exp %193 : vector<8x64xf32>
    %cst_103 = arith.constant 1.000000e+00 : f32
    %195 = vector.broadcast %cst_103 : f32 to vector<8x64xf32>
    %196 = arith.addf %195, %194 : vector<8x64xf32>
    %197 = arith.divf %195, %196 : vector<8x64xf32>
    %198 = arith.mulf %191, %197 : vector<8x64xf32>
    %199 = arith.mulf %198, %192 : vector<8x64xf32>
    %c0_104 = arith.constant 0 : index
    %c0_105 = arith.constant 0 : index
    %c0_106 = arith.constant 0 : index
    %200 = vector.load %arg11[%c0_104, %c0_105, %c0_106] : memref<2x64x32xbf16, #tpu.memory_space<vmem>>, vector<1x64x32xbf16>
    %201 = vector.shape_cast %200 : vector<1x64x32xbf16> to vector<64x32xbf16>
    %202 = arith.truncf %199 : vector<8x64xf32> to vector<8x64xbf16>
    %cst_107 = arith.constant dense<0.000000e+00> : vector<8x32xf32>
    %203 = tpu.matmul %202, %201, %cst_107 {dimension_numbers = #tpu.dot_dimension_numbers<[1], [0], [0], [1], [0, 0, 1, 1], [], []>} : vector<8x64xbf16>, vector<64x32xbf16>, vector<8x32xf32> -> vector<8x32xf32>
    %204 = arith.addf %172, %203 : vector<8x32xf32>
    %c1_108 = arith.constant 1 : index
    %c0_109 = arith.constant 0 : index
    %c0_110 = arith.constant 0 : index
    %205 = vector.load %arg4[%c1_108, %c0_109, %c0_110] : memref<2x1x32xf32, #tpu.memory_space<vmem>>, vector<1x1x32xf32>
    %206 = vector.shape_cast %205 : vector<1x1x32xf32> to vector<1x32xf32>
    %207 = arith.mulf %204, %204 : vector<8x32xf32>
    %cst_111 = arith.constant dense<0.000000e+00> : vector<8xf32>
    %208 = vector.multi_reduction <add>, %207, %cst_111 [1] : vector<8x32xf32> to vector<8xf32>
    %209 = vector.shape_cast %208 : vector<8xf32> to vector<8x1xf32>
    %cst_112 = arith.constant 3.200000e+01 : f32
    %210 = vector.broadcast %cst_112 : f32 to vector<8x1xf32>
    %211 = arith.divf %209, %210 : vector<8x1xf32>
    %cst_113 = arith.constant 9.99999974E-6 : f32
    %212 = vector.broadcast %cst_113 : f32 to vector<8x1xf32>
    %213 = arith.addf %211, %212 : vector<8x1xf32>
    %214 = math.rsqrt %213 : vector<8x1xf32>
    %215 = vector.broadcast %214 : vector<8x1xf32> to vector<8x32xf32>
    %216 = arith.mulf %204, %215 : vector<8x32xf32>
    %217 = vector.broadcast %206 : vector<1x32xf32> to vector<8x32xf32>
    %218 = arith.mulf %216, %217 : vector<8x32xf32>
    %c4 = arith.constant 4 : index
    %c0_114 = arith.constant 0 : index
    %c0_115 = arith.constant 0 : index
    %219 = vector.load %arg5[%c4, %c0_114, %c0_115] : memref<8x32x8xbf16, #tpu.memory_space<vmem>>, vector<1x32x8xbf16>
    %220 = vector.shape_cast %219 : vector<1x32x8xbf16> to vector<32x8xbf16>
    %221 = arith.truncf %218 : vector<8x32xf32> to vector<8x32xbf16>
    %cst_116 = arith.constant dense<0.000000e+00> : vector<8x8xf32>
    %222 = tpu.matmul %221, %220, %cst_116 {dimension_numbers = #tpu.dot_dimension_numbers<[1], [0], [0], [1], [0, 0, 1, 1], [], []>} : vector<8x32xbf16>, vector<32x8xbf16>, vector<8x8xf32> -> vector<8x8xf32>
    %c4_117 = arith.constant 4 : index
    %c0_118 = arith.constant 0 : index
    %c0_119 = arith.constant 0 : index
    %223 = vector.load %arg6[%c4_117, %c0_118, %c0_119] : memref<8x32x8xbf16, #tpu.memory_space<vmem>>, vector<1x32x8xbf16>
    %224 = vector.shape_cast %223 : vector<1x32x8xbf16> to vector<32x8xbf16>
    %225 = arith.truncf %218 : vector<8x32xf32> to vector<8x32xbf16>
    %cst_120 = arith.constant dense<0.000000e+00> : vector<8x8xf32>
    %226 = tpu.matmul %225, %224, %cst_120 {dimension_numbers = #tpu.dot_dimension_numbers<[1], [0], [0], [1], [0, 0, 1, 1], [], []>} : vector<8x32xbf16>, vector<32x8xbf16>, vector<8x8xf32> -> vector<8x8xf32>
    %c4_121 = arith.constant 4 : index
    %c0_122 = arith.constant 0 : index
    %c0_123 = arith.constant 0 : index
    %227 = vector.load %arg7[%c4_121, %c0_122, %c0_123] : memref<8x32x8xbf16, #tpu.memory_space<vmem>>, vector<1x32x8xbf16>
    %228 = vector.shape_cast %227 : vector<1x32x8xbf16> to vector<32x8xbf16>
    %229 = arith.truncf %218 : vector<8x32xf32> to vector<8x32xbf16>
    %cst_124 = arith.constant dense<0.000000e+00> : vector<8x8xf32>
    %230 = tpu.matmul %229, %228, %cst_124 {dimension_numbers = #tpu.dot_dimension_numbers<[1], [0], [0], [1], [0, 0, 1, 1], [], []>} : vector<8x32xbf16>, vector<32x8xbf16>, vector<8x8xf32> -> vector<8x8xf32>
    %231 = arith.truncf %222 : vector<8x8xf32> to vector<8x8xbf16>
    %232 = arith.truncf %226 : vector<8x8xf32> to vector<8x8xbf16>
    %233 = tpu.transpose %232, [1, 0] : vector<8x8xbf16> -> vector<8x8xbf16>
    %cst_125 = arith.constant dense<0.000000e+00> : vector<8x8xf32>
    %234 = tpu.matmul %231, %233, %cst_125 {dimension_numbers = #tpu.dot_dimension_numbers<[1], [0], [0], [1], [0, 0, 1, 1], [], []>} : vector<8x8xbf16>, vector<8x8xbf16>, vector<8x8xf32> -> vector<8x8xf32>
    %cst_126 = arith.constant -1.000000e+30 : f32
    %235 = vector.broadcast %cst_126 : f32 to vector<8x8xf32>
    %236 = arith.select %14, %234, %235 : vector<8x8xi1>, vector<8x8xf32>
    %cst_127 = arith.constant dense<0xFF800000> : vector<8xf32>
    %237 = vector.multi_reduction <maximumf>, %236, %cst_127 [1] : vector<8x8xf32> to vector<8xf32>
    %238 = vector.shape_cast %237 : vector<8xf32> to vector<8x1xf32>
    %239 = vector.broadcast %238 : vector<8x1xf32> to vector<8x8xf32>
    %240 = arith.subf %236, %239 : vector<8x8xf32>
    %241 = math.exp %240 : vector<8x8xf32>
    %cst_128 = arith.constant dense<0.000000e+00> : vector<8xf32>
    %242 = vector.multi_reduction <add>, %241, %cst_128 [1] : vector<8x8xf32> to vector<8xf32>
    %243 = vector.shape_cast %242 : vector<8xf32> to vector<8x1xf32>
    %244 = tpu.reciprocal %243 {approx = true} : vector<8x1xf32> -> vector<8x1xf32>
    %245 = vector.broadcast %244 : vector<8x1xf32> to vector<8x8xf32>
    %246 = arith.mulf %241, %245 : vector<8x8xf32>
    %247 = arith.truncf %246 : vector<8x8xf32> to vector<8x8xbf16>
    %248 = arith.truncf %230 : vector<8x8xf32> to vector<8x8xbf16>
    %cst_129 = arith.constant dense<0.000000e+00> : vector<8x8xf32>
    %249 = tpu.matmul %247, %248, %cst_129 {dimension_numbers = #tpu.dot_dimension_numbers<[1], [0], [0], [1], [0, 0, 1, 1], [], []>} : vector<8x8xbf16>, vector<8x8xbf16>, vector<8x8xf32> -> vector<8x8xf32>
    %c4_130 = arith.constant 4 : index
    %c0_131 = arith.constant 0 : index
    %c0_132 = arith.constant 0 : index
    %250 = vector.load %arg8[%c4_130, %c0_131, %c0_132] : memref<8x8x32xbf16, #tpu.memory_space<vmem>>, vector<1x8x32xbf16>
    %251 = vector.shape_cast %250 : vector<1x8x32xbf16> to vector<8x32xbf16>
    %252 = arith.truncf %249 : vector<8x8xf32> to vector<8x8xbf16>
    %cst_133 = arith.constant dense<0.000000e+00> : vector<8x32xf32>
    %253 = tpu.matmul %252, %251, %cst_133 {dimension_numbers = #tpu.dot_dimension_numbers<[1], [0], [0], [1], [0, 0, 1, 1], [], []>} : vector<8x8xbf16>, vector<8x32xbf16>, vector<8x32xf32> -> vector<8x32xf32>
    %c5 = arith.constant 5 : index
    %c0_134 = arith.constant 0 : index
    %c0_135 = arith.constant 0 : index
    %254 = vector.load %arg5[%c5, %c0_134, %c0_135] : memref<8x32x8xbf16, #tpu.memory_space<vmem>>, vector<1x32x8xbf16>
    %255 = vector.shape_cast %254 : vector<1x32x8xbf16> to vector<32x8xbf16>
    %256 = arith.truncf %218 : vector<8x32xf32> to vector<8x32xbf16>
    %cst_136 = arith.constant dense<0.000000e+00> : vector<8x8xf32>
    %257 = tpu.matmul %256, %255, %cst_136 {dimension_numbers = #tpu.dot_dimension_numbers<[1], [0], [0], [1], [0, 0, 1, 1], [], []>} : vector<8x32xbf16>, vector<32x8xbf16>, vector<8x8xf32> -> vector<8x8xf32>
    %c5_137 = arith.constant 5 : index
    %c0_138 = arith.constant 0 : index
    %c0_139 = arith.constant 0 : index
    %258 = vector.load %arg6[%c5_137, %c0_138, %c0_139] : memref<8x32x8xbf16, #tpu.memory_space<vmem>>, vector<1x32x8xbf16>
    %259 = vector.shape_cast %258 : vector<1x32x8xbf16> to vector<32x8xbf16>
    %260 = arith.truncf %218 : vector<8x32xf32> to vector<8x32xbf16>
    %cst_140 = arith.constant dense<0.000000e+00> : vector<8x8xf32>
    %261 = tpu.matmul %260, %259, %cst_140 {dimension_numbers = #tpu.dot_dimension_numbers<[1], [0], [0], [1], [0, 0, 1, 1], [], []>} : vector<8x32xbf16>, vector<32x8xbf16>, vector<8x8xf32> -> vector<8x8xf32>
    %c5_141 = arith.constant 5 : index
    %c0_142 = arith.constant 0 : index
    %c0_143 = arith.constant 0 : index
    %262 = vector.load %arg7[%c5_141, %c0_142, %c0_143] : memref<8x32x8xbf16, #tpu.memory_space<vmem>>, vector<1x32x8xbf16>
    %263 = vector.shape_cast %262 : vector<1x32x8xbf16> to vector<32x8xbf16>
    %264 = arith.truncf %218 : vector<8x32xf32> to vector<8x32xbf16>
    %cst_144 = arith.constant dense<0.000000e+00> : vector<8x8xf32>
    %265 = tpu.matmul %264, %263, %cst_144 {dimension_numbers = #tpu.dot_dimension_numbers<[1], [0], [0], [1], [0, 0, 1, 1], [], []>} : vector<8x32xbf16>, vector<32x8xbf16>, vector<8x8xf32> -> vector<8x8xf32>
    %266 = arith.truncf %257 : vector<8x8xf32> to vector<8x8xbf16>
    %267 = arith.truncf %261 : vector<8x8xf32> to vector<8x8xbf16>
    %268 = tpu.transpose %267, [1, 0] : vector<8x8xbf16> -> vector<8x8xbf16>
    %cst_145 = arith.constant dense<0.000000e+00> : vector<8x8xf32>
    %269 = tpu.matmul %266, %268, %cst_145 {dimension_numbers = #tpu.dot_dimension_numbers<[1], [0], [0], [1], [0, 0, 1, 1], [], []>} : vector<8x8xbf16>, vector<8x8xbf16>, vector<8x8xf32> -> vector<8x8xf32>
    %cst_146 = arith.constant -1.000000e+30 : f32
    %270 = vector.broadcast %cst_146 : f32 to vector<8x8xf32>
    %271 = arith.select %14, %269, %270 : vector<8x8xi1>, vector<8x8xf32>
    %cst_147 = arith.constant dense<0xFF800000> : vector<8xf32>
    %272 = vector.multi_reduction <maximumf>, %271, %cst_147 [1] : vector<8x8xf32> to vector<8xf32>
    %273 = vector.shape_cast %272 : vector<8xf32> to vector<8x1xf32>
    %274 = vector.broadcast %273 : vector<8x1xf32> to vector<8x8xf32>
    %275 = arith.subf %271, %274 : vector<8x8xf32>
    %276 = math.exp %275 : vector<8x8xf32>
    %cst_148 = arith.constant dense<0.000000e+00> : vector<8xf32>
    %277 = vector.multi_reduction <add>, %276, %cst_148 [1] : vector<8x8xf32> to vector<8xf32>
    %278 = vector.shape_cast %277 : vector<8xf32> to vector<8x1xf32>
    %279 = tpu.reciprocal %278 {approx = true} : vector<8x1xf32> -> vector<8x1xf32>
    %280 = vector.broadcast %279 : vector<8x1xf32> to vector<8x8xf32>
    %281 = arith.mulf %276, %280 : vector<8x8xf32>
    %282 = arith.truncf %281 : vector<8x8xf32> to vector<8x8xbf16>
    %283 = arith.truncf %265 : vector<8x8xf32> to vector<8x8xbf16>
    %cst_149 = arith.constant dense<0.000000e+00> : vector<8x8xf32>
    %284 = tpu.matmul %282, %283, %cst_149 {dimension_numbers = #tpu.dot_dimension_numbers<[1], [0], [0], [1], [0, 0, 1, 1], [], []>} : vector<8x8xbf16>, vector<8x8xbf16>, vector<8x8xf32> -> vector<8x8xf32>
    %c5_150 = arith.constant 5 : index
    %c0_151 = arith.constant 0 : index
    %c0_152 = arith.constant 0 : index
    %285 = vector.load %arg8[%c5_150, %c0_151, %c0_152] : memref<8x8x32xbf16, #tpu.memory_space<vmem>>, vector<1x8x32xbf16>
    %286 = vector.shape_cast %285 : vector<1x8x32xbf16> to vector<8x32xbf16>
    %287 = arith.truncf %284 : vector<8x8xf32> to vector<8x8xbf16>
    %cst_153 = arith.constant dense<0.000000e+00> : vector<8x32xf32>
    %288 = tpu.matmul %287, %286, %cst_153 {dimension_numbers = #tpu.dot_dimension_numbers<[1], [0], [0], [1], [0, 0, 1, 1], [], []>} : vector<8x8xbf16>, vector<8x32xbf16>, vector<8x32xf32> -> vector<8x32xf32>
    %289 = arith.addf %253, %288 : vector<8x32xf32>
    %c6 = arith.constant 6 : index
    %c0_154 = arith.constant 0 : index
    %c0_155 = arith.constant 0 : index
    %290 = vector.load %arg5[%c6, %c0_154, %c0_155] : memref<8x32x8xbf16, #tpu.memory_space<vmem>>, vector<1x32x8xbf16>
    %291 = vector.shape_cast %290 : vector<1x32x8xbf16> to vector<32x8xbf16>
    %292 = arith.truncf %218 : vector<8x32xf32> to vector<8x32xbf16>
    %cst_156 = arith.constant dense<0.000000e+00> : vector<8x8xf32>
    %293 = tpu.matmul %292, %291, %cst_156 {dimension_numbers = #tpu.dot_dimension_numbers<[1], [0], [0], [1], [0, 0, 1, 1], [], []>} : vector<8x32xbf16>, vector<32x8xbf16>, vector<8x8xf32> -> vector<8x8xf32>
    %c6_157 = arith.constant 6 : index
    %c0_158 = arith.constant 0 : index
    %c0_159 = arith.constant 0 : index
    %294 = vector.load %arg6[%c6_157, %c0_158, %c0_159] : memref<8x32x8xbf16, #tpu.memory_space<vmem>>, vector<1x32x8xbf16>
    %295 = vector.shape_cast %294 : vector<1x32x8xbf16> to vector<32x8xbf16>
    %296 = arith.truncf %218 : vector<8x32xf32> to vector<8x32xbf16>
    %cst_160 = arith.constant dense<0.000000e+00> : vector<8x8xf32>
    %297 = tpu.matmul %296, %295, %cst_160 {dimension_numbers = #tpu.dot_dimension_numbers<[1], [0], [0], [1], [0, 0, 1, 1], [], []>} : vector<8x32xbf16>, vector<32x8xbf16>, vector<8x8xf32> -> vector<8x8xf32>
    %c6_161 = arith.constant 6 : index
    %c0_162 = arith.constant 0 : index
    %c0_163 = arith.constant 0 : index
    %298 = vector.load %arg7[%c6_161, %c0_162, %c0_163] : memref<8x32x8xbf16, #tpu.memory_space<vmem>>, vector<1x32x8xbf16>
    %299 = vector.shape_cast %298 : vector<1x32x8xbf16> to vector<32x8xbf16>
    %300 = arith.truncf %218 : vector<8x32xf32> to vector<8x32xbf16>
    %cst_164 = arith.constant dense<0.000000e+00> : vector<8x8xf32>
    %301 = tpu.matmul %300, %299, %cst_164 {dimension_numbers = #tpu.dot_dimension_numbers<[1], [0], [0], [1], [0, 0, 1, 1], [], []>} : vector<8x32xbf16>, vector<32x8xbf16>, vector<8x8xf32> -> vector<8x8xf32>
    %302 = arith.truncf %293 : vector<8x8xf32> to vector<8x8xbf16>
    %303 = arith.truncf %297 : vector<8x8xf32> to vector<8x8xbf16>
    %304 = tpu.transpose %303, [1, 0] : vector<8x8xbf16> -> vector<8x8xbf16>
    %cst_165 = arith.constant dense<0.000000e+00> : vector<8x8xf32>
    %305 = tpu.matmul %302, %304, %cst_165 {dimension_numbers = #tpu.dot_dimension_numbers<[1], [0], [0], [1], [0, 0, 1, 1], [], []>} : vector<8x8xbf16>, vector<8x8xbf16>, vector<8x8xf32> -> vector<8x8xf32>
    %cst_166 = arith.constant -1.000000e+30 : f32
    %306 = vector.broadcast %cst_166 : f32 to vector<8x8xf32>
    %307 = arith.select %14, %305, %306 : vector<8x8xi1>, vector<8x8xf32>
    %cst_167 = arith.constant dense<0xFF800000> : vector<8xf32>
    %308 = vector.multi_reduction <maximumf>, %307, %cst_167 [1] : vector<8x8xf32> to vector<8xf32>
    %309 = vector.shape_cast %308 : vector<8xf32> to vector<8x1xf32>
    %310 = vector.broadcast %309 : vector<8x1xf32> to vector<8x8xf32>
    %311 = arith.subf %307, %310 : vector<8x8xf32>
    %312 = math.exp %311 : vector<8x8xf32>
    %cst_168 = arith.constant dense<0.000000e+00> : vector<8xf32>
    %313 = vector.multi_reduction <add>, %312, %cst_168 [1] : vector<8x8xf32> to vector<8xf32>
    %314 = vector.shape_cast %313 : vector<8xf32> to vector<8x1xf32>
    %315 = tpu.reciprocal %314 {approx = true} : vector<8x1xf32> -> vector<8x1xf32>
    %316 = vector.broadcast %315 : vector<8x1xf32> to vector<8x8xf32>
    %317 = arith.mulf %312, %316 : vector<8x8xf32>
    %318 = arith.truncf %317 : vector<8x8xf32> to vector<8x8xbf16>
    %319 = arith.truncf %301 : vector<8x8xf32> to vector<8x8xbf16>
    %cst_169 = arith.constant dense<0.000000e+00> : vector<8x8xf32>
    %320 = tpu.matmul %318, %319, %cst_169 {dimension_numbers = #tpu.dot_dimension_numbers<[1], [0], [0], [1], [0, 0, 1, 1], [], []>} : vector<8x8xbf16>, vector<8x8xbf16>, vector<8x8xf32> -> vector<8x8xf32>
    %c6_170 = arith.constant 6 : index
    %c0_171 = arith.constant 0 : index
    %c0_172 = arith.constant 0 : index
    %321 = vector.load %arg8[%c6_170, %c0_171, %c0_172] : memref<8x8x32xbf16, #tpu.memory_space<vmem>>, vector<1x8x32xbf16>
    %322 = vector.shape_cast %321 : vector<1x8x32xbf16> to vector<8x32xbf16>
    %323 = arith.truncf %320 : vector<8x8xf32> to vector<8x8xbf16>
    %cst_173 = arith.constant dense<0.000000e+00> : vector<8x32xf32>
    %324 = tpu.matmul %323, %322, %cst_173 {dimension_numbers = #tpu.dot_dimension_numbers<[1], [0], [0], [1], [0, 0, 1, 1], [], []>} : vector<8x8xbf16>, vector<8x32xbf16>, vector<8x32xf32> -> vector<8x32xf32>
    %325 = arith.addf %289, %324 : vector<8x32xf32>
    %c7 = arith.constant 7 : index
    %c0_174 = arith.constant 0 : index
    %c0_175 = arith.constant 0 : index
    %326 = vector.load %arg5[%c7, %c0_174, %c0_175] : memref<8x32x8xbf16, #tpu.memory_space<vmem>>, vector<1x32x8xbf16>
    %327 = vector.shape_cast %326 : vector<1x32x8xbf16> to vector<32x8xbf16>
    %328 = arith.truncf %218 : vector<8x32xf32> to vector<8x32xbf16>
    %cst_176 = arith.constant dense<0.000000e+00> : vector<8x8xf32>
    %329 = tpu.matmul %328, %327, %cst_176 {dimension_numbers = #tpu.dot_dimension_numbers<[1], [0], [0], [1], [0, 0, 1, 1], [], []>} : vector<8x32xbf16>, vector<32x8xbf16>, vector<8x8xf32> -> vector<8x8xf32>
    %c7_177 = arith.constant 7 : index
    %c0_178 = arith.constant 0 : index
    %c0_179 = arith.constant 0 : index
    %330 = vector.load %arg6[%c7_177, %c0_178, %c0_179] : memref<8x32x8xbf16, #tpu.memory_space<vmem>>, vector<1x32x8xbf16>
    %331 = vector.shape_cast %330 : vector<1x32x8xbf16> to vector<32x8xbf16>
    %332 = arith.truncf %218 : vector<8x32xf32> to vector<8x32xbf16>
    %cst_180 = arith.constant dense<0.000000e+00> : vector<8x8xf32>
    %333 = tpu.matmul %332, %331, %cst_180 {dimension_numbers = #tpu.dot_dimension_numbers<[1], [0], [0], [1], [0, 0, 1, 1], [], []>} : vector<8x32xbf16>, vector<32x8xbf16>, vector<8x8xf32> -> vector<8x8xf32>
    %c7_181 = arith.constant 7 : index
    %c0_182 = arith.constant 0 : index
    %c0_183 = arith.constant 0 : index
    %334 = vector.load %arg7[%c7_181, %c0_182, %c0_183] : memref<8x32x8xbf16, #tpu.memory_space<vmem>>, vector<1x32x8xbf16>
    %335 = vector.shape_cast %334 : vector<1x32x8xbf16> to vector<32x8xbf16>
    %336 = arith.truncf %218 : vector<8x32xf32> to vector<8x32xbf16>
    %cst_184 = arith.constant dense<0.000000e+00> : vector<8x8xf32>
    %337 = tpu.matmul %336, %335, %cst_184 {dimension_numbers = #tpu.dot_dimension_numbers<[1], [0], [0], [1], [0, 0, 1, 1], [], []>} : vector<8x32xbf16>, vector<32x8xbf16>, vector<8x8xf32> -> vector<8x8xf32>
    %338 = arith.truncf %329 : vector<8x8xf32> to vector<8x8xbf16>
    %339 = arith.truncf %333 : vector<8x8xf32> to vector<8x8xbf16>
    %340 = tpu.transpose %339, [1, 0] : vector<8x8xbf16> -> vector<8x8xbf16>
    %cst_185 = arith.constant dense<0.000000e+00> : vector<8x8xf32>
    %341 = tpu.matmul %338, %340, %cst_185 {dimension_numbers = #tpu.dot_dimension_numbers<[1], [0], [0], [1], [0, 0, 1, 1], [], []>} : vector<8x8xbf16>, vector<8x8xbf16>, vector<8x8xf32> -> vector<8x8xf32>
    %cst_186 = arith.constant -1.000000e+30 : f32
    %342 = vector.broadcast %cst_186 : f32 to vector<8x8xf32>
    %343 = arith.select %14, %341, %342 : vector<8x8xi1>, vector<8x8xf32>
    %cst_187 = arith.constant dense<0xFF800000> : vector<8xf32>
    %344 = vector.multi_reduction <maximumf>, %343, %cst_187 [1] : vector<8x8xf32> to vector<8xf32>
    %345 = vector.shape_cast %344 : vector<8xf32> to vector<8x1xf32>
    %346 = vector.broadcast %345 : vector<8x1xf32> to vector<8x8xf32>
    %347 = arith.subf %343, %346 : vector<8x8xf32>
    %348 = math.exp %347 : vector<8x8xf32>
    %cst_188 = arith.constant dense<0.000000e+00> : vector<8xf32>
    %349 = vector.multi_reduction <add>, %348, %cst_188 [1] : vector<8x8xf32> to vector<8xf32>
    %350 = vector.shape_cast %349 : vector<8xf32> to vector<8x1xf32>
    %351 = tpu.reciprocal %350 {approx = true} : vector<8x1xf32> -> vector<8x1xf32>
    %352 = vector.broadcast %351 : vector<8x1xf32> to vector<8x8xf32>
    %353 = arith.mulf %348, %352 : vector<8x8xf32>
    %354 = arith.truncf %353 : vector<8x8xf32> to vector<8x8xbf16>
    %355 = arith.truncf %337 : vector<8x8xf32> to vector<8x8xbf16>
    %cst_189 = arith.constant dense<0.000000e+00> : vector<8x8xf32>
    %356 = tpu.matmul %354, %355, %cst_189 {dimension_numbers = #tpu.dot_dimension_numbers<[1], [0], [0], [1], [0, 0, 1, 1], [], []>} : vector<8x8xbf16>, vector<8x8xbf16>, vector<8x8xf32> -> vector<8x8xf32>
    %c7_190 = arith.constant 7 : index
    %c0_191 = arith.constant 0 : index
    %c0_192 = arith.constant 0 : index
    %357 = vector.load %arg8[%c7_190, %c0_191, %c0_192] : memref<8x8x32xbf16, #tpu.memory_space<vmem>>, vector<1x8x32xbf16>
    %358 = vector.shape_cast %357 : vector<1x8x32xbf16> to vector<8x32xbf16>
    %359 = arith.truncf %356 : vector<8x8xf32> to vector<8x8xbf16>
    %cst_193 = arith.constant dense<0.000000e+00> : vector<8x32xf32>
    %360 = tpu.matmul %359, %358, %cst_193 {dimension_numbers = #tpu.dot_dimension_numbers<[1], [0], [0], [1], [0, 0, 1, 1], [], []>} : vector<8x8xbf16>, vector<8x32xbf16>, vector<8x32xf32> -> vector<8x32xf32>
    %361 = arith.addf %325, %360 : vector<8x32xf32>
    %362 = arith.addf %204, %361 : vector<8x32xf32>
    %c1_194 = arith.constant 1 : index
    %c0_195 = arith.constant 0 : index
    %c0_196 = arith.constant 0 : index
    %363 = vector.load %arg9[%c1_194, %c0_195, %c0_196] : memref<2x1x32xf32, #tpu.memory_space<vmem>>, vector<1x1x32xf32>
    %364 = vector.shape_cast %363 : vector<1x1x32xf32> to vector<1x32xf32>
    %365 = arith.mulf %362, %362 : vector<8x32xf32>
    %cst_197 = arith.constant dense<0.000000e+00> : vector<8xf32>
    %366 = vector.multi_reduction <add>, %365, %cst_197 [1] : vector<8x32xf32> to vector<8xf32>
    %367 = vector.shape_cast %366 : vector<8xf32> to vector<8x1xf32>
    %cst_198 = arith.constant 3.200000e+01 : f32
    %368 = vector.broadcast %cst_198 : f32 to vector<8x1xf32>
    %369 = arith.divf %367, %368 : vector<8x1xf32>
    %cst_199 = arith.constant 9.99999974E-6 : f32
    %370 = vector.broadcast %cst_199 : f32 to vector<8x1xf32>
    %371 = arith.addf %369, %370 : vector<8x1xf32>
    %372 = math.rsqrt %371 : vector<8x1xf32>
    %373 = vector.broadcast %372 : vector<8x1xf32> to vector<8x32xf32>
    %374 = arith.mulf %362, %373 : vector<8x32xf32>
    %375 = vector.broadcast %364 : vector<1x32xf32> to vector<8x32xf32>
    %376 = arith.mulf %374, %375 : vector<8x32xf32>
    %c1_200 = arith.constant 1 : index
    %c0_201 = arith.constant 0 : index
    %c0_202 = arith.constant 0 : index
    %377 = vector.load %arg10[%c1_200, %c0_201, %c0_202] : memref<2x32x128xbf16, #tpu.memory_space<vmem>>, vector<1x32x128xbf16>
    %378 = vector.shape_cast %377 : vector<1x32x128xbf16> to vector<32x128xbf16>
    %379 = arith.truncf %376 : vector<8x32xf32> to vector<8x32xbf16>
    %cst_203 = arith.constant dense<0.000000e+00> : vector<8x128xf32>
    %380 = tpu.matmul %379, %378, %cst_203 {dimension_numbers = #tpu.dot_dimension_numbers<[1], [0], [0], [1], [0, 0, 1, 1], [], []>} : vector<8x32xbf16>, vector<32x128xbf16>, vector<8x128xf32> -> vector<8x128xf32>
    %381 = vector.extract_strided_slice %380 {offsets = [0, 0], sizes = [8, 64], strides = [1, 1]} : vector<8x128xf32> to vector<8x64xf32>
    %382 = vector.extract_strided_slice %380 {offsets = [0, 64], sizes = [8, 64], strides = [1, 1]} : vector<8x128xf32> to vector<8x64xf32>
    %383 = arith.negf %381 : vector<8x64xf32>
    %384 = math.exp %383 : vector<8x64xf32>
    %cst_204 = arith.constant 1.000000e+00 : f32
    %385 = vector.broadcast %cst_204 : f32 to vector<8x64xf32>
    %386 = arith.addf %385, %384 : vector<8x64xf32>
    %387 = arith.divf %385, %386 : vector<8x64xf32>
    %388 = arith.mulf %381, %387 : vector<8x64xf32>
    %389 = arith.mulf %388, %382 : vector<8x64xf32>
    %c1_205 = arith.constant 1 : index
    %c0_206 = arith.constant 0 : index
    %c0_207 = arith.constant 0 : index
    %390 = vector.load %arg11[%c1_205, %c0_206, %c0_207] : memref<2x64x32xbf16, #tpu.memory_space<vmem>>, vector<1x64x32xbf16>
    %391 = vector.shape_cast %390 : vector<1x64x32xbf16> to vector<64x32xbf16>
    %392 = arith.truncf %389 : vector<8x64xf32> to vector<8x64xbf16>
    %cst_208 = arith.constant dense<0.000000e+00> : vector<8x32xf32>
    %393 = tpu.matmul %392, %391, %cst_208 {dimension_numbers = #tpu.dot_dimension_numbers<[1], [0], [0], [1], [0, 0, 1, 1], [], []>} : vector<8x64xbf16>, vector<64x32xbf16>, vector<8x32xf32> -> vector<8x32xf32>
    %394 = arith.addf %362, %393 : vector<8x32xf32>
    %c0_209 = arith.constant 0 : index
    %c0_210 = arith.constant 0 : index
    %395 = vector.load %arg12[%c0_209, %c0_210] : memref<1x32xf32, #tpu.memory_space<vmem>>, vector<1x32xf32>
    %396 = arith.mulf %394, %394 : vector<8x32xf32>
    %cst_211 = arith.constant dense<0.000000e+00> : vector<8xf32>
    %397 = vector.multi_reduction <add>, %396, %cst_211 [1] : vector<8x32xf32> to vector<8xf32>
    %398 = vector.shape_cast %397 : vector<8xf32> to vector<8x1xf32>
    %cst_212 = arith.constant 3.200000e+01 : f32
    %399 = vector.broadcast %cst_212 : f32 to vector<8x1xf32>
    %400 = arith.divf %398, %399 : vector<8x1xf32>
    %cst_213 = arith.constant 9.99999974E-6 : f32
    %401 = vector.broadcast %cst_213 : f32 to vector<8x1xf32>
    %402 = arith.addf %400, %401 : vector<8x1xf32>
    %403 = math.rsqrt %402 : vector<8x1xf32>
    %404 = vector.broadcast %403 : vector<8x1xf32> to vector<8x32xf32>
    %405 = arith.mulf %394, %404 : vector<8x32xf32>
    %406 = vector.broadcast %395 : vector<1x32xf32> to vector<8x32xf32>
    %407 = arith.mulf %405, %406 : vector<8x32xf32>
    %c0_214 = arith.constant 0 : index
    %c0_215 = arith.constant 0 : index
    %408 = vector.load %arg13[%c0_214, %c0_215] : memref<32x1xbf16, #tpu.memory_space<vmem>>, vector<32x1xbf16>
    %409 = arith.truncf %407 : vector<8x32xf32> to vector<8x32xbf16>
    %cst_216 = arith.constant dense<0.000000e+00> : vector<8x1xf32>
    %410 = tpu.matmul %409, %408, %cst_216 {dimension_numbers = #tpu.dot_dimension_numbers<[1], [0], [0], [1], [0, 0, 1, 1], [], []>} : vector<8x32xbf16>, vector<32x1xbf16>, vector<8x1xf32> -> vector<8x1xf32>
    %411 = tpu.iota {dimensions = array<i32: 0>} : vector<8x1xi32>
    %c0_i32 = arith.constant 0 : i32
    %412 = vector.broadcast %c0_i32 : i32 to vector<8x1xi32>
    %413 = arith.cmpi eq, %1, %412 : vector<8x1xi32>
    %c8_i32 = arith.constant 8 : i32
    %414 = vector.broadcast %c8_i32 : i32 to vector<8x1xi32>
    %415 = arith.select %413, %411, %414 : vector<8x1xi1>, vector<8x1xi32>
    %cst_217 = arith.constant dense<2147483647> : vector<1xi32>
    %416 = vector.multi_reduction <minsi>, %415, %cst_217 [0] : vector<8x1xi32> to vector<1xi32>
    %417 = vector.shape_cast %416 : vector<1xi32> to vector<1x1xi32>
    %c1_i32 = arith.constant 1 : i32
    %418 = vector.broadcast %c1_i32 : i32 to vector<1x1xi32>
    %419 = arith.subi %417, %418 : vector<1x1xi32>
    %c0_i32_218 = arith.constant 0 : i32
    %420 = vector.broadcast %c0_i32_218 : i32 to vector<1x1xi32>
    %421 = arith.cmpi slt, %419, %420 : vector<1x1xi32>
    %c8_i32_219 = arith.constant 8 : i32
    %422 = vector.broadcast %c8_i32_219 : i32 to vector<1x1xi32>
    %423 = arith.addi %419, %422 : vector<1x1xi32>
    %424 = arith.select %421, %423, %419 : vector<1x1xi1>, vector<1x1xi32>
    %425 = vector.broadcast %424 : vector<1x1xi32> to vector<8x1xi32>
    %426 = arith.cmpi eq, %411, %425 : vector<8x1xi32>
    %cst_220 = arith.constant 0.000000e+00 : f32
    %427 = vector.broadcast %cst_220 : f32 to vector<8x1xf32>
    %428 = arith.select %426, %410, %427 : vector<8x1xi1>, vector<8x1xf32>
    %cst_221 = arith.constant dense<0.000000e+00> : vector<1xf32>
    %429 = vector.multi_reduction <add>, %428, %cst_221 [0] : vector<8x1xf32> to vector<1xf32>
    %430 = vector.shape_cast %429 : vector<1xf32> to vector<1x1xf32>
    %431 = vector.shape_cast %430 : vector<1x1xf32> to vector<1x1x1xf32>
    %c0_222 = arith.constant 0 : index
    %c0_223 = arith.constant 0 : index
    %c0_224 = arith.constant 0 : index
    %432 = vector.load %arg14[%c0_222, %c0_223, %c0_224] : memref<1x1x1xf32, #tpu.memory_space<vmem>>, vector<1x1x1xf32>
    tpu.vector_store %arg14[%c0_222, %c0_223, %c0_224], %431 {strides = array<i32>} : memref<1x1x1xf32, #tpu.memory_space<vmem>>, vector<1x1x1xf32>,
    return
  }
  func.func @transform_0(%arg0: i32) -> (i32, i32, i32) {
    %c0_i32 = arith.constant 0 : i32
    %c0_i32_0 = arith.constant 0 : i32
    %c0_i32_1 = arith.constant 0 : i32
    return %arg0, %c0_i32, %c0_i32_0 : i32, i32, i32
  }
  func.func @transform_1(%arg0: i32) -> (i32, i32) {
    %c0_i32 = arith.constant 0 : i32
    %c0_i32_0 = arith.constant 0 : i32
    %c0_i32_1 = arith.constant 0 : i32
    return %c0_i32, %c0_i32_0 : i32, i32
  }
  func.func @transform_2(%arg0: i32) -> (i32, i32) {
    %c0_i32 = arith.constant 0 : i32
    %c0_i32_0 = arith.constant 0 : i32
    %c0_i32_1 = arith.constant 0 : i32
    return %c0_i32, %c0_i32_0 : i32, i32
  }
  func.func @transform_3(%arg0: i32) -> (i32, i32, i32) {
    %c0_i32 = arith.constant 0 : i32
    %c0_i32_0 = arith.constant 0 : i32
    %c0_i32_1 = arith.constant 0 : i32
    %c0_i32_2 = arith.constant 0 : i32
    return %c0_i32, %c0_i32_0, %c0_i32_1 : i32, i32, i32
  }
  func.func @transform_4(%arg0: i32) -> (i32, i32, i32) {
    %c0_i32 = arith.constant 0 : i32
    %c0_i32_0 = arith.constant 0 : i32
    %c0_i32_1 = arith.constant 0 : i32
    %c0_i32_2 = arith.constant 0 : i32
    return %c0_i32, %c0_i32_0, %c0_i32_1 : i32, i32, i32
  }
  func.func @transform_5(%arg0: i32) -> (i32, i32, i32) {
    %c0_i32 = arith.constant 0 : i32
    %c0_i32_0 = arith.constant 0 : i32
    %c0_i32_1 = arith.constant 0 : i32
    %c0_i32_2 = arith.constant 0 : i32
    return %c0_i32, %c0_i32_0, %c0_i32_1 : i32, i32, i32
  }
  func.func @transform_6(%arg0: i32) -> (i32, i32, i32) {
    %c0_i32 = arith.constant 0 : i32
    %c0_i32_0 = arith.constant 0 : i32
    %c0_i32_1 = arith.constant 0 : i32
    %c0_i32_2 = arith.constant 0 : i32
    return %c0_i32, %c0_i32_0, %c0_i32_1 : i32, i32, i32
  }
  func.func @transform_7(%arg0: i32) -> (i32, i32, i32) {
    %c0_i32 = arith.constant 0 : i32
    %c0_i32_0 = arith.constant 0 : i32
    %c0_i32_1 = arith.constant 0 : i32
    %c0_i32_2 = arith.constant 0 : i32
    return %c0_i32, %c0_i32_0, %c0_i32_1 : i32, i32, i32
  }
  func.func @transform_8(%arg0: i32) -> (i32, i32, i32) {
    %c0_i32 = arith.constant 0 : i32
    %c0_i32_0 = arith.constant 0 : i32
    %c0_i32_1 = arith.constant 0 : i32
    %c0_i32_2 = arith.constant 0 : i32
    return %c0_i32, %c0_i32_0, %c0_i32_1 : i32, i32, i32
  }
  func.func @transform_9(%arg0: i32) -> (i32, i32, i32) {
    %c0_i32 = arith.constant 0 : i32
    %c0_i32_0 = arith.constant 0 : i32
    %c0_i32_1 = arith.constant 0 : i32
    %c0_i32_2 = arith.constant 0 : i32
    return %c0_i32, %c0_i32_0, %c0_i32_1 : i32, i32, i32
  }
  func.func @transform_10(%arg0: i32) -> (i32, i32, i32) {
    %c0_i32 = arith.constant 0 : i32
    %c0_i32_0 = arith.constant 0 : i32
    %c0_i32_1 = arith.constant 0 : i32
    %c0_i32_2 = arith.constant 0 : i32
    return %c0_i32, %c0_i32_0, %c0_i32_1 : i32, i32, i32
  }
  func.func @transform_11(%arg0: i32) -> (i32, i32) {
    %c0_i32 = arith.constant 0 : i32
    %c0_i32_0 = arith.constant 0 : i32
    %c0_i32_1 = arith.constant 0 : i32
    return %c0_i32, %c0_i32_0 : i32, i32
  }
  func.func @transform_12(%arg0: i32) -> (i32, i32) {
    %c0_i32 = arith.constant 0 : i32
    %c0_i32_0 = arith.constant 0 : i32
    %c0_i32_1 = arith.constant 0 : i32
    return %c0_i32, %c0_i32_0 : i32, i32
  }
  func.func @transform_13(%arg0: i32) -> (i32, i32, i32) {
    %c0_i32 = arith.constant 0 : i32
    %c0_i32_0 = arith.constant 0 : i32
    %c0_i32_1 = arith.constant 0 : i32
    return %arg0, %c0_i32, %c0_i32_0 : i32, i32, i32
  }
}

</mosaic_0001>

<llo_original>
// kernel: gpt_reward_forward.1
$region0: #{gpt_reward_forward.1}
  #allocation0 [shape = 'u32[]', space=smem, size = 0x4, offset = 0x4, fixed_abs, tag = 'smem constant byte address 0x4 - core index']
  #allocation1 [shape = 'u32[72,128]{1,0:T(1,128)}', space=vmem, size = 0x9000, scoped, tag = 'internal scratch']
  %s0 = inlined_call_operand.vmem [shape: s32[2,8,1], index: 0, kind: input, shape index: {}]
  %s1 = inlined_call_operand.vmem [shape: bf16[64,32], index: 1, kind: input, shape index: {}]
  %s2 = inlined_call_operand.vmem [shape: f32[8,32], index: 2, kind: input, shape index: {}]
  %s3 = inlined_call_operand.vmem [shape: f32[2,1,32], index: 3, kind: input, shape index: {}]
  %s4 = inlined_call_operand.vmem [shape: bf16[8,32,8], index: 4, kind: input, shape index: {}]
  %s5 = inlined_call_operand.vmem [shape: bf16[8,32,8], index: 5, kind: input, shape index: {}]
  %s6 = inlined_call_operand.vmem [shape: bf16[8,32,8], index: 6, kind: input, shape index: {}]
  %s7 = inlined_call_operand.vmem [shape: bf16[8,8,32], index: 7, kind: input, shape index: {}]
  %s8 = inlined_call_operand.vmem [shape: f32[2,1,32], index: 8, kind: input, shape index: {}]
  %s9 = inlined_call_operand.vmem [shape: bf16[2,32,128], index: 9, kind: input, shape index: {}]
  %s10 = inlined_call_operand.vmem [shape: bf16[2,64,32], index: 10, kind: input, shape index: {}]
  %s11 = inlined_call_operand.vmem [shape: f32[1,32], index: 11, kind: input, shape index: {}]
  %s12 = inlined_call_operand.vmem [shape: bf16[32,1], index: 12, kind: input, shape index: {}]
  %s13 = inlined_call_operand.vmem [shape: f32[2,1,1], index: 13, kind: output, shape index: {}]
  %s14 = sld [smem:[#allocation0]]
  $region85: #{gpt_reward_forward.1} parent=0
    _
  %s16 = ssub.s32 1, %s14
  %s17 = scalar_select 0, %s16, %s14
  loop: start=0, step=1, limit=4
  $region2: #{gpt_reward_forward.1} parent=0 // loop_pre_header
    _
  $region3: #{gpt_reward_forward.1} parent=0 // loop_header
    %s19 = sphi 0, %s23
    %p20 = scmp.ge.s32.totalorder %s19, 4
    %s29 = sphi 0, %s31
    %s32 = sphi 0, %s29
    %s33 = sphi 0, %s32
    %s49 = sphi 0, %s33
    %s53 = sphi 0, %s53
    %s55 = sphi 0, %s53
    %s56 = sphi 0, %s55
    %s70 = sphi 0, %s56
    %s74 = sphi 0, %s74
    %s76 = sphi 0, %s74
    %s77 = sphi 0, %s76
    %s91 = sphi 0, %s77
    %s95 = sphi 0, %s95
    %s97 = sphi 0, %s95
    %s98 = sphi 0, %s97
    %s112 = sphi 0, %s98
    %s116 = sphi 0, %s116
    %s118 = sphi 0, %s116
    %s119 = sphi 0, %s118
    %s133 = sphi 0, %s119
    %s137 = sphi 0, %s137
    %s139 = sphi 0, %s137
    %s140 = sphi 0, %s139
    %s154 = sphi 0, %s140
    %s158 = sphi 0, %s158
    %s160 = sphi 0, %s158
    %s161 = sphi 0, %s160
    %s175 = sphi 0, %s161
    %s179 = sphi 0, %s179
    %s181 = sphi 0, %s179
    %s182 = sphi 0, %s181
    %s196 = sphi 0, %s182
    %s200 = sphi 0, %s200
    %s202 = sphi 0, %s200
    %s203 = sphi 0, %s202
    %s217 = sphi 0, %s203
    %s221 = sphi 0, %s221
    %s223 = sphi 0, %s221
    %s224 = sphi 0, %s223
    %s238 = sphi 0, %s224
    %s242 = sphi 0, %s242
    %s244 = sphi 0, %s242
    %s245 = sphi 0, %s244
    %s259 = sphi 0, %s245
    %s263 = sphi 0, %s263
    %s265 = sphi 0, %s263
    %s266 = sphi 0, %s265
    %s280 = sphi 0, %s266
    %s284 = sphi 0, %s284
    %s286 = sphi 0, %s284
    %s287 = sphi 0, %s286
    %s301 = sphi 0, %s287
    %s307 = sphi 0, %s309
    %s310 = sphi 0, %s307
    %s311 = sphi 0, %s310
    %s327 = sphi 0, %s311
  $region4: #{gpt_reward_forward.1} parent=0 // loop_header_branch
    %22 = sbr.rel (%p20) target = $region8
  $region5: #{gpt_reward_forward.1} parent=0 // loop_body
    %s24 = ssub.s32 %s19, 1
    %s25 = ssub.s32 %s19, 2
    %s26 = sadd.s32 %s19, 1
    %s27 = ssub.s32 %s19, %s26
    %p28 = scmp.eq.s32.totalorder %s27, 0
    %s30 = sadd.s32 %s29, 1
    %s31 = scalar_select %p28, %s29, %s30
    %p34 = pneg %p28
    %p35 = scmp.eq.s32.totalorder %s19, 1
    %p36 = por %p34, %p35
    %p37 = scmp.ne.s32.totalorder %s29, %s32
    %p38 = scmp.eq.s32.totalorder %s19, 0
    %p39 = por %p37, %p38
    %p40 = scmp.ne.s32.totalorder %s29, %s32
    %p41 = scmp.eq.s32.totalorder %s24, 1
    %p42 = por %p40, %p41
    %p43 = scmp.ne.s32.totalorder %s32, %s33
    %p44 = scmp.eq.s32.totalorder %s24, 0
    %p45 = por %p43, %p44
    %p46 = scmp.ne.s32.totalorder %s32, %s33
    %p47 = scmp.eq.s32.totalorder %s25, 1
    %p48 = por %p46, %p47
    %p50 = scmp.ne.s32.totalorder %s33, %s49
    %p51 = scmp.eq.s32.totalorder %s25, 0
    %p52 = por %p50, %p51
    %s54 = sadd.s32 %s53, 1
    %p57 = scmp.eq.s32.totalorder %s19, 1
    %p58 = scmp.ne.s32.totalorder %s53, %s55
    %p59 = scmp.eq.s32.totalorder %s19, 0
    %p60 = por %p58, %p59
    %p61 = scmp.ne.s32.totalorder %s53, %s55
    %p62 = scmp.eq.s32.totalorder %s24, 1
    %p63 = por %p61, %p62
    %p64 = scmp.ne.s32.totalorder %s55, %s56
    %p65 = scmp.eq.s32.totalorder %s24, 0
    %p66 = por %p64, %p65
    %p67 = scmp.ne.s32.totalorder %s55, %s56
    %p68 = scmp.eq.s32.totalorder %s25, 1
    %p69 = por %p67, %p68
    %p71 = scmp.ne.s32.totalorder %s56, %s70
    %p72 = scmp.eq.s32.totalorder %s25, 0
    %p73 = por %p71, %p72
    %s75 = sadd.s32 %s74, 1
    %p78 = scmp.eq.s32.totalorder %s19, 1
    %p79 = scmp.ne.s32.totalorder %s74, %s76
    %p80 = scmp.eq.s32.totalorder %s19, 0
    %p81 = por %p79, %p80
    %p82 = scmp.ne.s32.totalorder %s74, %s76
    %p83 = scmp.eq.s32.totalorder %s24, 1
    %p84 = por %p82, %p83
    %p85 = scmp.ne.s32.totalorder %s76, %s77
    %p86 = scmp.eq.s32.totalorder %s24, 0
    %p87 = por %p85, %p86
    %p88 = scmp.ne.s32.totalorder %s76, %s77
    %p89 = scmp.eq.s32.totalorder %s25, 1
    %p90 = por %p88, %p89
    %p92 = scmp.ne.s32.totalorder %s77, %s91
    %p93 = scmp.eq.s32.totalorder %s25, 0
    %p94 = por %p92, %p93
    %s96 = sadd.s32 %s95, 1
    %p99 = scmp.eq.s32.totalorder %s19, 1
    %p100 = scmp.ne.s32.totalorder %s95, %s97
    %p101 = scmp.eq.s32.totalorder %s19, 0
    %p102 = por %p100, %p101
    %p103 = scmp.ne.s32.totalorder %s95, %s97
    %p104 = scmp.eq.s32.totalorder %s24, 1
    %p105 = por %p103, %p104
    %p106 = scmp.ne.s32.totalorder %s97, %s98
    %p107 = scmp.eq.s32.totalorder %s24, 0
    %p108 = por %p106, %p107
    %p109 = scmp.ne.s32.totalorder %s97, %s98
    %p110 = scmp.eq.s32.totalorder %s25, 1
    %p111 = por %p109, %p110
    %p113 = scmp.ne.s32.totalorder %s98, %s112
    %p114 = scmp.eq.s32.totalorder %s25, 0
    %p115 = por %p113, %p114
    %s117 = sadd.s32 %s116, 1
    %p120 = scmp.eq.s32.totalorder %s19, 1
    %p121 = scmp.ne.s32.totalorder %s116, %s118
    %p122 = scmp.eq.s32.totalorder %s19, 0
    %p123 = por %p121, %p122
    %p124 = scmp.ne.s32.totalorder %s116, %s118
    %p125 = scmp.eq.s32.totalorder %s24, 1
    %p126 = por %p124, %p125
    %p127 = scmp.ne.s32.totalorder %s118, %s119
    %p128 = scmp.eq.s32.totalorder %s24, 0
    %p129 = por %p127, %p128
    %p130 = scmp.ne.s32.totalorder %s118, %s119
    %p131 = scmp.eq.s32.totalorder %s25, 1
    %p132 = por %p130, %p131
    %p134 = scmp.ne.s32.totalorder %s119, %s133
    %p135 = scmp.eq.s32.totalorder %s25, 0
    %p136 = por %p134, %p135
    %s138 = sadd.s32 %s137, 1
    %p141 = scmp.eq.s32.totalorder %s19, 1
    %p142 = scmp.ne.s32.totalorder %s137, %s139
    %p143 = scmp.eq.s32.totalorder %s19, 0
    %p144 = por %p142, %p143
    %p145 = scmp.ne.s32.totalorder %s137, %s139
    %p146 = scmp.eq.s32.totalorder %s24, 1
    %p147 = por %p145, %p146
    %p148 = scmp.ne.s32.totalorder %s139, %s140
    %p149 = scmp.eq.s32.totalorder %s24, 0
    %p150 = por %p148, %p149
    %p151 = scmp.ne.s32.totalorder %s139, %s140
    %p152 = scmp.eq.s32.totalorder %s25, 1
    %p153 = por %p151, %p152
    %p155 = scmp.ne.s32.totalorder %s140, %s154
    %p156 = scmp.eq.s32.totalorder %s25, 0
    %p157 = por %p155, %p156
    %s159 = sadd.s32 %s158, 1
    %p162 = scmp.eq.s32.totalorder %s19, 1
    %p163 = scmp.ne.s32.totalorder %s158, %s160
    %p164 = scmp.eq.s32.totalorder %s19, 0
    %p165 = por %p163, %p164
    %p166 = scmp.ne.s32.totalorder %s158, %s160
    %p167 = scmp.eq.s32.totalorder %s24, 1
    %p168 = por %p166, %p167
    %p169 = scmp.ne.s32.totalorder %s160, %s161
    %p170 = scmp.eq.s32.totalorder %s24, 0
    %p171 = por %p169, %p170
    %p172 = scmp.ne.s32.totalorder %s160, %s161
    %p173 = scmp.eq.s32.totalorder %s25, 1
    %p174 = por %p172, %p173
    %p176 = scmp.ne.s32.totalorder %s161, %s175
    %p177 = scmp.eq.s32.totalorder %s25, 0
    %p178 = por %p176, %p177
    %s180 = sadd.s32 %s179, 1
    %p183 = scmp.eq.s32.totalorder %s19, 1
    %p184 = scmp.ne.s32.totalorder %s179, %s181
    %p185 = scmp.eq.s32.totalorder %s19, 0
    %p186 = por %p184, %p185
    %p187 = scmp.ne.s32.totalorder %s179, %s181
    %p188 = scmp.eq.s32.totalorder %s24, 1
    %p189 = por %p187, %p188
    %p190 = scmp.ne.s32.totalorder %s181, %s182
    %p191 = scmp.eq.s32.totalorder %s24, 0
    %p192 = por %p190, %p191
    %p193 = scmp.ne.s32.totalorder %s181, %s182
    %p194 = scmp.eq.s32.totalorder %s25, 1
    %p195 = por %p193, %p194
    %p197 = scmp.ne.s32.totalorder %s182, %s196
    %p198 = scmp.eq.s32.totalorder %s25, 0
    %p199 = por %p197, %p198
    %s201 = sadd.s32 %s200, 1
    %p204 = scmp.eq.s32.totalorder %s19, 1
    %p205 = scmp.ne.s32.totalorder %s200, %s202
    %p206 = scmp.eq.s32.totalorder %s19, 0
    %p207 = por %p205, %p206
    %p208 = scmp.ne.s32.totalorder %s200, %s202
    %p209 = scmp.eq.s32.totalorder %s24, 1
    %p210 = por %p208, %p209
    %p211 = scmp.ne.s32.totalorder %s202, %s203
    %p212 = scmp.eq.s32.totalorder %s24, 0
    %p213 = por %p211, %p212
    %p214 = scmp.ne.s32.totalorder %s202, %s203
    %p215 = scmp.eq.s32.totalorder %s25, 1
    %p216 = por %p214, %p215
    %p218 = scmp.ne.s32.totalorder %s203, %s217
    %p219 = scmp.eq.s32.totalorder %s25, 0
    %p220 = por %p218, %p219
    %s222 = sadd.s32 %s221, 1
    %p225 = scmp.eq.s32.totalorder %s19, 1
    %p226 = scmp.ne.s32.totalorder %s221, %s223
    %p227 = scmp.eq.s32.totalorder %s19, 0
    %p228 = por %p226, %p227
    %p229 = scmp.ne.s32.totalorder %s221, %s223
    %p230 = scmp.eq.s32.totalorder %s24, 1
    %p231 = por %p229, %p230
    %p232 = scmp.ne.s32.totalorder %s223, %s224
    %p233 = scmp.eq.s32.totalorder %s24, 0
    %p234 = por %p232, %p233
    %p235 = scmp.ne.s32.totalorder %s223, %s224
    %p236 = scmp.eq.s32.totalorder %s25, 1
    %p237 = por %p235, %p236
    %p239 = scmp.ne.s32.totalorder %s224, %s238
    %p240 = scmp.eq.s32.totalorder %s25, 0
    %p241 = por %p239, %p240
    %s243 = sadd.s32 %s242, 1
    %p246 = scmp.eq.s32.totalorder %s19, 1
    %p247 = scmp.ne.s32.totalorder %s242, %s244
    %p248 = scmp.eq.s32.totalorder %s19, 0
    %p249 = por %p247, %p248
    %p250 = scmp.ne.s32.totalorder %s242, %s244
    %p251 = scmp.eq.s32.totalorder %s24, 1
    %p252 = por %p250, %p251
    %p253 = scmp.ne.s32.totalorder %s244, %s245
    %p254 = scmp.eq.s32.totalorder %s24, 0
    %p255 = por %p253, %p254
    %p256 = scmp.ne.s32.totalorder %s244, %s245
    %p257 = scmp.eq.s32.totalorder %s25, 1
    %p258 = por %p256, %p257
    %p260 = scmp.ne.s32.totalorder %s245, %s259
    %p261 = scmp.eq.s32.totalorder %s25, 0
    %p262 = por %p260, %p261
    %s264 = sadd.s32 %s263, 1
    %p267 = scmp.eq.s32.totalorder %s19, 1
    %p268 = scmp.ne.s32.totalorder %s263, %s265
    %p269 = scmp.eq.s32.totalorder %s19, 0
    %p270 = por %p268, %p269
    %p271 = scmp.ne.s32.totalorder %s263, %s265
    %p272 = scmp.eq.s32.totalorder %s24, 1
    %p273 = por %p271, %p272
    %p274 = scmp.ne.s32.totalorder %s265, %s266
    %p275 = scmp.eq.s32.totalorder %s24, 0
    %p276 = por %p274, %p275
    %p277 = scmp.ne.s32.totalorder %s265, %s266
    %p278 = scmp.eq.s32.totalorder %s25, 1
    %p279 = por %p277, %p278
    %p281 = scmp.ne.s32.totalorder %s266, %s280
    %p282 = scmp.eq.s32.totalorder %s25, 0
    %p283 = por %p281, %p282
    %s285 = sadd.s32 %s284, 1
    %p288 = scmp.eq.s32.totalorder %s19, 1
    %p289 = scmp.ne.s32.totalorder %s284, %s286
    %p290 = scmp.eq.s32.totalorder %s19, 0
    %p291 = por %p289, %p290
    %p292 = scmp.ne.s32.totalorder %s284, %s286
    %p293 = scmp.eq.s32.totalorder %s24, 1
    %p294 = por %p292, %p293
    %p295 = scmp.ne.s32.totalorder %s286, %s287
    %p296 = scmp.eq.s32.totalorder %s24, 0
    %p297 = por %p295, %p296
    %p298 = scmp.ne.s32.totalorder %s286, %s287
    %p299 = scmp.eq.s32.totalorder %s25, 1
    %p300 = por %p298, %p299
    %p302 = scmp.ne.s32.totalorder %s287, %s301
    %p303 = scmp.eq.s32.totalorder %s25, 0
    %p304 = por %p302, %p303
    %s305 = ssub.s32 %s19, %s26
    %p306 = scmp.eq.s32.totalorder %s305, 0
    %s308 = sadd.s32 %s307, 1
    %s309 = scalar_select %p306, %s307, %s308
    %p312 = pneg %p306
    %p313 = scmp.eq.s32.totalorder %s19, 1
    %p314 = por %p312, %p313
    %p315 = scmp.ne.s32.totalorder %s307, %s310
    %p316 = scmp.eq.s32.totalorder %s19, 0
    %p317 = por %p315, %p316
    %p318 = scmp.ne.s32.totalorder %s307, %s310
    %p319 = scmp.eq.s32.totalorder %s24, 1
    %p320 = por %p318, %p319
    %p321 = scmp.ne.s32.totalorder %s310, %s311
    %p322 = scmp.eq.s32.totalorder %s24, 0
    %p323 = por %p321, %p322
    %p324 = scmp.ne.s32.totalorder %s310, %s311
    %p325 = scmp.eq.s32.totalorder %s25, 1
    %p326 = por %p324, %p325
    %p328 = scmp.ne.s32.totalorder %s311, %s327
    %p329 = scmp.eq.s32.totalorder %s25, 0
    %p330 = por %p328, %p329
    %p331 = scmp.le.s32.totalorder 1, %s19
    %p332 = scmp.lt.s32.totalorder %s19, 3
    %p333 = pnand %p331, %p332
    %p334 = pneg %p333
    // Predicated region
    $region9: #{gpt_reward_forward.1} parent=5 // pred_check
      _
    $region10: #{gpt_reward_forward.1} parent=5 // pred_check_branch
      %336 = sbr.rel (%p333) target = $region12
    $region11: #{gpt_reward_forward.1} parent=5 // pred_region
      %s337 = ssub.s32 %s19, 1
      // Predicated region
      $region13: #{gpt_reward_forward.1} parent=11 // pred_check
        %p338 = pneg %p66
      $region14: #{gpt_reward_forward.1} parent=11 // pred_check_branch
        %340 = sbr.rel (%p338) target = $region16
      $region15: #{gpt_reward_forward.1} parent=11 // pred_region
        _
      $region16: #{gpt_reward_forward.1} parent=11 // pred_fallthru
        _
      // Predicated region
      $region17: #{gpt_reward_forward.1} parent=11 // pred_check
        %p341 = pneg %p87
      $region18: #{gpt_reward_forward.1} parent=11 // pred_check_branch
        %343 = sbr.rel (%p341) target = $region20
      $region19: #{gpt_reward_forward.1} parent=11 // pred_region
        _
      $region20: #{gpt_reward_forward.1} parent=11 // pred_fallthru
        _
      // Predicated region
      $region21: #{gpt_reward_forward.1} parent=11 // pred_check
        %p344 = pneg %p108
      $region22: #{gpt_reward_forward.1} parent=11 // pred_check_branch
        %346 = sbr.rel (%p344) target = $region24
      $region23: #{gpt_reward_forward.1} parent=11 // pred_region
        _
      $region24: #{gpt_reward_forward.1} parent=11 // pred_fallthru
        _
      // Predicated region
      $region25: #{gpt_reward_forward.1} parent=11 // pred_check
        %p347 = pneg %p129
      $region26: #{gpt_reward_forward.1} parent=11 // pred_check_branch
        %349 = sbr.rel (%p347) target = $region28
      $region27: #{gpt_reward_forward.1} parent=11 // pred_region
        _
      $region28: #{gpt_reward_forward.1} parent=11 // pred_fallthru
        _
      // Predicated region
      $region29: #{gpt_reward_forward.1} parent=11 // pred_check
        %p350 = pneg %p150
      $region30: #{gpt_reward_forward.1} parent=11 // pred_check_branch
        %352 = sbr.rel (%p350) target = $region32
      $region31: #{gpt_reward_forward.1} parent=11 // pred_region
        _
      $region32: #{gpt_reward_forward.1} parent=11 // pred_fallthru
        _
      // Predicated region
      $region33: #{gpt_reward_forward.1} parent=11 // pred_check
        %p353 = pneg %p171
      $region34: #{gpt_reward_forward.1} parent=11 // pred_check_branch
        %355 = sbr.rel (%p353) target = $region36
      $region35: #{gpt_reward_forward.1} parent=11 // pred_region
        _
      $region36: #{gpt_reward_forward.1} parent=11 // pred_fallthru
        _
      // Predicated region
      $region37: #{gpt_reward_forward.1} parent=11 // pred_check
        %p356 = pneg %p192
      $region38: #{gpt_reward_forward.1} parent=11 // pred_check_branch
        %358 = sbr.rel (%p356) target = $region40
      $region39: #{gpt_reward_forward.1} parent=11 // pred_region
        _
      $region40: #{gpt_reward_forward.1} parent=11 // pred_fallthru
        _
      // Predicated region
      $region41: #{gpt_reward_forward.1} parent=11 // pred_check
        %p359 = pneg %p213
      $region42: #{gpt_reward_forward.1} parent=11 // pred_check_branch
        %361 = sbr.rel (%p359) target = $region44
      $region43: #{gpt_reward_forward.1} parent=11 // pred_region
        _
      $region44: #{gpt_reward_forward.1} parent=11 // pred_fallthru
        _
      // Predicated region
      $region45: #{gpt_reward_forward.1} parent=11 // pred_check
        %p362 = pneg %p234
      $region46: #{gpt_reward_forward.1} parent=11 // pred_check_branch
        %364 = sbr.rel (%p362) target = $region48
      $region47: #{gpt_reward_forward.1} parent=11 // pred_region
        _
      $region48: #{gpt_reward_forward.1} parent=11 // pred_fallthru
        _
      // Predicated region
      $region49: #{gpt_reward_forward.1} parent=11 // pred_check
        %p365 = pneg %p255
      $region50: #{gpt_reward_forward.1} parent=11 // pred_check_branch
        %367 = sbr.rel (%p365) target = $region52
      $region51: #{gpt_reward_forward.1} parent=11 // pred_region
        _
      $region52: #{gpt_reward_forward.1} parent=11 // pred_fallthru
        _
      // Predicated region
      $region53: #{gpt_reward_forward.1} parent=11 // pred_check
        %p368 = pneg %p276
      $region54: #{gpt_reward_forward.1} parent=11 // pred_check_branch
        %370 = sbr.rel (%p368) target = $region56
      $region55: #{gpt_reward_forward.1} parent=11 // pred_region
        _
      $region56: #{gpt_reward_forward.1} parent=11 // pred_fallthru
        _
      // Predicated region
      $region57: #{gpt_reward_forward.1} parent=11 // pred_check
        %p371 = pneg %p297
      $region58: #{gpt_reward_forward.1} parent=11 // pred_check_branch
        %373 = sbr.rel (%p371) target = $region60
      $region59: #{gpt_reward_forward.1} parent=11 // pred_region
        _
      $region60: #{gpt_reward_forward.1} parent=11 // pred_fallthru
        _
    $region12: #{gpt_reward_forward.1} parent=5 // pred_fallthru
      _
    %p374 = scmp.lt.s32.totalorder %s19, 2
    // Predicated region
    $region61: #{gpt_reward_forward.1} parent=5 // pred_check
      %p375 = pneg %p374
    $region62: #{gpt_reward_forward.1} parent=5 // pred_check_branch
      %377 = sbr.rel (%p375) target = $region64
    $region63: #{gpt_reward_forward.1} parent=5 // pred_region
      // Predicated region
      $region65: #{gpt_reward_forward.1} parent=63 // pred_check
        %p378 = pneg %p39
      $region66: #{gpt_reward_forward.1} parent=63 // pred_check_branch
        %380 = sbr.rel (%p378) target = $region68
      $region67: #{gpt_reward_forward.1} parent=63 // pred_region
        %p381 = scmp.lt.s32.totalorder %s19, 1
        %s382 = scalar_select %p381, %s19, 1
        %s383 = smul.addr %s382, 8
        %s384 = scalar_lea.vmem %s0, %s383
      $region68: #{gpt_reward_forward.1} parent=63 // pred_fallthru
        _
    $region64: #{gpt_reward_forward.1} parent=5 // pred_fallthru
      _
    %p385 = scmp.le.s32.totalorder 1, %s19
    %p386 = scmp.lt.s32.totalorder %s19, 3
    %p387 = pnand %p385, %p386
    %p388 = pneg %p387
    // Predicated region
    $region69: #{gpt_reward_forward.1} parent=5 // pred_check
      _
    $region70: #{gpt_reward_forward.1} parent=5 // pred_check_branch
      %390 = sbr.rel (%p387) target = $region72
    $region71: #{gpt_reward_forward.1} parent=5 // pred_region
      %s391 = ssub.s32 %s19, 1
      %p392 = scmp.lt.s32.totalorder %s24, 1
      %s393 = scalar_select %p392, %s24, 1
      %s394 = smul.addr %s393, 8
      %s395 = scalar_lea.vmem %s0, %s394
      %p396 = pneg %p45
      %p397 = pneg %p42
      %p398 = pneg %p66
      %p399 = pneg %p63
      %p400 = pneg %p87
      %p401 = pneg %p84
      %p402 = pneg %p108
      %p403 = pneg %p105
      %p404 = pneg %p129
      %p405 = pneg %p126
      %p406 = pneg %p150
      %p407 = pneg %p147
      %p408 = pneg %p171
      %p409 = pneg %p168
      %p410 = pneg %p192
      %p411 = pneg %p189
      %p412 = pneg %p213
      %p413 = pneg %p210
      %p414 = pneg %p234
      %p415 = pneg %p231
      %p416 = pneg %p255
      %p417 = pneg %p252
      %p418 = pneg %p276
      %p419 = pneg %p273
      %p420 = pneg %p297
      %p421 = pneg %p294
      %p422 = pneg %p323
      %p423 = pneg %p320
      %p424 = scmp.lt.s32.totalorder %s24, 1
      %s425 = scalar_select %p424, %s24, 1
      %s426 = scalar_lea.vmem %s13, %s425
      %p427 = scmp.lt.s32.totalorder %s24, 1
      %s428 = scalar_select %p427, %s24, 1
      %s429 = smul.addr %s428, 8
      %s430 = scalar_lea.vmem %s0, %s429
      %p431 = scmp.lt.s32.totalorder %s24, 1
      %s432 = scalar_select %p431, %s24, 1
      %s433 = scalar_lea.vmem %s13, %s432
      %v435 = vld [vmem:[%s430] sm:$0xff]
      %v436 = vlaneseq
      %v437 = vand.u32 %v436, 127
      %438 = vset.pattern.permute.xlu0 0
      %439 = vperm.xlu0 %438, %v435
      %v440 = vpop.permute.xlu0 %439
      %vm441 = vcmp.eq.s32.totalorder %v437, %v440
      %v442 = vsel %vm441, 1, 0
      %v443 = vcvt.s32.f32 %v442
      %v444 = vpack.c.bf16 %v443, %v443
      %v445 = vld [vmem:[%s1] sm:$0xf]
      %v446 = vld [vmem:[%s1 + $0x4] sm:$0xf]
      %v447 = vld [vmem:[%s1 + $0x8] sm:$0xf]
      %v448 = vld [vmem:[%s1 + $0xc] sm:$0xf]
      %v449 = vld [vmem:[%s1 + $0x10] sm:$0xf]
      %v450 = vld [vmem:[%s1 + $0x14] sm:$0xf]
      %v451 = vld [vmem:[%s1 + $0x18] sm:$0xf]
      %v452 = vld [vmem:[%s1 + $0x1c] sm:$0xf]
      %v453 = vld [vmem:[%s2] sm:$0xff]
      %v462 = vunpack.c.l.b16 %v445
      %v463 = vunpack.c.l.b16 %v446
      %v464 = vunpack.c.l.b16 %v447
      %v465 = vunpack.c.l.b16 %v448
      %v466 = vunpack.c.l.b16 %v449
      %v467 = vunpack.c.l.b16 %v450
      %v468 = vunpack.c.l.b16 %v451
      %v469 = vunpack.c.l.b16 %v452
      %v470 = vpack.c.b16 %v463, %v462
      %v471 = vpack.c.b16 %v465, %v464
      %v472 = vpack.c.b16 %v467, %v466
      %v473 = vpack.c.b16 %v469, %v468
      %vm478 = vcmask 523264
      %v480 = vsel %vm478, %v444, 0
      %482 = vmatpush.bf16.msra.mxu0 0
      %483 = vmatpush.bf16.msra.mxu0 0
      %484 = vmatpush.bf16.msra.mxu0 0
      %485 = vmatpush.bf16.msra.mxu0 0
      %486 = vmatpush.bf16.msra.mxu0 %v473
      %487 = vmatpush.bf16.msra.mxu0 %v472
      %488 = vmatpush.bf16.msra.mxu0 %v471
      %489 = vmatpush.bf16.msra.mxu0 %v470
      %490 = vmatmul.bf16.gmra.mxu0 %v480
      %v491 = vpop.f32.mrf.mxu0
      %v492 = vadd.f32 %v453, %v491
      %v493 = vpop.f32.mrf.mxu0
      %494 = vdwg.mxu0
      %v495 = vlaneseq
      %v496 = vshrl.u32 %v495, 7
      %vm497 = vcmp.le.s32.totalorder %v437, %v496
      %v498 = vld [vmem:[%s3] sm:$0x1]
      %v499 = vmul.f32 %v492, %v492
      %vm500 = vcmask 261120
      %v501 = vsel %vm500, %v499, 0.0
      %502 = vadd.xlane.f32.xlu0 %v501
      %v503 = vpop.xlane.xlu0 %502
      %v504 = vrcp.pop 32.0
      %v505 = vmul.f32 32.0, %v504
      %v506 = vsub.f32 1.0, %v505
      %v507 = vmul.f32 %v504, %v506
      %v508 = vadd.f32 %v504, %v507
      %vm509 = vweird.f32 %v504
      %v510 = vsel %vm509, %v504, %v508
      %v511 = vmul.f32 %v503, %v510
      %v512 = vadd.f32 %v511, 1e-05
      %v513 = vrsqrt.pop %v512
      %v514 = vmul.f32 %v513, %v512
      %v515 = vmul.f32 %v514, %v513
      %v516 = vmul.f32 0.5, %v515
      %v517 = vsub.f32 1.5, %v516
      %v518 = vmul.f32 %v513, %v517
      %vm519 = vweird.f32 %v512
      %vm520 = vweird.f32 %v513
      %vm521 = vmor %vm519, %vm520
      %v522 = vsel %vm521, %v513, %v518
      %v523 = vmul.f32 %v492, %v522
      %v525 = vperm.slane %v498, 0
      %v527 = vmul.f32 %v523, %v525
      %v528 = vld [vmem:[%s4] sm:$0xf]
      %v529 = vld [vmem:[%s4 + $0x4] sm:$0xf]
      %v530 = vld [vmem:[%s4 + $0x8] sm:$0xf]
      %v531 = vld [vmem:[%s4 + $0xc] sm:$0xf]
      %v532 = vpack.c.bf16 %v527, %v527
      %v537 = vunpack.c.l.b16 %v528
      %v538 = vunpack.c.l.b16 %v529
      %v539 = vunpack.c.l.b16 %v530
      %v540 = vunpack.c.l.b16 %v531
      %v541 = vpack.c.b16 %v538, %v537
      %v542 = vpack.c.b16 %v540, %v539
      %v546 = vsel %vm500, %v532, 0
      %548 = vmatpush.bf16.msra.mxu0 0
      %549 = vmatpush.bf16.msra.mxu0 0
      %550 = vmatpush.bf16.msra.mxu0 0
      %551 = vmatpush.bf16.msra.mxu0 0
      %552 = vmatpush.bf16.msra.mxu0 0
      %553 = vmatpush.bf16.msra.mxu0 0
      %554 = vmatpush.bf16.msra.mxu0 %v542
      %555 = vmatpush.bf16.msra.mxu0 %v541
      %556 = vmatmul.bf16.gmra.mxu0 %v546
      %v557 = vpop.f32.mrf.mxu0
      %v558 = vadd.f32 0.0, %v557
      %v559 = vpop.f32.mrf.mxu0
      %560 = vdwg.mxu0
      %v561 = vld [vmem:[%s5] sm:$0xf]
      %v562 = vld [vmem:[%s5 + $0x4] sm:$0xf]
      %v563 = vld [vmem:[%s5 + $0x8] sm:$0xf]
      %v564 = vld [vmem:[%s5 + $0xc] sm:$0xf]
      %v569 = vunpack.c.l.b16 %v561
      %v570 = vunpack.c.l.b16 %v562
      %v571 = vunpack.c.l.b16 %v563
      %v572 = vunpack.c.l.b16 %v564
      %v573 = vpack.c.b16 %v570, %v569
      %v574 = vpack.c.b16 %v572, %v571
      %577 = vmatpush.bf16.msra.mxu0 0
      %578 = vmatpush.bf16.msra.mxu0 0
      %579 = vmatpush.bf16.msra.mxu0 0
      %580 = vmatpush.bf16.msra.mxu0 0
      %581 = vmatpush.bf16.msra.mxu0 0
      %582 = vmatpush.bf16.msra.mxu0 0
      %583 = vmatpush.bf16.msra.mxu0 %v574
      %584 = vmatpush.bf16.msra.mxu0 %v573
      %585 = vmatmul.bf16.gmra.mxu0 %v546
      %v586 = vpop.f32.mrf.mxu0
      %v587 = vadd.f32 0.0, %v586
      %v588 = vpop.f32.mrf.mxu0
      %589 = vdwg.mxu0
      %v590 = vld [vmem:[%s6] sm:$0xf]
      %v591 = vld [vmem:[%s6 + $0x4] sm:$0xf]
      %v592 = vld [vmem:[%s6 + $0x8] sm:$0xf]
      %v593 = vld [vmem:[%s6 + $0xc] sm:$0xf]
      %v598 = vunpack.c.l.b16 %v590
      %v599 = vunpack.c.l.b16 %v591
      %v600 = vunpack.c.l.b16 %v592
      %v601 = vunpack.c.l.b16 %v593
      %v602 = vpack.c.b16 %v599, %v598
      %v603 = vpack.c.b16 %v601, %v600
      %606 = vmatpush.bf16.msra.mxu0 0
      %607 = vmatpush.bf16.msra.mxu0 0
      %608 = vmatpush.bf16.msra.mxu0 0
      %609 = vmatpush.bf16.msra.mxu0 0
      %610 = vmatpush.bf16.msra.mxu0 0
      %611 = vmatpush.bf16.msra.mxu0 0
      %612 = vmatpush.bf16.msra.mxu0 %v603
      %613 = vmatpush.bf16.msra.mxu0 %v602
      %614 = vmatmul.bf16.gmra.mxu0 %v546
      %v615 = vpop.f32.mrf.mxu0
      %v616 = vadd.f32 0.0, %v615
      %v617 = vpop.f32.mrf.mxu0
      %618 = vdwg.mxu0
      %v619 = vpack.c.bf16 %v558, %v558
      %v620 = vpack.c.bf16 %v587, %v587
      %vm621 = vcmask 64512
      %v623 = vsel %vm621, %v619, 0
      %v626 = vsel %vm621, %v620, 0
      %628 = vmatpush.bf16.xpose.msra.mxu0 0
      %629 = vmatpush.bf16.xpose.msra.mxu0 0
      %630 = vmatpush.bf16.xpose.msra.mxu0 0
      %631 = vmatpush.bf16.xpose.msra.mxu0 0
      %632 = vmatpush.bf16.xpose.msra.mxu0 0
      %633 = vmatpush.bf16.xpose.msra.mxu0 0
      %634 = vmatpush.bf16.xpose.msra.mxu0 0
      %635 = vmatpush.bf16.xpose.msra.mxu0 %v626
      %636 = vmatmul.bf16.gmra.mxu0 %v623
      %v637 = vpop.f32.mrf.mxu0
      %v638 = vadd.f32 0.0, %v637
      %v639 = vpop.f32.mrf.mxu0
      %640 = vdwg.mxu0
      %v641 = vsel %vm497, %v638, -1e+30
      %v642 = vsel %vm621, %v641, -inf
      %643 = vmax.xlane.f32.xlu0 %v642
      %v644 = vpop.xlane.xlu0 %643
      %v645 = vsub.f32 %v641, %v644
      %v646 = vmul.f32 %v645, 1.442695
      %v647 = vpow.pop %v646
      %v648 = vsel %vm621, %v647, 0.0
      %649 = vadd.xlane.f32.xlu0 %v648
      %v650 = vpop.xlane.xlu0 %649
      %v651 = vrcp.pop %v650
      %v652 = vmul.f32 %v647, %v651
      %v653 = vpack.c.bf16 %v652, %v652
      %v654 = vpack.c.bf16 %v616, %v616
      %v656 = vsel %vm621, %v653, 0
      %vm658 = vcmask 1043456
      %v660 = vsel %vm658, %v654, 0
      %662 = vmatpush.bf16.msra.mxu0 0
      %663 = vmatpush.bf16.msra.mxu0 0
      %664 = vmatpush.bf16.msra.mxu0 0
      %665 = vmatpush.bf16.msra.mxu0 0
      %666 = vmatpush.bf16.msra.mxu0 0
      %667 = vmatpush.bf16.msra.mxu0 0
      %668 = vmatpush.bf16.msra.mxu0 0
      %669 = vmatpush.bf16.msra.mxu0 %v660
      %670 = vmatmul.bf16.gmra.mxu0 %v656
      %v671 = vpop.f32.mrf.mxu0
      %v672 = vadd.f32 0.0, %v671
      %v673 = vpop.f32.mrf.mxu0
      %674 = vdwg.mxu0
      %v675 = vld [vmem:[%s7] sm:$0xf]
      %v676 = vpack.c.bf16 %v672, %v672
      %s677 = scalar_lea.vmem %s4, 16
      %v678 = vld [vmem:[%s677] sm:$0xf]
      %v679 = vld [vmem:[%s677 + $0x4] sm:$0xf]
      %v680 = vld [vmem:[%s677 + $0x8] sm:$0xf]
      %v681 = vld [vmem:[%s677 + $0xc] sm:$0xf]
      %v686 = vunpack.c.l.b16 %v678
      %v687 = vunpack.c.l.b16 %v679
      %v688 = vunpack.c.l.b16 %v680
      %v689 = vunpack.c.l.b16 %v681
      %v690 = vpack.c.b16 %v687, %v686
      %v691 = vpack.c.b16 %v689, %v688
      %694 = vmatpush.bf16.msra.mxu0 0
      %695 = vmatpush.bf16.msra.mxu0 0
      %696 = vmatpush.bf16.msra.mxu0 0
      %697 = vmatpush.bf16.msra.mxu0 0
      %698 = vmatpush.bf16.msra.mxu0 0
      %699 = vmatpush.bf16.msra.mxu0 0
      %700 = vmatpush.bf16.msra.mxu0 %v691
      %701 = vmatpush.bf16.msra.mxu0 %v690
      %702 = vmatmul.bf16.gmra.mxu0 %v546
      %v703 = vpop.f32.mrf.mxu0
      %v704 = vadd.f32 0.0, %v703
      %v705 = vpop.f32.mrf.mxu0
      %706 = vdwg.mxu0
      %s707 = scalar_lea.vmem %s5, 16
      %v708 = vld [vmem:[%s707] sm:$0xf]
      %v709 = vld [vmem:[%s707 + $0x4] sm:$0xf]
      %v710 = vld [vmem:[%s707 + $0x8] sm:$0xf]
      %v711 = vld [vmem:[%s707 + $0xc] sm:$0xf]
      %v716 = vunpack.c.l.b16 %v708
      %v717 = vunpack.c.l.b16 %v709
      %v718 = vunpack.c.l.b16 %v710
      %v719 = vunpack.c.l.b16 %v711
      %v720 = vpack.c.b16 %v717, %v716
      %v721 = vpack.c.b16 %v719, %v718
      %724 = vmatpush.bf16.msra.mxu0 0
      %725 = vmatpush.bf16.msra.mxu0 0
      %726 = vmatpush.bf16.msra.mxu0 0
      %727 = vmatpush.bf16.msra.mxu0 0
      %728 = vmatpush.bf16.msra.mxu0 0
      %729 = vmatpush.bf16.msra.mxu0 0
      %730 = vmatpush.bf16.msra.mxu0 %v721
      %731 = vmatpush.bf16.msra.mxu0 %v720
      %732 = vmatmul.bf16.gmra.mxu0 %v546
      %v733 = vpop.f32.mrf.mxu0
      %v734 = vadd.f32 0.0, %v733
      %v735 = vpop.f32.mrf.mxu0
      %736 = vdwg.mxu0
      %s737 = scalar_lea.vmem %s6, 16
      %v738 = vld [vmem:[%s737] sm:$0xf]
      %v739 = vld [vmem:[%s737 + $0x4] sm:$0xf]
      %v740 = vld [vmem:[%s737 + $0x8] sm:$0xf]
      %v741 = vld [vmem:[%s737 + $0xc] sm:$0xf]
      %v746 = vunpack.c.l.b16 %v738
      %v747 = vunpack.c.l.b16 %v739
      %v748 = vunpack.c.l.b16 %v740
      %v749 = vunpack.c.l.b16 %v741
      %v750 = vpack.c.b16 %v747, %v746
      %v751 = vpack.c.b16 %v749, %v748
      %754 = vmatpush.bf16.msra.mxu0 0
      %755 = vmatpush.bf16.msra.mxu0 0
      %756 = vmatpush.bf16.msra.mxu0 0
      %757 = vmatpush.bf16.msra.mxu0 0
      %758 = vmatpush.bf16.msra.mxu0 0
      %759 = vmatpush.bf16.msra.mxu0 0
      %760 = vmatpush.bf16.msra.mxu0 %v751
      %761 = vmatpush.bf16.msra.mxu0 %v750
      %762 = vmatmul.bf16.gmra.mxu0 %v546
      %v763 = vpop.f32.mrf.mxu0
      %v764 = vadd.f32 0.0, %v763
      %v765 = vpop.f32.mrf.mxu0
      %766 = vdwg.mxu0
      %v767 = vpack.c.bf16 %v704, %v704
      %v768 = vpack.c.bf16 %v734, %v734
      %v770 = vsel %vm621, %v767, 0
      %v773 = vsel %vm621, %v768, 0
      %775 = vmatpush.bf16.xpose.msra.mxu0 0
      %776 = vmatpush.bf16.xpose.msra.mxu0 0
      %777 = vmatpush.bf16.xpose.msra.mxu0 0
      %778 = vmatpush.bf16.xpose.msra.mxu0 0
      %779 = vmatpush.bf16.xpose.msra.mxu0 0
      %780 = vmatpush.bf16.xpose.msra.mxu0 0
      %781 = vmatpush.bf16.xpose.msra.mxu0 0
      %782 = vmatpush.bf16.xpose.msra.mxu0 %v773
      %783 = vmatmul.bf16.gmra.mxu0 %v770
      %v784 = vpop.f32.mrf.mxu0
      %v785 = vadd.f32 0.0, %v784
      %v786 = vpop.f32.mrf.mxu0
      %787 = vdwg.mxu0
      %v788 = vsel %vm497, %v785, -1e+30
      %v789 = vsel %vm621, %v788, -inf
      %790 = vmax.xlane.f32.xlu0 %v789
      %v791 = vpop.xlane.xlu0 %790
      %v792 = vsub.f32 %v788, %v791
      %v793 = vmul.f32 %v792, 1.442695
      %v794 = vpow.pop %v793
      %v795 = vsel %vm621, %v794, 0.0
      %796 = vadd.xlane.f32.xlu0 %v795
      %v797 = vpop.xlane.xlu0 %796
      %v798 = vrcp.pop %v797
      %v799 = vmul.f32 %v794, %v798
      %v800 = vpack.c.bf16 %v799, %v799
      %v801 = vpack.c.bf16 %v764, %v764
      %v803 = vsel %vm621, %v800, 0
      %v806 = vsel %vm658, %v801, 0
      %808 = vmatpush.bf16.msra.mxu0 0
      %809 = vmatpush.bf16.msra.mxu0 0
      %810 = vmatpush.bf16.msra.mxu0 0
      %811 = vmatpush.bf16.msra.mxu0 0
      %812 = vmatpush.bf16.msra.mxu0 0
      %813 = vmatpush.bf16.msra.mxu0 0
      %814 = vmatpush.bf16.msra.mxu0 0
      %815 = vmatpush.bf16.msra.mxu0 %v806
      %816 = vmatmul.bf16.gmra.mxu0 %v803
      %v817 = vpop.f32.mrf.mxu0
      %v818 = vadd.f32 0.0, %v817
      %v819 = vpop.f32.mrf.mxu0
      %820 = vdwg.mxu0
      %s821 = scalar_lea.vmem %s7, 4
      %v822 = vld [vmem:[%s821] sm:$0xf]
      %v823 = vpack.c.bf16 %v818, %v818
      %v825 = vsel %vm621, %v823, 0
      %v828 = vsel %vm658, %v822, 0
      %830 = vmatpush.bf16.msra.mxu0 0
      %831 = vmatpush.bf16.msra.mxu0 0
      %832 = vmatpush.bf16.msra.mxu0 0
      %833 = vmatpush.bf16.msra.mxu0 0
      %834 = vmatpush.bf16.msra.mxu0 0
      %835 = vmatpush.bf16.msra.mxu0 0
      %836 = vmatpush.bf16.msra.mxu0 0
      %837 = vmatpush.bf16.msra.mxu0 %v828
      %838 = vmatmul.bf16.gmra.mxu0 %v825
      %v839 = vpop.f32.mrf.mxu0
      %v840 = vadd.f32 0.0, %v839
      %v841 = vpop.f32.mrf.mxu0
      %842 = vdwg.mxu0
      %v844 = vsel %vm621, %v676, 0
      %v847 = vsel %vm658, %v675, 0
      %849 = vmatpush.bf16.msra.mxu0 0
      %850 = vmatpush.bf16.msra.mxu0 0
      %851 = vmatpush.bf16.msra.mxu0 0
      %852 = vmatpush.bf16.msra.mxu0 0
      %853 = vmatpush.bf16.msra.mxu0 0
      %854 = vmatpush.bf16.msra.mxu0 0
      %855 = vmatpush.bf16.msra.mxu0 0
      %856 = vmatpush.bf16.msra.mxu0 %v847
      %857 = vmatmul.bf16.gmra.mxu0 %v844
      %v858 = vpop.f32.mrf.mxu0
      %v859 = vadd.f32 %v840, %v858
      %v860 = vpop.f32.mrf.mxu0
      %861 = vdwg.mxu0
      %s862 = scalar_lea.vmem %s4, 32
      %v863 = vld [vmem:[%s862] sm:$0xf]
      %v864 = vld [vmem:[%s862 + $0x4] sm:$0xf]
      %v865 = vld [vmem:[%s862 + $0x8] sm:$0xf]
      %v866 = vld [vmem:[%s862 + $0xc] sm:$0xf]
      %v871 = vunpack.c.l.b16 %v863
      %v872 = vunpack.c.l.b16 %v864
      %v873 = vunpack.c.l.b16 %v865
      %v874 = vunpack.c.l.b16 %v866
      %v875 = vpack.c.b16 %v872, %v871
      %v876 = vpack.c.b16 %v874, %v873
      %879 = vmatpush.bf16.msra.mxu0 0
      %880 = vmatpush.bf16.msra.mxu0 0
      %881 = vmatpush.bf16.msra.mxu0 0
      %882 = vmatpush.bf16.msra.mxu0 0
      %883 = vmatpush.bf16.msra.mxu0 0
      %884 = vmatpush.bf16.msra.mxu0 0
      %885 = vmatpush.bf16.msra.mxu0 %v876
      %886 = vmatpush.bf16.msra.mxu0 %v875
      %887 = vmatmul.bf16.gmra.mxu0 %v546
      %v888 = vpop.f32.mrf.mxu0
      %v889 = vadd.f32 0.0, %v888
      %v890 = vpop.f32.mrf.mxu0
      %891 = vdwg.mxu0
      %s892 = scalar_lea.vmem %s5, 32
      %v893 = vld [vmem:[%s892] sm:$0xf]
      %v894 = vld [vmem:[%s892 + $0x4] sm:$0xf]
      %v895 = vld [vmem:[%s892 + $0x8] sm:$0xf]
      %v896 = vld [vmem:[%s892 + $0xc] sm:$0xf]
      %v901 = vunpack.c.l.b16 %v893
      %v902 = vunpack.c.l.b16 %v894
      %v903 = vunpack.c.l.b16 %v895
      %v904 = vunpack.c.l.b16 %v896
      %v905 = vpack.c.b16 %v902, %v901
      %v906 = vpack.c.b16 %v904, %v903
      %909 = vmatpush.bf16.msra.mxu0 0
      %910 = vmatpush.bf16.msra.mxu0 0
      %911 = vmatpush.bf16.msra.mxu0 0
      %912 = vmatpush.bf16.msra.mxu0 0
      %913 = vmatpush.bf16.msra.mxu0 0
      %914 = vmatpush.bf16.msra.mxu0 0
      %915 = vmatpush.bf16.msra.mxu0 %v906
      %916 = vmatpush.bf16.msra.mxu0 %v905
      %917 = vmatmul.bf16.gmra.mxu0 %v546
      %v918 = vpop.f32.mrf.mxu0
      %v919 = vadd.f32 0.0, %v918
      %v920 = vpop.f32.mrf.mxu0
      %921 = vdwg.mxu0
      %s922 = scalar_lea.vmem %s6, 32
      %v923 = vld [vmem:[%s922] sm:$0xf]
      %v924 = vld [vmem:[%s922 + $0x4] sm:$0xf]
      %v925 = vld [vmem:[%s922 + $0x8] sm:$0xf]
      %v926 = vld [vmem:[%s922 + $0xc] sm:$0xf]
      %v931 = vunpack.c.l.b16 %v923
      %v932 = vunpack.c.l.b16 %v924
      %v933 = vunpack.c.l.b16 %v925
      %v934 = vunpack.c.l.b16 %v926
      %v935 = vpack.c.b16 %v932, %v931
      %v936 = vpack.c.b16 %v934, %v933
      %939 = vmatpush.bf16.msra.mxu0 0
      %940 = vmatpush.bf16.msra.mxu0 0
      %941 = vmatpush.bf16.msra.mxu0 0
      %942 = vmatpush.bf16.msra.mxu0 0
      %943 = vmatpush.bf16.msra.mxu0 0
      %944 = vmatpush.bf16.msra.mxu0 0
      %945 = vmatpush.bf16.msra.mxu0 %v936
      %946 = vmatpush.bf16.msra.mxu0 %v935
      %947 = vmatmul.bf16.gmra.mxu0 %v546
      %v948 = vpop.f32.mrf.mxu0
      %v949 = vadd.f32 0.0, %v948
      %v950 = vpop.f32.mrf.mxu0
      %951 = vdwg.mxu0
      %v952 = vpack.c.bf16 %v889, %v889
      %v953 = vpack.c.bf16 %v919, %v919
      %v955 = vsel %vm621, %v952, 0
      %v958 = vsel %vm621, %v953, 0
      %960 = vmatpush.bf16.xpose.msra.mxu0 0
      %961 = vmatpush.bf16.xpose.msra.mxu0 0
      %962 = vmatpush.bf16.xpose.msra.mxu0 0
      %963 = vmatpush.bf16.xpose.msra.mxu0 0
      %964 = vmatpush.bf16.xpose.msra.mxu0 0
      %965 = vmatpush.bf16.xpose.msra.mxu0 0
      %966 = vmatpush.bf16.xpose.msra.mxu0 0
      %967 = vmatpush.bf16.xpose.msra.mxu0 %v958
      %968 = vmatmul.bf16.gmra.mxu0 %v955
      %v969 = vpop.f32.mrf.mxu0
      %v970 = vadd.f32 0.0, %v969
      %v971 = vpop.f32.mrf.mxu0
      %972 = vdwg.mxu0
      %v973 = vsel %vm497, %v970, -1e+30
      %v974 = vsel %vm621, %v973, -inf
      %975 = vmax.xlane.f32.xlu0 %v974
      %v976 = vpop.xlane.xlu0 %975
      %v977 = vsub.f32 %v973, %v976
      %v978 = vmul.f32 %v977, 1.442695
      %v979 = vpow.pop %v978
      %v980 = vsel %vm621, %v979, 0.0
      %981 = vadd.xlane.f32.xlu0 %v980
      %v982 = vpop.xlane.xlu0 %981
      %v983 = vrcp.pop %v982
      %v984 = vmul.f32 %v979, %v983
      %v985 = vpack.c.bf16 %v984, %v984
      %v986 = vpack.c.bf16 %v949, %v949
      %v988 = vsel %vm621, %v985, 0
      %v991 = vsel %vm658, %v986, 0
      %993 = vmatpush.bf16.msra.mxu0 0
      %994 = vmatpush.bf16.msra.mxu0 0
      %995 = vmatpush.bf16.msra.mxu0 0
      %996 = vmatpush.bf16.msra.mxu0 0
      %997 = vmatpush.bf16.msra.mxu0 0
      %998 = vmatpush.bf16.msra.mxu0 0
      %999 = vmatpush.bf16.msra.mxu0 0
      %1000 = vmatpush.bf16.msra.mxu0 %v991
      %1001 = vmatmul.bf16.gmra.mxu0 %v988
      %v1002 = vpop.f32.mrf.mxu0
      %v1003 = vadd.f32 0.0, %v1002
      %v1004 = vpop.f32.mrf.mxu0
      %1005 = vdwg.mxu0
      %s1006 = scalar_lea.vmem %s7, 8
      %v1007 = vld [vmem:[%s1006] sm:$0xf]
      %v1008 = vpack.c.bf16 %v1003, %v1003
      %v1010 = vsel %vm621, %v1008, 0
      %v1013 = vsel %vm658, %v1007, 0
      %1015 = vmatpush.bf16.msra.mxu0 0
      %1016 = vmatpush.bf16.msra.mxu0 0
      %1017 = vmatpush.bf16.msra.mxu0 0
      %1018 = vmatpush.bf16.msra.mxu0 0
      %1019 = vmatpush.bf16.msra.mxu0 0
      %1020 = vmatpush.bf16.msra.mxu0 0
      %1021 = vmatpush.bf16.msra.mxu0 0
      %1022 = vmatpush.bf16.msra.mxu0 %v1013
      %1023 = vmatmul.bf16.gmra.mxu0 %v1010
      %v1024 = vpop.f32.mrf.mxu0
      %v1025 = vadd.f32 0.0, %v1024
      %v1026 = vpop.f32.mrf.mxu0
      %1027 = vdwg.mxu0
      %v1028 = vadd.f32 %v859, %v1025
      %s1029 = scalar_lea.vmem %s4, 48
      %v1030 = vld [vmem:[%s1029] sm:$0xf]
      %v1031 = vld [vmem:[%s1029 + $0x4] sm:$0xf]
      %v1032 = vld [vmem:[%s1029 + $0x8] sm:$0xf]
      %v1033 = vld [vmem:[%s1029 + $0xc] sm:$0xf]
      %v1038 = vunpack.c.l.b16 %v1030
      %v1039 = vunpack.c.l.b16 %v1031
      %v1040 = vunpack.c.l.b16 %v1032
      %v1041 = vunpack.c.l.b16 %v1033
      %v1042 = vpack.c.b16 %v1039, %v1038
      %v1043 = vpack.c.b16 %v1041, %v1040
      %1046 = vmatpush.bf16.msra.mxu0 0
      %1047 = vmatpush.bf16.msra.mxu0 0
      %1048 = vmatpush.bf16.msra.mxu0 0
      %1049 = vmatpush.bf16.msra.mxu0 0
      %1050 = vmatpush.bf16.msra.mxu0 0
      %1051 = vmatpush.bf16.msra.mxu0 0
      %1052 = vmatpush.bf16.msra.mxu0 %v1043
      %1053 = vmatpush.bf16.msra.mxu0 %v1042
      %1054 = vmatmul.bf16.gmra.mxu0 %v546
      %v1055 = vpop.f32.mrf.mxu0
      %v1056 = vadd.f32 0.0, %v1055
      %v1057 = vpop.f32.mrf.mxu0
      %1058 = vdwg.mxu0
      %s1059 = scalar_lea.vmem %s5, 48
      %v1060 = vld [vmem:[%s1059] sm:$0xf]
      %v1061 = vld [vmem:[%s1059 + $0x4] sm:$0xf]
      %v1062 = vld [vmem:[%s1059 + $0x8] sm:$0xf]
      %v1063 = vld [vmem:[%s1059 + $0xc] sm:$0xf]
      %v1068 = vunpack.c.l.b16 %v1060
      %v1069 = vunpack.c.l.b16 %v1061
      %v1070 = vunpack.c.l.b16 %v1062
      %v1071 = vunpack.c.l.b16 %v1063
      %v1072 = vpack.c.b16 %v1069, %v1068
      %v1073 = vpack.c.b16 %v1071, %v1070
      %1076 = vmatpush.bf16.msra.mxu0 0
      %1077 = vmatpush.bf16.msra.mxu0 0
      %1078 = vmatpush.bf16.msra.mxu0 0
      %1079 = vmatpush.bf16.msra.mxu0 0
      %1080 = vmatpush.bf16.msra.mxu0 0
      %1081 = vmatpush.bf16.msra.mxu0 0
      %1082 = vmatpush.bf16.msra.mxu0 %v1073
      %1083 = vmatpush.bf16.msra.mxu0 %v1072
      %1084 = vmatmul.bf16.gmra.mxu0 %v546
      %v1085 = vpop.f32.mrf.mxu0
      %v1086 = vadd.f32 0.0, %v1085
      %v1087 = vpop.f32.mrf.mxu0
      %1088 = vdwg.mxu0
      %s1089 = scalar_lea.vmem %s6, 48
      %v1090 = vld [vmem:[%s1089] sm:$0xf]
      %v1091 = vld [vmem:[%s1089 + $0x4] sm:$0xf]
      %v1092 = vld [vmem:[%s1089 + $0x8] sm:$0xf]
      %v1093 = vld [vmem:[%s1089 + $0xc] sm:$0xf]
      %v1098 = vunpack.c.l.b16 %v1090
      %v1099 = vunpack.c.l.b16 %v1091
      %v1100 = vunpack.c.l.b16 %v1092
      %v1101 = vunpack.c.l.b16 %v1093
      %v1102 = vpack.c.b16 %v1099, %v1098
      %v1103 = vpack.c.b16 %v1101, %v1100
      %1106 = vmatpush.bf16.msra.mxu0 0
      %1107 = vmatpush.bf16.msra.mxu0 0
      %1108 = vmatpush.bf16.msra.mxu0 0
      %1109 = vmatpush.bf16.msra.mxu0 0
      %1110 = vmatpush.bf16.msra.mxu0 0
      %1111 = vmatpush.bf16.msra.mxu0 0
      %1112 = vmatpush.bf16.msra.mxu0 %v1103
      %1113 = vmatpush.bf16.msra.mxu0 %v1102
      %1114 = vmatmul.bf16.gmra.mxu0 %v546
      %v1115 = vpop.f32.mrf.mxu0
      %v1116 = vadd.f32 0.0, %v1115
      %v1117 = vpop.f32.mrf.mxu0
      %1118 = vdwg.mxu0
      %v1119 = vpack.c.bf16 %v1056, %v1056
      %v1120 = vpack.c.bf16 %v1086, %v1086
      %v1122 = vsel %vm621, %v1119, 0
      %v1125 = vsel %vm621, %v1120, 0
      %1127 = vmatpush.bf16.xpose.msra.mxu0 0
      %1128 = vmatpush.bf16.xpose.msra.mxu0 0
      %1129 = vmatpush.bf16.xpose.msra.mxu0 0
      %1130 = vmatpush.bf16.xpose.msra.mxu0 0
      %1131 = vmatpush.bf16.xpose.msra.mxu0 0
      %1132 = vmatpush.bf16.xpose.msra.mxu0 0
      %1133 = vmatpush.bf16.xpose.msra.mxu0 0
      %1134 = vmatpush.bf16.xpose.msra.mxu0 %v1125
      %1135 = vmatmul.bf16.gmra.mxu0 %v1122
      %v1136 = vpop.f32.mrf.mxu0
      %v1137 = vadd.f32 0.0, %v1136
      %v1138 = vpop.f32.mrf.mxu0
      %1139 = vdwg.mxu0
      %v1140 = vsel %vm497, %v1137, -1e+30
      %v1141 = vsel %vm621, %v1140, -inf
      %1142 = vmax.xlane.f32.xlu0 %v1141
      %v1143 = vpop.xlane.xlu0 %1142
      %v1144 = vsub.f32 %v1140, %v1143
      %v1145 = vmul.f32 %v1144, 1.442695
      %v1146 = vpow.pop %v1145
      %v1147 = vsel %vm621, %v1146, 0.0
      %1148 = vadd.xlane.f32.xlu0 %v1147
      %v1149 = vpop.xlane.xlu0 %1148
      %v1150 = vrcp.pop %v1149
      %v1151 = vmul.f32 %v1146, %v1150
      %v1152 = vpack.c.bf16 %v1151, %v1151
      %v1153 = vpack.c.bf16 %v1116, %v1116
      %v1155 = vsel %vm621, %v1152, 0
      %v1158 = vsel %vm658, %v1153, 0
      %1160 = vmatpush.bf16.msra.mxu0 0
      %1161 = vmatpush.bf16.msra.mxu0 0
      %1162 = vmatpush.bf16.msra.mxu0 0
      %1163 = vmatpush.bf16.msra.mxu0 0
      %1164 = vmatpush.bf16.msra.mxu0 0
      %1165 = vmatpush.bf16.msra.mxu0 0
      %1166 = vmatpush.bf16.msra.mxu0 0
      %1167 = vmatpush.bf16.msra.mxu0 %v1158
      %1168 = vmatmul.bf16.gmra.mxu0 %v1155
      %v1169 = vpop.f32.mrf.mxu0
      %v1170 = vadd.f32 0.0, %v1169
      %v1171 = vpop.f32.mrf.mxu0
      %1172 = vdwg.mxu0
      %s1173 = scalar_lea.vmem %s7, 12
      %v1174 = vld [vmem:[%s1173] sm:$0xf]
      %v1175 = vpack.c.bf16 %v1170, %v1170
      %v1177 = vsel %vm621, %v1175, 0
      %v1180 = vsel %vm658, %v1174, 0
      %1182 = vmatpush.bf16.msra.mxu0 0
      %1183 = vmatpush.bf16.msra.mxu0 0
      %1184 = vmatpush.bf16.msra.mxu0 0
      %1185 = vmatpush.bf16.msra.mxu0 0
      %1186 = vmatpush.bf16.msra.mxu0 0
      %1187 = vmatpush.bf16.msra.mxu0 0
      %1188 = vmatpush.bf16.msra.mxu0 0
      %1189 = vmatpush.bf16.msra.mxu0 %v1180
      %1190 = vmatmul.bf16.gmra.mxu0 %v1177
      %v1191 = vpop.f32.mrf.mxu0
      %v1192 = vadd.f32 0.0, %v1191
      %v1193 = vpop.f32.mrf.mxu0
      %1194 = vdwg.mxu0
      %v1195 = vadd.f32 %v1028, %v1192
      %v1196 = vadd.f32 %v492, %v1195
      %v1197 = vld [vmem:[%s8] sm:$0x1]
      %v1198 = vmul.f32 %v1196, %v1196
      %v1199 = vsel %vm500, %v1198, 0.0
      %1200 = vadd.xlane.f32.xlu0 %v1199
      %v1201 = vpop.xlane.xlu0 %1200
      %v1202 = vmul.f32 %v1201, %v510
      %v1203 = vadd.f32 %v1202, 1e-05
      %v1204 = vrsqrt.pop %v1203
      %v1205 = vmul.f32 %v1204, %v1203
      %v1206 = vmul.f32 %v1205, %v1204
      %v1207 = vmul.f32 0.5, %v1206
      %v1208 = vsub.f32 1.5, %v1207
      %v1209 = vmul.f32 %v1204, %v1208
      %vm1210 = vweird.f32 %v1203
      %vm1211 = vweird.f32 %v1204
      %vm1212 = vmor %vm1210, %vm1211
      %v1213 = vsel %vm1212, %v1204, %v1209
      %v1214 = vmul.f32 %v1196, %v1213
      %v1216 = vperm.slane %v1197, 0
      %v1218 = vmul.f32 %v1214, %v1216
      %v1219 = vld [vmem:[%s9] sm:$0xf]
      %v1220 = vld [vmem:[%s9 + $0x4] sm:$0xf]
      %v1221 = vld [vmem:[%s9 + $0x8] sm:$0xf]
      %v1222 = vld [vmem:[%s9 + $0xc] sm:$0xf]
      %v1223 = vpack.c.bf16 %v1218, %v1218
      %v1228 = vunpack.c.l.b16 %v1219
      %v1229 = vunpack.c.l.b16 %v1220
      %v1230 = vunpack.c.l.b16 %v1221
      %v1231 = vunpack.c.l.b16 %v1222
      %v1232 = vpack.c.b16 %v1229, %v1228
      %v1233 = vpack.c.b16 %v1231, %v1230
      %v1237 = vsel %vm500, %v1223, 0
      %1239 = vmatpush.bf16.msra.mxu0 0
      %1240 = vmatpush.bf16.msra.mxu0 0
      %1241 = vmatpush.bf16.msra.mxu0 0
      %1242 = vmatpush.bf16.msra.mxu0 0
      %1243 = vmatpush.bf16.msra.mxu0 0
      %1244 = vmatpush.bf16.msra.mxu0 0
      %1245 = vmatpush.bf16.msra.mxu0 %v1233
      %1246 = vmatpush.bf16.msra.mxu0 %v1232
      %1247 = vmatmul.bf16.gmra.mxu0 %v1237
      %v1248 = vpop.f32.mrf.mxu0
      %v1249 = vadd.f32 0.0, %v1248
      %v1250 = vpop.f32.mrf.mxu0
      %1251 = vdwg.mxu0
      %v1252 = vxor.u32 %v1249, 2147483648
      %v1253 = vmul.f32 %v1252, 1.442695
      %v1254 = vpow.pop %v1253
      %v1255 = vadd.f32 %v1254, 1.0
      %v1256 = vrcp.pop %v1255
      %v1257 = vmul.f32 %v1255, %v1256
      %v1258 = vsub.f32 1.0, %v1257
      %v1259 = vmul.f32 %v1256, %v1258
      %v1260 = vadd.f32 %v1256, %v1259
      %vm1261 = vweird.f32 %v1255
      %vm1262 = vweird.f32 %v1256
      %vm1263 = vmor %vm1261, %vm1262
      %v1264 = vsel %vm1263, %v1256, %v1260
      %v1265 = vand.u32 2147483647, %v1255
      %vm1266 = vcmp.eq.f32.partialorder %v1265, 8.507059e+37
      %v1267 = vand.u32 %v1255, 2147483648
      %v1268 = vor.u32 1.1754944e-38, %v1267
      %v1269 = vsel %vm1266, %v1268, %v1264
      %v1270 = vmul.f32 1.0, %v1269
      %v1271 = vmul.f32 %v1249, %v1270
      %1273 = vrot.lane.b32.xlu0 %v1249, 64
      %v1274 = vpop.permute.xlu0 %1273
      %v1276 = vmul.f32 %v1271, %v1274
      %v1277 = vld [vmem:[%s10] sm:$0xf]
      %v1278 = vld [vmem:[%s10 + $0x4] sm:$0xf]
      %v1279 = vld [vmem:[%s10 + $0x8] sm:$0xf]
      %v1280 = vld [vmem:[%s10 + $0xc] sm:$0xf]
      %v1281 = vld [vmem:[%s10 + $0x10] sm:$0xf]
      %v1282 = vld [vmem:[%s10 + $0x14] sm:$0xf]
      %v1283 = vld [vmem:[%s10 + $0x18] sm:$0xf]
      %v1284 = vld [vmem:[%s10 + $0x1c] sm:$0xf]
      %v1285 = vpack.c.bf16 %v1276, %v1276
      %v1294 = vunpack.c.l.b16 %v1277
      %v1295 = vunpack.c.l.b16 %v1278
      %v1296 = vunpack.c.l.b16 %v1279
      %v1297 = vunpack.c.l.b16 %v1280
      %v1298 = vunpack.c.l.b16 %v1281
      %v1299 = vunpack.c.l.b16 %v1282
      %v1300 = vunpack.c.l.b16 %v1283
      %v1301 = vunpack.c.l.b16 %v1284
      %v1302 = vpack.c.b16 %v1295, %v1294
      %v1303 = vpack.c.b16 %v1297, %v1296
      %v1304 = vpack.c.b16 %v1299, %v1298
      %v1305 = vpack.c.b16 %v1301, %v1300
      %v1311 = vsel %vm478, %v1285, 0
      %1313 = vmatpush.bf16.msra.mxu0 0
      %1314 = vmatpush.bf16.msra.mxu0 0
      %1315 = vmatpush.bf16.msra.mxu0 0
      %1316 = vmatpush.bf16.msra.mxu0 0
      %1317 = vmatpush.bf16.msra.mxu0 %v1305
      %1318 = vmatpush.bf16.msra.mxu0 %v1304
      %1319 = vmatpush.bf16.msra.mxu0 %v1303
      %1320 = vmatpush.bf16.msra.mxu0 %v1302
      %1321 = vmatmul.bf16.gmra.mxu0 %v1311
      %v1322 = vpop.f32.mrf.mxu0
      %v1323 = vadd.f32 0.0, %v1322
      %v1324 = vpop.f32.mrf.mxu0
      %1325 = vdwg.mxu0
      %v1326 = vadd.f32 %v1196, %v1323
      %s1327 = scalar_lea.vmem %s3, 1
      %v1328 = vld [vmem:[%s1327] sm:$0x1]
      %v1329 = vmul.f32 %v1326, %v1326
      %v1330 = vsel %vm500, %v1329, 0.0
      %1331 = vadd.xlane.f32.xlu0 %v1330
      %v1332 = vpop.xlane.xlu0 %1331
      %v1333 = vmul.f32 %v1332, %v510
      %v1334 = vadd.f32 %v1333, 1e-05
      %v1335 = vrsqrt.pop %v1334
      %v1336 = vmul.f32 %v1335, %v1334
      %v1337 = vmul.f32 %v1336, %v1335
      %v1338 = vmul.f32 0.5, %v1337
      %v1339 = vsub.f32 1.5, %v1338
      %v1340 = vmul.f32 %v1335, %v1339
      %vm1341 = vweird.f32 %v1334
      %vm1342 = vweird.f32 %v1335
      %vm1343 = vmor %vm1341, %vm1342
      %v1344 = vsel %vm1343, %v1335, %v1340
      %v1345 = vmul.f32 %v1326, %v1344
      %v1347 = vperm.slane %v1328, 0
      %v1349 = vmul.f32 %v1345, %v1347
      %s1350 = scalar_lea.vmem %s4, 64
      %v1351 = vld [vmem:[%s1350] sm:$0xf]
      %v1352 = vld [vmem:[%s1350 + $0x4] sm:$0xf]
      %v1353 = vld [vmem:[%s1350 + $0x8] sm:$0xf]
      %v1354 = vld [vmem:[%s1350 + $0xc] sm:$0xf]
      %v1355 = vpack.c.bf16 %v1349, %v1349
      %v1360 = vunpack.c.l.b16 %v1351
      %v1361 = vunpack.c.l.b16 %v1352
      %v1362 = vunpack.c.l.b16 %v1353
      %v1363 = vunpack.c.l.b16 %v1354
      %v1364 = vpack.c.b16 %v1361, %v1360
      %v1365 = vpack.c.b16 %v1363, %v1362
      %v1369 = vsel %vm500, %v1355, 0
      %1371 = vmatpush.bf16.msra.mxu0 0
      %1372 = vmatpush.bf16.msra.mxu0 0
      %1373 = vmatpush.bf16.msra.mxu0 0
      %1374 = vmatpush.bf16.msra.mxu0 0
      %1375 = vmatpush.bf16.msra.mxu0 0
      %1376 = vmatpush.bf16.msra.mxu0 0
      %1377 = vmatpush.bf16.msra.mxu0 %v1365
      %1378 = vmatpush.bf16.msra.mxu0 %v1364
      %1379 = vmatmul.bf16.gmra.mxu0 %v1369
      %v1380 = vpop.f32.mrf.mxu0
      %v1381 = vadd.f32 0.0, %v1380
      %v1382 = vpop.f32.mrf.mxu0
      %1383 = vdwg.mxu0
      %s1384 = scalar_lea.vmem %s5, 64
      %v1385 = vld [vmem:[%s1384] sm:$0xf]
      %v1386 = vld [vmem:[%s1384 + $0x4] sm:$0xf]
      %v1387 = vld [vmem:[%s1384 + $0x8] sm:$0xf]
      %v1388 = vld [vmem:[%s1384 + $0xc] sm:$0xf]
      %v1393 = vunpack.c.l.b16 %v1385
      %v1394 = vunpack.c.l.b16 %v1386
      %v1395 = vunpack.c.l.b16 %v1387
      %v1396 = vunpack.c.l.b16 %v1388
      %v1397 = vpack.c.b16 %v1394, %v1393
      %v1398 = vpack.c.b16 %v1396, %v1395
      %1401 = vmatpush.bf16.msra.mxu0 0
      %1402 = vmatpush.bf16.msra.mxu0 0
      %1403 = vmatpush.bf16.msra.mxu0 0
      %1404 = vmatpush.bf16.msra.mxu0 0
      %1405 = vmatpush.bf16.msra.mxu0 0
      %1406 = vmatpush.bf16.msra.mxu0 0
      %1407 = vmatpush.bf16.msra.mxu0 %v1398
      %1408 = vmatpush.bf16.msra.mxu0 %v1397
      %1409 = vmatmul.bf16.gmra.mxu0 %v1369
      %v1410 = vpop.f32.mrf.mxu0
      %v1411 = vadd.f32 0.0, %v1410
      %v1412 = vpop.f32.mrf.mxu0
      %1413 = vdwg.mxu0
      %s1414 = scalar_lea.vmem %s6, 64
      %v1415 = vld [vmem:[%s1414] sm:$0xf]
      %v1416 = vld [vmem:[%s1414 + $0x4] sm:$0xf]
      %v1417 = vld [vmem:[%s1414 + $0x8] sm:$0xf]
      %v1418 = vld [vmem:[%s1414 + $0xc] sm:$0xf]
      %v1423 = vunpack.c.l.b16 %v1415
      %v1424 = vunpack.c.l.b16 %v1416
      %v1425 = vunpack.c.l.b16 %v1417
      %v1426 = vunpack.c.l.b16 %v1418
      %v1427 = vpack.c.b16 %v1424, %v1423
      %v1428 = vpack.c.b16 %v1426, %v1425
      %1431 = vmatpush.bf16.msra.mxu0 0
      %1432 = vmatpush.bf16.msra.mxu0 0
      %1433 = vmatpush.bf16.msra.mxu0 0
      %1434 = vmatpush.bf16.msra.mxu0 0
      %1435 = vmatpush.bf16.msra.mxu0 0
      %1436 = vmatpush.bf16.msra.mxu0 0
      %1437 = vmatpush.bf16.msra.mxu0 %v1428
      %1438 = vmatpush.bf16.msra.mxu0 %v1427
      %1439 = vmatmul.bf16.gmra.mxu0 %v1369
      %v1440 = vpop.f32.mrf.mxu0
      %v1441 = vadd.f32 0.0, %v1440
      %v1442 = vpop.f32.mrf.mxu0
      %1443 = vdwg.mxu0
      %v1444 = vpack.c.bf16 %v1381, %v1381
      %v1445 = vpack.c.bf16 %v1411, %v1411
      %v1447 = vsel %vm621, %v1444, 0
      %v1450 = vsel %vm621, %v1445, 0
      %1452 = vmatpush.bf16.xpose.msra.mxu0 0
      %1453 = vmatpush.bf16.xpose.msra.mxu0 0
      %1454 = vmatpush.bf16.xpose.msra.mxu0 0
      %1455 = vmatpush.bf16.xpose.msra.mxu0 0
      %1456 = vmatpush.bf16.xpose.msra.mxu0 0
      %1457 = vmatpush.bf16.xpose.msra.mxu0 0
      %1458 = vmatpush.bf16.xpose.msra.mxu0 0
      %1459 = vmatpush.bf16.xpose.msra.mxu0 %v1450
      %1460 = vmatmul.bf16.gmra.mxu0 %v1447
      %v1461 = vpop.f32.mrf.mxu0
      %v1462 = vadd.f32 0.0, %v1461
      %v1463 = vpop.f32.mrf.mxu0
      %1464 = vdwg.mxu0
      %v1465 = vsel %vm497, %v1462, -1e+30
      %v1466 = vsel %vm621, %v1465, -inf
      %1467 = vmax.xlane.f32.xlu0 %v1466
      %v1468 = vpop.xlane.xlu0 %1467
      %v1469 = vsub.f32 %v1465, %v1468
      %v1470 = vmul.f32 %v1469, 1.442695
      %v1471 = vpow.pop %v1470
      %v1472 = vsel %vm621, %v1471, 0.0
      %1473 = vadd.xlane.f32.xlu0 %v1472
      %v1474 = vpop.xlane.xlu0 %1473
      %v1475 = vrcp.pop %v1474
      %v1476 = vmul.f32 %v1471, %v1475
      %v1477 = vpack.c.bf16 %v1476, %v1476
      %v1478 = vpack.c.bf16 %v1441, %v1441
      %v1480 = vsel %vm621, %v1477, 0
      %v1483 = vsel %vm658, %v1478, 0
      %1485 = vmatpush.bf16.msra.mxu0 0
      %1486 = vmatpush.bf16.msra.mxu0 0
      %1487 = vmatpush.bf16.msra.mxu0 0
      %1488 = vmatpush.bf16.msra.mxu0 0
      %1489 = vmatpush.bf16.msra.mxu0 0
      %1490 = vmatpush.bf16.msra.mxu0 0
      %1491 = vmatpush.bf16.msra.mxu0 0
      %1492 = vmatpush.bf16.msra.mxu0 %v1483
      %1493 = vmatmul.bf16.gmra.mxu0 %v1480
      %v1494 = vpop.f32.mrf.mxu0
      %v1495 = vadd.f32 0.0, %v1494
      %v1496 = vpop.f32.mrf.mxu0
      %1497 = vdwg.mxu0
      %s1498 = scalar_lea.vmem %s7, 16
      %v1499 = vld [vmem:[%s1498] sm:$0xf]
      %v1500 = vpack.c.bf16 %v1495, %v1495
      %s1501 = scalar_lea.vmem %s4, 80
      %v1502 = vld [vmem:[%s1501] sm:$0xf]
      %v1503 = vld [vmem:[%s1501 + $0x4] sm:$0xf]
      %v1504 = vld [vmem:[%s1501 + $0x8] sm:$0xf]
      %v1505 = vld [vmem:[%s1501 + $0xc] sm:$0xf]
      %v1510 = vunpack.c.l.b16 %v1502
      %v1511 = vunpack.c.l.b16 %v1503
      %v1512 = vunpack.c.l.b16 %v1504
      %v1513 = vunpack.c.l.b16 %v1505
      %v1514 = vpack.c.b16 %v1511, %v1510
      %v1515 = vpack.c.b16 %v1513, %v1512
      %1518 = vmatpush.bf16.msra.mxu0 0
      %1519 = vmatpush.bf16.msra.mxu0 0
      %1520 = vmatpush.bf16.msra.mxu0 0
      %1521 = vmatpush.bf16.msra.mxu0 0
      %1522 = vmatpush.bf16.msra.mxu0 0
      %1523 = vmatpush.bf16.msra.mxu0 0
      %1524 = vmatpush.bf16.msra.mxu0 %v1515
      %1525 = vmatpush.bf16.msra.mxu0 %v1514
      %1526 = vmatmul.bf16.gmra.mxu0 %v1369
      %v1527 = vpop.f32.mrf.mxu0
      %v1528 = vadd.f32 0.0, %v1527
      %v1529 = vpop.f32.mrf.mxu0
      %1530 = vdwg.mxu0
      %s1531 = scalar_lea.vmem %s5, 80
      %v1532 = vld [vmem:[%s1531] sm:$0xf]
      %v1533 = vld [vmem:[%s1531 + $0x4] sm:$0xf]
      %v1534 = vld [vmem:[%s1531 + $0x8] sm:$0xf]
      %v1535 = vld [vmem:[%s1531 + $0xc] sm:$0xf]
      %v1540 = vunpack.c.l.b16 %v1532
      %v1541 = vunpack.c.l.b16 %v1533
      %v1542 = vunpack.c.l.b16 %v1534
      %v1543 = vunpack.c.l.b16 %v1535
      %v1544 = vpack.c.b16 %v1541, %v1540
      %v1545 = vpack.c.b16 %v1543, %v1542
      %1548 = vmatpush.bf16.msra.mxu0 0
      %1549 = vmatpush.bf16.msra.mxu0 0
      %1550 = vmatpush.bf16.msra.mxu0 0
      %1551 = vmatpush.bf16.msra.mxu0 0
      %1552 = vmatpush.bf16.msra.mxu0 0
      %1553 = vmatpush.bf16.msra.mxu0 0
      %1554 = vmatpush.bf16.msra.mxu0 %v1545
      %1555 = vmatpush.bf16.msra.mxu0 %v1544
      %1556 = vmatmul.bf16.gmra.mxu0 %v1369
      %v1557 = vpop.f32.mrf.mxu0
      %v1558 = vadd.f32 0.0, %v1557
      %v1559 = vpop.f32.mrf.mxu0
      %1560 = vdwg.mxu0
      %s1561 = scalar_lea.vmem %s6, 80
      %v1562 = vld [vmem:[%s1561] sm:$0xf]
      %v1563 = vld [vmem:[%s1561 + $0x4] sm:$0xf]
      %v1564 = vld [vmem:[%s1561 + $0x8] sm:$0xf]
      %v1565 = vld [vmem:[%s1561 + $0xc] sm:$0xf]
      %v1570 = vunpack.c.l.b16 %v1562
      %v1571 = vunpack.c.l.b16 %v1563
      %v1572 = vunpack.c.l.b16 %v1564
      %v1573 = vunpack.c.l.b16 %v1565
      %v1574 = vpack.c.b16 %v1571, %v1570
      %v1575 = vpack.c.b16 %v1573, %v1572
      %1578 = vmatpush.bf16.msra.mxu0 0
      %1579 = vmatpush.bf16.msra.mxu0 0
      %1580 = vmatpush.bf16.msra.mxu0 0
      %1581 = vmatpush.bf16.msra.mxu0 0
      %1582 = vmatpush.bf16.msra.mxu0 0
      %1583 = vmatpush.bf16.msra.mxu0 0
      %1584 = vmatpush.bf16.msra.mxu0 %v1575
      %1585 = vmatpush.bf16.msra.mxu0 %v1574
      %1586 = vmatmul.bf16.gmra.mxu0 %v1369
      %v1587 = vpop.f32.mrf.mxu0
      %v1588 = vadd.f32 0.0, %v1587
      %v1589 = vpop.f32.mrf.mxu0
      %1590 = vdwg.mxu0
      %v1591 = vpack.c.bf16 %v1528, %v1528
      %v1592 = vpack.c.bf16 %v1558, %v1558
      %v1594 = vsel %vm621, %v1591, 0
      %v1597 = vsel %vm621, %v1592, 0
      %1599 = vmatpush.bf16.xpose.msra.mxu0 0
      %1600 = vmatpush.bf16.xpose.msra.mxu0 0
      %1601 = vmatpush.bf16.xpose.msra.mxu0 0
      %1602 = vmatpush.bf16.xpose.msra.mxu0 0
      %1603 = vmatpush.bf16.xpose.msra.mxu0 0
      %1604 = vmatpush.bf16.xpose.msra.mxu0 0
      %1605 = vmatpush.bf16.xpose.msra.mxu0 0
      %1606 = vmatpush.bf16.xpose.msra.mxu0 %v1597
      %1607 = vmatmul.bf16.gmra.mxu0 %v1594
      %v1608 = vpop.f32.mrf.mxu0
      %v1609 = vadd.f32 0.0, %v1608
      %v1610 = vpop.f32.mrf.mxu0
      %1611 = vdwg.mxu0
      %v1612 = vsel %vm497, %v1609, -1e+30
      %v1613 = vsel %vm621, %v1612, -inf
      %1614 = vmax.xlane.f32.xlu0 %v1613
      %v1615 = vpop.xlane.xlu0 %1614
      %v1616 = vsub.f32 %v1612, %v1615
      %v1617 = vmul.f32 %v1616, 1.442695
      %v1618 = vpow.pop %v1617
      %v1619 = vsel %vm621, %v1618, 0.0
      %1620 = vadd.xlane.f32.xlu0 %v1619
      %v1621 = vpop.xlane.xlu0 %1620
      %v1622 = vrcp.pop %v1621
      %v1623 = vmul.f32 %v1618, %v1622
      %v1624 = vpack.c.bf16 %v1623, %v1623
      %v1625 = vpack.c.bf16 %v1588, %v1588
      %v1627 = vsel %vm621, %v1624, 0
      %v1630 = vsel %vm658, %v1625, 0
      %1632 = vmatpush.bf16.msra.mxu0 0
      %1633 = vmatpush.bf16.msra.mxu0 0
      %1634 = vmatpush.bf16.msra.mxu0 0
      %1635 = vmatpush.bf16.msra.mxu0 0
      %1636 = vmatpush.bf16.msra.mxu0 0
      %1637 = vmatpush.bf16.msra.mxu0 0
      %1638 = vmatpush.bf16.msra.mxu0 0
      %1639 = vmatpush.bf16.msra.mxu0 %v1630
      %1640 = vmatmul.bf16.gmra.mxu0 %v1627
      %v1641 = vpop.f32.mrf.mxu0
      %v1642 = vadd.f32 0.0, %v1641
      %v1643 = vpop.f32.mrf.mxu0
      %1644 = vdwg.mxu0
      %s1645 = scalar_lea.vmem %s7, 20
      %v1646 = vld [vmem:[%s1645] sm:$0xf]
      %v1647 = vpack.c.bf16 %v1642, %v1642
      %v1649 = vsel %vm621, %v1647, 0
      %v1652 = vsel %vm658, %v1646, 0
      %1654 = vmatpush.bf16.msra.mxu0 0
      %1655 = vmatpush.bf16.msra.mxu0 0
      %1656 = vmatpush.bf16.msra.mxu0 0
      %1657 = vmatpush.bf16.msra.mxu0 0
      %1658 = vmatpush.bf16.msra.mxu0 0
      %1659 = vmatpush.bf16.msra.mxu0 0
      %1660 = vmatpush.bf16.msra.mxu0 0
      %1661 = vmatpush.bf16.msra.mxu0 %v1652
      %1662 = vmatmul.bf16.gmra.mxu0 %v1649
      %v1663 = vpop.f32.mrf.mxu0
      %v1664 = vadd.f32 0.0, %v1663
      %v1665 = vpop.f32.mrf.mxu0
      %1666 = vdwg.mxu0
      %v1668 = vsel %vm621, %v1500, 0
      %v1671 = vsel %vm658, %v1499, 0
      %1673 = vmatpush.bf16.msra.mxu0 0
      %1674 = vmatpush.bf16.msra.mxu0 0
      %1675 = vmatpush.bf16.msra.mxu0 0
      %1676 = vmatpush.bf16.msra.mxu0 0
      %1677 = vmatpush.bf16.msra.mxu0 0
      %1678 = vmatpush.bf16.msra.mxu0 0
      %1679 = vmatpush.bf16.msra.mxu0 0
      %1680 = vmatpush.bf16.msra.mxu0 %v1671
      %1681 = vmatmul.bf16.gmra.mxu0 %v1668
      %v1682 = vpop.f32.mrf.mxu0
      %v1683 = vadd.f32 %v1664, %v1682
      %v1684 = vpop.f32.mrf.mxu0
      %1685 = vdwg.mxu0
      %s1686 = scalar_lea.vmem %s4, 96
      %v1687 = vld [vmem:[%s1686] sm:$0xf]
      %v1688 = vld [vmem:[%s1686 + $0x4] sm:$0xf]
      %v1689 = vld [vmem:[%s1686 + $0x8] sm:$0xf]
      %v1690 = vld [vmem:[%s1686 + $0xc] sm:$0xf]
      %v1695 = vunpack.c.l.b16 %v1687
      %v1696 = vunpack.c.l.b16 %v1688
      %v1697 = vunpack.c.l.b16 %v1689
      %v1698 = vunpack.c.l.b16 %v1690
      %v1699 = vpack.c.b16 %v1696, %v1695
      %v1700 = vpack.c.b16 %v1698, %v1697
      %1703 = vmatpush.bf16.msra.mxu0 0
      %1704 = vmatpush.bf16.msra.mxu0 0
      %1705 = vmatpush.bf16.msra.mxu0 0
      %1706 = vmatpush.bf16.msra.mxu0 0
      %1707 = vmatpush.bf16.msra.mxu0 0
      %1708 = vmatpush.bf16.msra.mxu0 0
      %1709 = vmatpush.bf16.msra.mxu0 %v1700
      %1710 = vmatpush.bf16.msra.mxu0 %v1699
      %1711 = vmatmul.bf16.gmra.mxu0 %v1369
      %v1712 = vpop.f32.mrf.mxu0
      %v1713 = vadd.f32 0.0, %v1712
      %v1714 = vpop.f32.mrf.mxu0
      %1715 = vdwg.mxu0
      %s1716 = scalar_lea.vmem %s5, 96
      %v1717 = vld [vmem:[%s1716] sm:$0xf]
      %v1718 = vld [vmem:[%s1716 + $0x4] sm:$0xf]
      %v1719 = vld [vmem:[%s1716 + $0x8] sm:$0xf]
      %v1720 = vld [vmem:[%s1716 + $0xc] sm:$0xf]
      %v1725 = vunpack.c.l.b16 %v1717
      %v1726 = vunpack.c.l.b16 %v1718
      %v1727 = vunpack.c.l.b16 %v1719
      %v1728 = vunpack.c.l.b16 %v1720
      %v1729 = vpack.c.b16 %v1726, %v1725
      %v1730 = vpack.c.b16 %v1728, %v1727
      %1733 = vmatpush.bf16.msra.mxu0 0
      %1734 = vmatpush.bf16.msra.mxu0 0
      %1735 = vmatpush.bf16.msra.mxu0 0
      %1736 = vmatpush.bf16.msra.mxu0 0
      %1737 = vmatpush.bf16.msra.mxu0 0
      %1738 = vmatpush.bf16.msra.mxu0 0
      %1739 = vmatpush.bf16.msra.mxu0 %v1730
      %1740 = vmatpush.bf16.msra.mxu0 %v1729
      %1741 = vmatmul.bf16.gmra.mxu0 %v1369
      %v1742 = vpop.f32.mrf.mxu0
      %v1743 = vadd.f32 0.0, %v1742
      %v1744 = vpop.f32.mrf.mxu0
      %1745 = vdwg.mxu0
      %s1746 = scalar_lea.vmem %s6, 96
      %v1747 = vld [vmem:[%s1746] sm:$0xf]
      %v1748 = vld [vmem:[%s1746 + $0x4] sm:$0xf]
      %v1749 = vld [vmem:[%s1746 + $0x8] sm:$0xf]
      %v1750 = vld [vmem:[%s1746 + $0xc] sm:$0xf]
      %v1755 = vunpack.c.l.b16 %v1747
      %v1756 = vunpack.c.l.b16 %v1748
      %v1757 = vunpack.c.l.b16 %v1749
      %v1758 = vunpack.c.l.b16 %v1750
      %v1759 = vpack.c.b16 %v1756, %v1755
      %v1760 = vpack.c.b16 %v1758, %v1757
      %1763 = vmatpush.bf16.msra.mxu0 0
      %1764 = vmatpush.bf16.msra.mxu0 0
      %1765 = vmatpush.bf16.msra.mxu0 0
      %1766 = vmatpush.bf16.msra.mxu0 0
      %1767 = vmatpush.bf16.msra.mxu0 0
      %1768 = vmatpush.bf16.msra.mxu0 0
      %1769 = vmatpush.bf16.msra.mxu0 %v1760
      %1770 = vmatpush.bf16.msra.mxu0 %v1759
      %1771 = vmatmul.bf16.gmra.mxu0 %v1369
      %v1772 = vpop.f32.mrf.mxu0
      %v1773 = vadd.f32 0.0, %v1772
      %v1774 = vpop.f32.mrf.mxu0
      %1775 = vdwg.mxu0
      %v1776 = vpack.c.bf16 %v1713, %v1713
      %v1777 = vpack.c.bf16 %v1743, %v1743
      %v1779 = vsel %vm621, %v1776, 0
      %v1782 = vsel %vm621, %v1777, 0
      %1784 = vmatpush.bf16.xpose.msra.mxu0 0
      %1785 = vmatpush.bf16.xpose.msra.mxu0 0
      %1786 = vmatpush.bf16.xpose.msra.mxu0 0
      %1787 = vmatpush.bf16.xpose.msra.mxu0 0
      %1788 = vmatpush.bf16.xpose.msra.mxu0 0
      %1789 = vmatpush.bf16.xpose.msra.mxu0 0
      %1790 = vmatpush.bf16.xpose.msra.mxu0 0
      %1791 = vmatpush.bf16.xpose.msra.mxu0 %v1782
      %1792 = vmatmul.bf16.gmra.mxu0 %v1779
      %v1793 = vpop.f32.mrf.mxu0
      %v1794 = vadd.f32 0.0, %v1793
      %v1795 = vpop.f32.mrf.mxu0
      %1796 = vdwg.mxu0
      %v1797 = vsel %vm497, %v1794, -1e+30
      %v1798 = vsel %vm621, %v1797, -inf
      %1799 = vmax.xlane.f32.xlu0 %v1798
      %v1800 = vpop.xlane.xlu0 %1799
      %v1801 = vsub.f32 %v1797, %v1800
      %v1802 = vmul.f32 %v1801, 1.442695
      %v1803 = vpow.pop %v1802
      %v1804 = vsel %vm621, %v1803, 0.0
      %1805 = vadd.xlane.f32.xlu0 %v1804
      %v1806 = vpop.xlane.xlu0 %1805
      %v1807 = vrcp.pop %v1806
      %v1808 = vmul.f32 %v1803, %v1807
      %v1809 = vpack.c.bf16 %v1808, %v1808
      %v1810 = vpack.c.bf16 %v1773, %v1773
      %v1812 = vsel %vm621, %v1809, 0
      %v1815 = vsel %vm658, %v1810, 0
      %1817 = vmatpush.bf16.msra.mxu0 0
      %1818 = vmatpush.bf16.msra.mxu0 0
      %1819 = vmatpush.bf16.msra.mxu0 0
      %1820 = vmatpush.bf16.msra.mxu0 0
      %1821 = vmatpush.bf16.msra.mxu0 0
      %1822 = vmatpush.bf16.msra.mxu0 0
      %1823 = vmatpush.bf16.msra.mxu0 0
      %1824 = vmatpush.bf16.msra.mxu0 %v1815
      %1825 = vmatmul.bf16.gmra.mxu0 %v1812
      %v1826 = vpop.f32.mrf.mxu0
      %v1827 = vadd.f32 0.0, %v1826
      %v1828 = vpop.f32.mrf.mxu0
      %1829 = vdwg.mxu0
      %s1830 = scalar_lea.vmem %s7, 24
      %v1831 = vld [vmem:[%s1830] sm:$0xf]
      %v1832 = vpack.c.bf16 %v1827, %v1827
      %v1834 = vsel %vm621, %v1832, 0
      %v1837 = vsel %vm658, %v1831, 0
      %1839 = vmatpush.bf16.msra.mxu0 0
      %1840 = vmatpush.bf16.msra.mxu0 0
      %1841 = vmatpush.bf16.msra.mxu0 0
      %1842 = vmatpush.bf16.msra.mxu0 0
      %1843 = vmatpush.bf16.msra.mxu0 0
      %1844 = vmatpush.bf16.msra.mxu0 0
      %1845 = vmatpush.bf16.msra.mxu0 0
      %1846 = vmatpush.bf16.msra.mxu0 %v1837
      %1847 = vmatmul.bf16.gmra.mxu0 %v1834
      %v1848 = vpop.f32.mrf.mxu0
      %v1849 = vadd.f32 0.0, %v1848
      %v1850 = vpop.f32.mrf.mxu0
      %1851 = vdwg.mxu0
      %v1852 = vadd.f32 %v1683, %v1849
      %s1853 = scalar_lea.vmem %s4, 112
      %v1854 = vld [vmem:[%s1853] sm:$0xf]
      %v1855 = vld [vmem:[%s1853 + $0x4] sm:$0xf]
      %v1856 = vld [vmem:[%s1853 + $0x8] sm:$0xf]
      %v1857 = vld [vmem:[%s1853 + $0xc] sm:$0xf]
      %v1862 = vunpack.c.l.b16 %v1854
      %v1863 = vunpack.c.l.b16 %v1855
      %v1864 = vunpack.c.l.b16 %v1856
      %v1865 = vunpack.c.l.b16 %v1857
      %v1866 = vpack.c.b16 %v1863, %v1862
      %v1867 = vpack.c.b16 %v1865, %v1864
      %1870 = vmatpush.bf16.msra.mxu0 0
      %1871 = vmatpush.bf16.msra.mxu0 0
      %1872 = vmatpush.bf16.msra.mxu0 0
      %1873 = vmatpush.bf16.msra.mxu0 0
      %1874 = vmatpush.bf16.msra.mxu0 0
      %1875 = vmatpush.bf16.msra.mxu0 0
      %1876 = vmatpush.bf16.msra.mxu0 %v1867
      %1877 = vmatpush.bf16.msra.mxu0 %v1866
      %1878 = vmatmul.bf16.gmra.mxu0 %v1369
      %v1879 = vpop.f32.mrf.mxu0
      %v1880 = vadd.f32 0.0, %v1879
      %v1881 = vpop.f32.mrf.mxu0
      %1882 = vdwg.mxu0
      %s1883 = scalar_lea.vmem %s5, 112
      %v1884 = vld [vmem:[%s1883] sm:$0xf]
      %v1885 = vld [vmem:[%s1883 + $0x4] sm:$0xf]
      %v1886 = vld [vmem:[%s1883 + $0x8] sm:$0xf]
      %v1887 = vld [vmem:[%s1883 + $0xc] sm:$0xf]
      %v1892 = vunpack.c.l.b16 %v1884
      %v1893 = vunpack.c.l.b16 %v1885
      %v1894 = vunpack.c.l.b16 %v1886
      %v1895 = vunpack.c.l.b16 %v1887
      %v1896 = vpack.c.b16 %v1893, %v1892
      %v1897 = vpack.c.b16 %v1895, %v1894
      %1900 = vmatpush.bf16.msra.mxu0 0
      %1901 = vmatpush.bf16.msra.mxu0 0
      %1902 = vmatpush.bf16.msra.mxu0 0
      %1903 = vmatpush.bf16.msra.mxu0 0
      %1904 = vmatpush.bf16.msra.mxu0 0
      %1905 = vmatpush.bf16.msra.mxu0 0
      %1906 = vmatpush.bf16.msra.mxu0 %v1897
      %1907 = vmatpush.bf16.msra.mxu0 %v1896
      %1908 = vmatmul.bf16.gmra.mxu0 %v1369
      %v1909 = vpop.f32.mrf.mxu0
      %v1910 = vadd.f32 0.0, %v1909
      %v1911 = vpop.f32.mrf.mxu0
      %1912 = vdwg.mxu0
      %s1913 = scalar_lea.vmem %s6, 112
      %v1914 = vld [vmem:[%s1913] sm:$0xf]
      %v1915 = vld [vmem:[%s1913 + $0x4] sm:$0xf]
      %v1916 = vld [vmem:[%s1913 + $0x8] sm:$0xf]
      %v1917 = vld [vmem:[%s1913 + $0xc] sm:$0xf]
      %v1922 = vunpack.c.l.b16 %v1914
      %v1923 = vunpack.c.l.b16 %v1915
      %v1924 = vunpack.c.l.b16 %v1916
      %v1925 = vunpack.c.l.b16 %v1917
      %v1926 = vpack.c.b16 %v1923, %v1922
      %v1927 = vpack.c.b16 %v1925, %v1924
      %1930 = vmatpush.bf16.msra.mxu0 0
      %1931 = vmatpush.bf16.msra.mxu0 0
      %1932 = vmatpush.bf16.msra.mxu0 0
      %1933 = vmatpush.bf16.msra.mxu0 0
      %1934 = vmatpush.bf16.msra.mxu0 0
      %1935 = vmatpush.bf16.msra.mxu0 0
      %1936 = vmatpush.bf16.msra.mxu0 %v1927
      %1937 = vmatpush.bf16.msra.mxu0 %v1926
      %1938 = vmatmul.bf16.gmra.mxu0 %v1369
      %v1939 = vpop.f32.mrf.mxu0
      %v1940 = vadd.f32 0.0, %v1939
      %v1941 = vpop.f32.mrf.mxu0
      %1942 = vdwg.mxu0
      %v1943 = vpack.c.bf16 %v1880, %v1880
      %v1944 = vpack.c.bf16 %v1910, %v1910
      %v1946 = vsel %vm621, %v1943, 0
      %v1949 = vsel %vm621, %v1944, 0
      %1951 = vmatpush.bf16.xpose.msra.mxu0 0
      %1952 = vmatpush.bf16.xpose.msra.mxu0 0
      %1953 = vmatpush.bf16.xpose.msra.mxu0 0
      %1954 = vmatpush.bf16.xpose.msra.mxu0 0
      %1955 = vmatpush.bf16.xpose.msra.mxu0 0
      %1956 = vmatpush.bf16.xpose.msra.mxu0 0
      %1957 = vmatpush.bf16.xpose.msra.mxu0 0
      %1958 = vmatpush.bf16.xpose.msra.mxu0 %v1949
      %1959 = vmatmul.bf16.gmra.mxu0 %v1946
      %v1960 = vpop.f32.mrf.mxu0
      %v1961 = vadd.f32 0.0, %v1960
      %v1962 = vpop.f32.mrf.mxu0
      %1963 = vdwg.mxu0
      %v1964 = vsel %vm497, %v1961, -1e+30
      %v1965 = vsel %vm621, %v1964, -inf
      %1966 = vmax.xlane.f32.xlu0 %v1965
      %v1967 = vpop.xlane.xlu0 %1966
      %v1968 = vsub.f32 %v1964, %v1967
      %v1969 = vmul.f32 %v1968, 1.442695
      %v1970 = vpow.pop %v1969
      %v1971 = vsel %vm621, %v1970, 0.0
      %1972 = vadd.xlane.f32.xlu0 %v1971
      %v1973 = vpop.xlane.xlu0 %1972
      %v1974 = vrcp.pop %v1973
      %v1975 = vmul.f32 %v1970, %v1974
      %v1976 = vpack.c.bf16 %v1975, %v1975
      %v1977 = vpack.c.bf16 %v1940, %v1940
      %v1979 = vsel %vm621, %v1976, 0
      %v1982 = vsel %vm658, %v1977, 0
      %1984 = vmatpush.bf16.msra.mxu0 0
      %1985 = vmatpush.bf16.msra.mxu0 0
      %1986 = vmatpush.bf16.msra.mxu0 0
      %1987 = vmatpush.bf16.msra.mxu0 0
      %1988 = vmatpush.bf16.msra.mxu0 0
      %1989 = vmatpush.bf16.msra.mxu0 0
      %1990 = vmatpush.bf16.msra.mxu0 0
      %1991 = vmatpush.bf16.msra.mxu0 %v1982
      %1992 = vmatmul.bf16.gmra.mxu0 %v1979
      %v1993 = vpop.f32.mrf.mxu0
      %v1994 = vadd.f32 0.0, %v1993
      %v1995 = vpop.f32.mrf.mxu0
      %1996 = vdwg.mxu0
      %s1997 = scalar_lea.vmem %s7, 28
      %v1998 = vld [vmem:[%s1997] sm:$0xf]
      %v1999 = vpack.c.bf16 %v1994, %v1994
      %v2001 = vsel %vm621, %v1999, 0
      %v2004 = vsel %vm658, %v1998, 0
      %2006 = vmatpush.bf16.msra.mxu0 0
      %2007 = vmatpush.bf16.msra.mxu0 0
      %2008 = vmatpush.bf16.msra.mxu0 0
      %2009 = vmatpush.bf16.msra.mxu0 0
      %2010 = vmatpush.bf16.msra.mxu0 0
      %2011 = vmatpush.bf16.msra.mxu0 0
      %2012 = vmatpush.bf16.msra.mxu0 0
      %2013 = vmatpush.bf16.msra.mxu0 %v2004
      %2014 = vmatmul.bf16.gmra.mxu0 %v2001
      %v2015 = vpop.f32.mrf.mxu0
      %v2016 = vadd.f32 0.0, %v2015
      %v2017 = vpop.f32.mrf.mxu0
      %2018 = vdwg.mxu0
      %v2019 = vadd.f32 %v1852, %v2016
      %v2020 = vadd.f32 %v1326, %v2019
      %s2021 = scalar_lea.vmem %s8, 1
      %v2022 = vld [vmem:[%s2021] sm:$0x1]
      %v2023 = vmul.f32 %v2020, %v2020
      %v2024 = vsel %vm500, %v2023, 0.0
      %2025 = vadd.xlane.f32.xlu0 %v2024
      %v2026 = vpop.xlane.xlu0 %2025
      %v2027 = vmul.f32 %v2026, %v510
      %v2028 = vadd.f32 %v2027, 1e-05
      %v2029 = vrsqrt.pop %v2028
      %v2030 = vmul.f32 %v2029, %v2028
      %v2031 = vmul.f32 %v2030, %v2029
      %v2032 = vmul.f32 0.5, %v2031
      %v2033 = vsub.f32 1.5, %v2032
      %v2034 = vmul.f32 %v2029, %v2033
      %vm2035 = vweird.f32 %v2028
      %vm2036 = vweird.f32 %v2029
      %vm2037 = vmor %vm2035, %vm2036
      %v2038 = vsel %vm2037, %v2029, %v2034
      %v2039 = vmul.f32 %v2020, %v2038
      %v2041 = vperm.slane %v2022, 0
      %v2043 = vmul.f32 %v2039, %v2041
      %s2044 = scalar_lea.vmem %s9, 16
      %v2045 = vld [vmem:[%s2044] sm:$0xf]
      %v2046 = vld [vmem:[%s2044 + $0x4] sm:$0xf]
      %v2047 = vld [vmem:[%s2044 + $0x8] sm:$0xf]
      %v2048 = vld [vmem:[%s2044 + $0xc] sm:$0xf]
      %v2049 = vpack.c.bf16 %v2043, %v2043
      %v2054 = vunpack.c.l.b16 %v2045
      %v2055 = vunpack.c.l.b16 %v2046
      %v2056 = vunpack.c.l.b16 %v2047
      %v2057 = vunpack.c.l.b16 %v2048
      %v2058 = vpack.c.b16 %v2055, %v2054
      %v2059 = vpack.c.b16 %v2057, %v2056
      %v2063 = vsel %vm500, %v2049, 0
      %2065 = vmatpush.bf16.msra.mxu0 0
      %2066 = vmatpush.bf16.msra.mxu0 0
      %2067 = vmatpush.bf16.msra.mxu0 0
      %2068 = vmatpush.bf16.msra.mxu0 0
      %2069 = vmatpush.bf16.msra.mxu0 0
      %2070 = vmatpush.bf16.msra.mxu0 0
      %2071 = vmatpush.bf16.msra.mxu0 %v2059
      %2072 = vmatpush.bf16.msra.mxu0 %v2058
      %2073 = vmatmul.bf16.gmra.mxu0 %v2063
      %v2074 = vpop.f32.mrf.mxu0
      %v2075 = vadd.f32 0.0, %v2074
      %v2076 = vpop.f32.mrf.mxu0
      %2077 = vdwg.mxu0
      %v2078 = vxor.u32 %v2075, 2147483648
      %v2079 = vmul.f32 %v2078, 1.442695
      %v2080 = vpow.pop %v2079
      %v2081 = vadd.f32 %v2080, 1.0
      %v2082 = vrcp.pop %v2081
      %v2083 = vmul.f32 %v2081, %v2082
      %v2084 = vsub.f32 1.0, %v2083
      %v2085 = vmul.f32 %v2082, %v2084
      %v2086 = vadd.f32 %v2082, %v2085
      %vm2087 = vweird.f32 %v2081
      %vm2088 = vweird.f32 %v2082
      %vm2089 = vmor %vm2087, %vm2088
      %v2090 = vsel %vm2089, %v2082, %v2086
      %v2091 = vand.u32 2147483647, %v2081
      %vm2092 = vcmp.eq.f32.partialorder %v2091, 8.507059e+37
      %v2093 = vand.u32 %v2081, 2147483648
      %v2094 = vor.u32 1.1754944e-38, %v2093
      %v2095 = vsel %vm2092, %v2094, %v2090
      %v2096 = vmul.f32 1.0, %v2095
      %v2097 = vmul.f32 %v2075, %v2096
      %2099 = vrot.lane.b32.xlu0 %v2075, 64
      %v2100 = vpop.permute.xlu0 %2099
      %v2102 = vmul.f32 %v2097, %v2100
      %s2103 = scalar_lea.vmem %s10, 32
      %v2104 = vld [vmem:[%s2103] sm:$0xf]
      %v2105 = vld [vmem:[%s2103 + $0x4] sm:$0xf]
      %v2106 = vld [vmem:[%s2103 + $0x8] sm:$0xf]
      %v2107 = vld [vmem:[%s2103 + $0xc] sm:$0xf]
      %v2108 = vld [vmem:[%s2103 + $0x10] sm:$0xf]
      %v2109 = vld [vmem:[%s2103 + $0x14] sm:$0xf]
      %v2110 = vld [vmem:[%s2103 + $0x18] sm:$0xf]
      %v2111 = vld [vmem:[%s2103 + $0x1c] sm:$0xf]
      %v2112 = vpack.c.bf16 %v2102, %v2102
      %v2121 = vunpack.c.l.b16 %v2104
      %v2122 = vunpack.c.l.b16 %v2105
      %v2123 = vunpack.c.l.b16 %v2106
      %v2124 = vunpack.c.l.b16 %v2107
      %v2125 = vunpack.c.l.b16 %v2108
      %v2126 = vunpack.c.l.b16 %v2109
      %v2127 = vunpack.c.l.b16 %v2110
      %v2128 = vunpack.c.l.b16 %v2111
      %v2129 = vpack.c.b16 %v2122, %v2121
      %v2130 = vpack.c.b16 %v2124, %v2123
      %v2131 = vpack.c.b16 %v2126, %v2125
      %v2132 = vpack.c.b16 %v2128, %v2127
      %v2138 = vsel %vm478, %v2112, 0
      %2140 = vmatpush.bf16.msra.mxu0 0
      %2141 = vmatpush.bf16.msra.mxu0 0
      %2142 = vmatpush.bf16.msra.mxu0 0
      %2143 = vmatpush.bf16.msra.mxu0 0
      %2144 = vmatpush.bf16.msra.mxu0 %v2132
      %2145 = vmatpush.bf16.msra.mxu0 %v2131
      %2146 = vmatpush.bf16.msra.mxu0 %v2130
      %2147 = vmatpush.bf16.msra.mxu0 %v2129
      %2148 = vmatmul.bf16.gmra.mxu0 %v2138
      %v2149 = vpop.f32.mrf.mxu0
      %v2150 = vadd.f32 0.0, %v2149
      %v2151 = vpop.f32.mrf.mxu0
      %2152 = vdwg.mxu0
      %v2153 = vadd.f32 %v2020, %v2150
      %v2154 = vld [vmem:[%s11] sm:$0x1]
      %v2155 = vmul.f32 %v2153, %v2153
      %v2156 = vsel %vm500, %v2155, 0.0
      %2157 = vadd.xlane.f32.xlu0 %v2156
      %v2158 = vpop.xlane.xlu0 %2157
      %v2159 = vmul.f32 %v2158, %v510
      %v2160 = vadd.f32 %v2159, 1e-05
      %v2161 = vrsqrt.pop %v2160
      %v2162 = vmul.f32 %v2161, %v2160
      %v2163 = vmul.f32 %v2162, %v2161
      %v2164 = vmul.f32 0.5, %v2163
      %v2165 = vsub.f32 1.5, %v2164
      %v2166 = vmul.f32 %v2161, %v2165
      %vm2167 = vweird.f32 %v2160
      %vm2168 = vweird.f32 %v2161
      %vm2169 = vmor %vm2167, %vm2168
      %v2170 = vsel %vm2169, %v2161, %v2166
      %v2171 = vmul.f32 %v2153, %v2170
      %v2173 = vperm.slane %v2154, 0
      %v2175 = vmul.f32 %v2171, %v2173
      %v2176 = vld [vmem:[%s12] sm:$0xf]
      %v2177 = vld [vmem:[%s12 + $0x4] sm:$0xf]
      %v2178 = vld [vmem:[%s12 + $0x8] sm:$0xf]
      %v2179 = vld [vmem:[%s12 + $0xc] sm:$0xf]
      %v2180 = vpack.c.bf16 %v2175, %v2175
      %v2185 = vunpack.c.l.b16 %v2176
      %v2186 = vunpack.c.l.b16 %v2177
      %v2187 = vunpack.c.l.b16 %v2178
      %v2188 = vunpack.c.l.b16 %v2179
      %v2189 = vpack.c.b16 %v2186, %v2185
      %v2190 = vpack.c.b16 %v2188, %v2187
      %v2194 = vsel %vm500, %v2180, 0
      %2196 = vmatpush.bf16.msra.mxu0 0
      %2197 = vmatpush.bf16.msra.mxu0 0
      %2198 = vmatpush.bf16.msra.mxu0 0
      %2199 = vmatpush.bf16.msra.mxu0 0
      %2200 = vmatpush.bf16.msra.mxu0 0
      %2201 = vmatpush.bf16.msra.mxu0 0
      %2202 = vmatpush.bf16.msra.mxu0 %v2190
      %2203 = vmatpush.bf16.msra.mxu0 %v2189
      %2204 = vmatmul.bf16.gmra.mxu0 %v2194
      %v2205 = vpop.f32.mrf.mxu0
      %v2206 = vadd.f32 0.0, %v2205
      %v2207 = vpop.f32.mrf.mxu0
      %2208 = vdwg.mxu0
      %vm2209 = vcmp.eq.s32.totalorder %v435, 0
      %v2210 = vsel %vm2209, %v496, 8
      %vm2211 = vcmask 7168
      %v2212 = vsel %vm2211, %v2210, 2147483647
      %v2213 = vrot.slane %v2212, 4
      %vm2214 = vcmp.lt.s32.totalorder %v2212, %v2213
      %v2215 = vsel %vm2214, %v2212, %v2213
      %v2216 = vrot.slane %v2215, 2
      %vm2217 = vcmp.lt.s32.totalorder %v2215, %v2216
      %v2218 = vsel %vm2217, %v2215, %v2216
      %v2219 = vrot.slane %v2218, 1
      %vm2220 = vcmp.lt.s32.totalorder %v2218, %v2219
      %v2221 = vsel %vm2220, %v2218, %v2219
      %v2222 = vsub.s32 %v2221, 1
      %vm2223 = vcmp.lt.s32.totalorder %v2222, 0
      %v2224 = vadd.s32 %v2222, 8
      %v2225 = vsel %vm2223, %v2224, %v2222
      %vm2226 = vcmp.eq.s32.totalorder %v496, %v2225
      %v2227 = vsel %vm2226, %v2206, 0.0
      %v2228 = vsel %vm2211, %v2227, 0.0
      %v2229 = vrot.slane %v2228, 4
      %v2230 = vadd.f32 %v2228, %v2229
      %v2231 = vrot.slane %v2230, 2
      %v2232 = vadd.f32 %v2230, %v2231
      %v2233 = vrot.slane %v2232, 1
      %v2234 = vadd.f32 %v2232, %v2233
      %vm2235 = vcmask 0
      %2236 = vst.msk [vmem:[%s433] sm:$0x1] %vm2235, %v2234
      %p2237 = scmp.lt.s32.totalorder %s24, 1
      %s2238 = scalar_select %p2237, %s24, 1
      %s2239 = scalar_lea.vmem %s13, %s2238
      // Predicated region
      $region73: #{gpt_reward_forward.1} parent=71 // pred_check
        %p2240 = pneg %p320
      $region74: #{gpt_reward_forward.1} parent=71 // pred_check_branch
        %2242 = sbr.rel (%p2240) target = $region76
      $region75: #{gpt_reward_forward.1} parent=71 // pred_region
        _
      $region76: #{gpt_reward_forward.1} parent=71 // pred_fallthru
        _
    $region72: #{gpt_reward_forward.1} parent=5 // pred_fallthru
      _
    %p2243 = scmp.le.s32.totalorder 2, %s19
    // Predicated region
    $region77: #{gpt_reward_forward.1} parent=5 // pred_check
      %p2244 = pneg %p2243
    $region78: #{gpt_reward_forward.1} parent=5 // pred_check_branch
      %2246 = sbr.rel (%p2244) target = $region80
    $region79: #{gpt_reward_forward.1} parent=5 // pred_region
      %s2247 = ssub.s32 %s19, 2
      // Predicated region
      $region81: #{gpt_reward_forward.1} parent=79 // pred_check
        %p2248 = pneg %p326
      $region82: #{gpt_reward_forward.1} parent=79 // pred_check_branch
        %2250 = sbr.rel (%p2248) target = $region84
      $region83: #{gpt_reward_forward.1} parent=79 // pred_region
        %p2251 = scmp.lt.s32.totalorder %s25, 1
        %s2252 = scalar_select %p2251, %s25, 1
        %s2253 = scalar_lea.vmem %s13, %s2252
      $region84: #{gpt_reward_forward.1} parent=79 // pred_fallthru
        _
    $region80: #{gpt_reward_forward.1} parent=5 // pred_fallthru
      _
  $region6: #{gpt_reward_forward.1} parent=0 // loop_footer
    %s23 = sadd.s32 1, %s19
  $region7: #{gpt_reward_forward.1} parent=0 // loop_footer_branch
    %18 = sbr.rel target = $region3
  $region8: #{gpt_reward_forward.1} parent=0 // loop_exit
    _

</llo_original>
